<compile_context>
chip_gen: v7x
topology: tpu7x:2x2x1
jax: 0.10.0
libtpu: 0.0.40
codegen_flags: <defaults>
</compile_context>

<pallas_src>
import math

import jax
import jax.numpy as jnp
from jax.experimental import pallas as pl
from jax.experimental.pallas import tpu as pltpu

# ----------------- small config consistent with the torch module ------------------
OUT_CHANNELS = 1
NUM_BLOCKS = 1
NUM_LAYERS = 4          # dilations 1,2,4,8
FRONT_KERNEL = 8        # == `front_channels` (kernel size of the front causal conv)
RES_CHANNELS = 32
GATE_CHANNELS = 32
SKIP_CHANNELS = 32
KERNEL_SIZE = 3
CIN_CHANNELS = 16
B = 2
T = 64
SQRT_HALF = math.sqrt(0.5)

CH2 = RES_CHANNELS + SKIP_CHANNELS                    # 64: fused [h | skip] lanes
PADT = (KERNEL_SIZE - 1) * 2 ** (NUM_LAYERS - 1)      # 16: max causal pad, 8-aligned
OUT_PAD = 128                                         # lane-dense padded output width


def wavenet_flow_kernel(xtap_ref, c_ref,
                        wfront_ref, bfront_ref,
                        wfg_ref, bfg_ref, wcfg_ref,
                        wrs_ref, brs_ref,
                        swap_ref, scale_ref,
                        wfin1_ref, bfin1_ref, wfin2_ref, bfin2_ref,
                        out_ref, hpad_ref):
    f32 = jnp.float32
    bf16 = jnp.bfloat16
    tt = xtap_ref.shape[0]

    # Zero the causal-padding rows of the staging scratch (they are never rewritten).
    hpad_ref[0:PADT, :] = jnp.zeros((PADT, CH2), f32)

    c_bf = c_ref[...].astype(bf16)        # (T, Cin) — reused by every layer
    swap = swap_ref[...]                  # (CH2, CH2) bf16 half-swap permutation
    scale = scale_ref[...]                # (1, CH2) f32: [sqrt(.5)]*R ++ [1]*S

    # ---- front causal conv (in_channels == 1): taps pre-gathered -> one matmul ----
    hs = jnp.dot(xtap_ref[...].astype(bf16), wfront_ref[...],
                 preferred_element_type=f32) + bfront_ref[...]
    hs = jnp.maximum(hs, 0.0)             # lanes [R:] hold the skip accumulator (== 0)

    n_layers = wfg_ref.shape[0]
    ksz = wfg_ref.shape[1]
    for l in range(n_layers):
        d = 2 ** (l % NUM_LAYERS)
        # Stage current state for causally shifted reads (store is sublane-aligned).
        hpad_ref[PADT:PADT + tt, :] = hs

        # local conditioning + fused bias, then the K dilated taps
        hfg = jnp.dot(c_bf, wcfg_ref[l], preferred_element_type=f32) + bfg_ref[l]
        for k in range(ksz):
            s = (ksz - 1 - k) * d
            if s == 0:
                tap = hs
            else:
                start = PADT - s
                tap = hpad_ref[start:start + tt, :]          # static shifted slice
            hfg = hfg + jnp.dot(tap.astype(bf16), wfg_ref[l, k],
                                preferred_element_type=f32)

        # gated activation: swap the filt/gate halves with a tiny permutation matmul
        v = jnp.dot(hfg.astype(bf16), swap, preferred_element_type=f32)
        z = jnp.tanh(hfg) * jax.nn.sigmoid(v)   # lanes [R:] garbage; zeroed by wrs rows

        rs = jnp.dot(z.astype(bf16), wrs_ref[l], preferred_element_type=f32) + brs_ref[l]
        hs = (hs + rs) * scale                  # h lanes *= sqrt(.5); skip lanes += sk

    # ---- final: ReLU -> 1x1 conv -> ReLU -> 1x1 conv (lane-dense padded output) ----
    sk = jnp.maximum(hs, 0.0)
    t1 = jnp.dot(sk.astype(bf16), wfin1_ref[...], preferred_element_type=f32) + bfin1_ref[...]
    t1 = jnp.maximum(t1, 0.0)
    out = jnp.dot(t1.astype(bf16), wfin2_ref[...], preferred_element_type=f32) + bfin2_ref[...]
    out_ref[...] = out.astype(out_ref.dtype)


def wavenet_flow(x, c, params):
    bn, tn, _ = x.shape
    f32 = jnp.float32
    bf16 = jnp.bfloat16
    R, S, G, Cin = RES_CHANNELS, SKIP_CHANNELS, GATE_CHANNELS, CIN_CHANNELS
    L = params['w_filt'].shape[0]
    K = params['w_filt'].shape[1]

    # --- im2col of the 1-channel input for the front conv: (B, T, FRONT_KERNEL) ---
    xp = jnp.pad(x, ((0, 0), (FRONT_KERNEL - 1, 0), (0, 0)))
    xtap = jnp.concatenate([xp[:, k:k + tn, :] for k in range(FRONT_KERNEL)], axis=-1)

    # --- weight prep: fuse filt||gate, fc||gc, res||skip; zero-pad to CH2 rows ---
    w_front = params['w_front'].reshape(FRONT_KERNEL, R)
    wfront64 = jnp.concatenate([w_front, jnp.zeros((FRONT_KERNEL, S), f32)], axis=-1).astype(bf16)
    bfront64 = jnp.concatenate([params['b_front'], jnp.zeros((1, S), f32)], axis=-1)

    w_fg = jnp.concatenate([params['w_filt'], params['w_gate']], axis=-1)     # (L,K,R,2G)
    w_fg = jnp.concatenate([w_fg, jnp.zeros((L, K, CH2 - R, 2 * G), f32)], axis=2).astype(bf16)
    b_fg = (jnp.concatenate([params['b_filt'], params['b_gate']], axis=-1)
            + jnp.concatenate([params['b_fc'], params['b_gc']], axis=-1))     # (L,1,2G)

    w_cfg = jnp.concatenate([params['w_fc'], params['w_gc']], axis=-1).astype(bf16)  # (L,Cin,2G)

    w_rs = jnp.concatenate([params['w_res'], params['w_skip']], axis=-1)      # (L,G,R+S)
    w_rs = jnp.concatenate([w_rs, jnp.zeros((L, CH2 - G, R + S), f32)], axis=1).astype(bf16)
    b_rs = jnp.concatenate([params['b_res'], params['b_skip']], axis=-1)      # (L,1,R+S)

    # half-swap permutation (exact in bf16): v[:, :G] = hfg[:, G:], v[:, G:] = hfg[:, :G]
    eye = jnp.eye(G, dtype=f32)
    zer = jnp.zeros((G, G), f32)
    swap = jnp.concatenate([jnp.concatenate([zer, eye], axis=-1),
                            jnp.concatenate([eye, zer], axis=-1)], axis=0).astype(bf16)

    scale = jnp.concatenate([jnp.full((1, R), SQRT_HALF, f32),
                             jnp.ones((1, S), f32)], axis=-1)

    wfin1 = jnp.zeros((CH2, CH2), f32).at[R:, :S].set(params['w_fin1']).astype(bf16)
    bfin1 = jnp.concatenate([params['b_fin1'], jnp.zeros((1, CH2 - S), f32)], axis=-1)

    wfin2 = jnp.zeros((CH2, OUT_PAD), f32).at[:S, :OUT_CHANNELS].set(params['w_fin2']).astype(bf16)
    bfin2 = jnp.zeros((1, OUT_PAD), f32).at[:, :OUT_CHANNELS].set(params['b_fin2'])

    weight_args = [wfront64, bfront64, w_fg, b_fg, w_cfg, w_rs, b_rs, swap, scale,
                   wfin1, bfin1, wfin2, bfin2]

    def full_spec(arr):
        nd = arr.ndim
        return pl.BlockSpec(arr.shape, lambda b, _nd=nd: (0,) * _nd)

    in_specs = [
        pl.BlockSpec((pl.Squeezed(), tn, FRONT_KERNEL), lambda b: (b, 0, 0)),
        pl.BlockSpec((pl.Squeezed(), tn, c.shape[2]), lambda b: (b, 0, 0)),
    ] + [full_spec(w) for w in weight_args]

    out_specs = pl.BlockSpec((pl.Squeezed(), tn, OUT_PAD), lambda b: (b, 0, 0))

    out_padded = pl.pallas_call(
        wavenet_flow_kernel,
        out_shape=jax.ShapeDtypeStruct((bn, tn, OUT_PAD), jnp.float32),
        grid_spec=pltpu.PrefetchScalarGridSpec(
            num_scalar_prefetch=0,
            grid=(bn,),
            in_specs=in_specs,
            out_specs=out_specs,
            scratch_shapes=[pltpu.VMEM((PADT + tn, CH2), jnp.float32)],
        ),
        compiler_params=pltpu.CompilerParams(dimension_semantics=("parallel",)),
    )(xtap, c, *weight_args)

    # lane-dense kernel output -> slice the single real channel in the wrapper
    return out_padded[:, :, :OUT_CHANNELS]


def init_params(key):
    L = NUM_BLOCKS * NUM_LAYERS
    keys = jax.random.split(key, 18)

    def nrm(k, shape, fan_in):
        return (jax.random.normal(k, shape, jnp.float32) / math.sqrt(fan_in)).astype(jnp.float32)

    p = {}
    p['w_front'] = nrm(keys[0], (FRONT_KERNEL, 1, RES_CHANNELS), FRONT_KERNEL)
    p['b_front'] = 0.1 * nrm(keys[1], (1, RES_CHANNELS), 1)
    p['w_filt'] = nrm(keys[2], (L, KERNEL_SIZE, RES_CHANNELS, GATE_CHANNELS),
                      KERNEL_SIZE * RES_CHANNELS)
    p['b_filt'] = 0.1 * nrm(keys[3], (L, 1, GATE_CHANNELS), 1)
    p['w_gate'] = nrm(keys[4], (L, KERNEL_SIZE, RES_CHANNELS, GATE_CHANNELS),
                      KERNEL_SIZE * RES_CHANNELS)
    p['b_gate'] = 0.1 * nrm(keys[5], (L, 1, GATE_CHANNELS), 1)
    p['w_fc'] = nrm(keys[6], (L, CIN_CHANNELS, GATE_CHANNELS), CIN_CHANNELS)
    p['b_fc'] = 0.1 * nrm(keys[7], (L, 1, GATE_CHANNELS), 1)
    p['w_gc'] = nrm(keys[8], (L, CIN_CHANNELS, GATE_CHANNELS), CIN_CHANNELS)
    p['b_gc'] = 0.1 * nrm(keys[9], (L, 1, GATE_CHANNELS), 1)
    p['w_res'] = nrm(keys[10], (L, GATE_CHANNELS, RES_CHANNELS), GATE_CHANNELS)
    p['b_res'] = 0.1 * nrm(keys[11], (L, 1, RES_CHANNELS), 1)
    p['w_skip'] = nrm(keys[12], (L, GATE_CHANNELS, SKIP_CHANNELS), GATE_CHANNELS)
    p['b_skip'] = 0.1 * nrm(keys[13], (L, 1, SKIP_CHANNELS), 1)
    p['w_fin1'] = nrm(keys[14], (SKIP_CHANNELS, SKIP_CHANNELS), SKIP_CHANNELS)
    p['b_fin1'] = 0.1 * nrm(keys[15], (1, SKIP_CHANNELS), 1)
    p['w_fin2'] = nrm(keys[16], (SKIP_CHANNELS, OUT_CHANNELS), SKIP_CHANNELS)
    p['b_fin2'] = 0.1 * nrm(keys[17], (1, OUT_CHANNELS), 1)
    return p


def ref_forward(x, c, p):
    """Pure-JAX f32 reference mirroring the PyTorch Wavenet_Flow.forward."""
    def causal_conv(h, w, b, dilation):
        K = w.shape[0]
        pad = dilation * (K - 1)
        hp = jnp.pad(h, ((0, 0), (pad, 0), (0, 0)))
        tn = h.shape[1]
        y = jnp.zeros((h.shape[0], tn, w.shape[2]), jnp.float32) + b.reshape(1, 1, -1)
        for k in range(K):
            y = y + jnp.einsum('btc,cd->btd', hp[:, k * dilation:k * dilation + tn, :], w[k])
        return y

    h = jax.nn.relu(causal_conv(x, p['w_front'], p['b_front'], 1))
    skip = 0.0
    L = p['w_filt'].shape[0]
    for l in range(L):
        d = 2 ** (l % NUM_LAYERS)
        hf = (causal_conv(h, p['w_filt'][l], p['b_filt'][l], d)
              + jnp.einsum('btc,cd->btd', c, p['w_fc'][l]) + p['b_fc'][l].reshape(1, 1, -1))
        hg = (causal_conv(h, p['w_gate'][l], p['b_gate'][l], d)
              + jnp.einsum('btc,cd->btd', c, p['w_gc'][l]) + p['b_gc'][l].reshape(1, 1, -1))
        z = jnp.tanh(hf) * jax.nn.sigmoid(hg)
        res = jnp.einsum('btc,cd->btd', z, p['w_res'][l]) + p['b_res'][l].reshape(1, 1, -1)
        sk = jnp.einsum('btc,cd->btd', z, p['w_skip'][l]) + p['b_skip'][l].reshape(1, 1, -1)
        h = (h + res) * SQRT_HALF
        skip = skip + sk
    skip = jax.nn.relu(skip)
    t1 = jax.nn.relu(jnp.einsum('btc,cd->btd', skip, p['w_fin1']) + p['b_fin1'].reshape(1, 1, -1))
    return jnp.einsum('btc,cd->btd', t1, p['w_fin2']) + p['b_fin2'].reshape(1, 1, -1)


if __name__ == "__main__":
    key = jax.random.PRNGKey(0)
    kx, kc, kp = jax.random.split(key, 3)
    # torch forward takes x: (B, 1, T), c: (B, cin, T); here NTC layout.
    x = jax.random.normal(kx, (B, T, 1), jnp.float32)
    c = jax.random.normal(kc, (B, T, CIN_CHANNELS), jnp.float32)
    params = init_params(kp)

    out = jax.block_until_ready(wavenet_flow(x, c, params))
    assert out.shape == (B, T, OUT_CHANNELS)

    ref = jax.block_until_ready(ref_forward(x, c, params))
    # tolerance widened slightly (2e-2) to cover bf16 MXU operands with f32 accumulation
    if not bool(jnp.allclose(out, ref, rtol=2e-2, atol=2e-2)):
        raise AssertionError(
            f"mismatch vs reference: max abs err {float(jnp.max(jnp.abs(out - ref)))}")
    print("KERNEL_OK")
</pallas_src>

<mosaic_0001>
module attributes {stable_mosaic.version = 11 : i64} {
  func.func @wavenet_flow_kernel(%arg0: i32, %arg1: memref<1x64x8xf32, #tpu.memory_space<vmem>>, %arg2: memref<1x64x16xf32, #tpu.memory_space<vmem>>, %arg3: memref<8x64xbf16, #tpu.memory_space<vmem>>, %arg4: memref<1x64xf32, #tpu.memory_space<vmem>>, %arg5: memref<4x3x64x64xbf16, #tpu.memory_space<vmem>>, %arg6: memref<4x1x64xf32, #tpu.memory_space<vmem>>, %arg7: memref<4x16x64xbf16, #tpu.memory_space<vmem>>, %arg8: memref<4x64x64xbf16, #tpu.memory_space<vmem>>, %arg9: memref<4x1x64xf32, #tpu.memory_space<vmem>>, %arg10: memref<64x64xbf16, #tpu.memory_space<vmem>>, %arg11: memref<1x64xf32, #tpu.memory_space<vmem>>, %arg12: memref<64x64xbf16, #tpu.memory_space<vmem>>, %arg13: memref<1x64xf32, #tpu.memory_space<vmem>>, %arg14: memref<64x128xbf16, #tpu.memory_space<vmem>>, %arg15: memref<1x128xf32, #tpu.memory_space<vmem>>, %arg16: memref<1x64x128xf32, #tpu.memory_space<vmem>>, %arg17: memref<80x64xf32, #tpu.memory_space<vmem>>) attributes {dimension_semantics = [#tpu.dimension_semantics<parallel>], iteration_bounds = array<i64: 2>, scalar_prefetch = 0 : i64, scratch_operands = 1 : i64, tpu.core_type = #tpu.core_type<tc>, window_params = [{transform_indices = @transform_0, window_bounds = array<i64: 1, 64, 8>}, {transform_indices = @transform_1, window_bounds = array<i64: 1, 64, 16>}, {pipeline_mode = #tpu.pipeline_mode<synchronous>, transform_indices = @transform_2, window_bounds = array<i64: 8, 64>}, {pipeline_mode = #tpu.pipeline_mode<synchronous>, transform_indices = @transform_3, window_bounds = array<i64: 1, 64>}, {pipeline_mode = #tpu.pipeline_mode<synchronous>, transform_indices = @transform_4, window_bounds = array<i64: 4, 3, 64, 64>}, {pipeline_mode = #tpu.pipeline_mode<synchronous>, transform_indices = @transform_5, window_bounds = array<i64: 4, 1, 64>}, {pipeline_mode = #tpu.pipeline_mode<synchronous>, transform_indices = @transform_6, window_bounds = array<i64: 4, 16, 64>}, {pipeline_mode = #tpu.pipeline_mode<synchronous>, transform_indices = @transform_7, window_bounds = array<i64: 4, 64, 64>}, {pipeline_mode = #tpu.pipeline_mode<synchronous>, transform_indices = @transform_8, window_bounds = array<i64: 4, 1, 64>}, {pipeline_mode = #tpu.pipeline_mode<synchronous>, transform_indices = @transform_9, window_bounds = array<i64: 64, 64>}, {pipeline_mode = #tpu.pipeline_mode<synchronous>, transform_indices = @transform_10, window_bounds = array<i64: 1, 64>}, {pipeline_mode = #tpu.pipeline_mode<synchronous>, transform_indices = @transform_11, window_bounds = array<i64: 64, 64>}, {pipeline_mode = #tpu.pipeline_mode<synchronous>, transform_indices = @transform_12, window_bounds = array<i64: 1, 64>}, {pipeline_mode = #tpu.pipeline_mode<synchronous>, transform_indices = @transform_13, window_bounds = array<i64: 64, 128>}, {pipeline_mode = #tpu.pipeline_mode<synchronous>, transform_indices = @transform_14, window_bounds = array<i64: 1, 128>}, {transform_indices = @transform_15, window_bounds = array<i64: 1, 64, 128>}]} {
    %cst = arith.constant 0.000000e+00 : f32
    %0 = vector.broadcast %cst : f32 to vector<16x64xf32>
    %c0 = arith.constant 0 : index
    %c0_0 = arith.constant 0 : index
    %1 = vector.load %arg17[%c0, %c0_0] : memref<80x64xf32, #tpu.memory_space<vmem>>, vector<16x64xf32>
    tpu.vector_store %arg17[%c0, %c0_0], %0 {strides = array<i32>} : memref<80x64xf32, #tpu.memory_space<vmem>>, vector<16x64xf32>,
    %c0_1 = arith.constant 0 : index
    %c0_2 = arith.constant 0 : index
    %c0_3 = arith.constant 0 : index
    %2 = vector.load %arg2[%c0_1, %c0_2, %c0_3] : memref<1x64x16xf32, #tpu.memory_space<vmem>>, vector<1x64x16xf32>
    %3 = vector.shape_cast %2 : vector<1x64x16xf32> to vector<64x16xf32>
    %4 = arith.truncf %3 : vector<64x16xf32> to vector<64x16xbf16>
    %c0_4 = arith.constant 0 : index
    %c0_5 = arith.constant 0 : index
    %5 = vector.load %arg10[%c0_4, %c0_5] : memref<64x64xbf16, #tpu.memory_space<vmem>>, vector<64x64xbf16>
    %c0_6 = arith.constant 0 : index
    %c0_7 = arith.constant 0 : index
    %6 = vector.load %arg11[%c0_6, %c0_7] : memref<1x64xf32, #tpu.memory_space<vmem>>, vector<1x64xf32>
    %c0_8 = arith.constant 0 : index
    %c0_9 = arith.constant 0 : index
    %c0_10 = arith.constant 0 : index
    %7 = vector.load %arg1[%c0_8, %c0_9, %c0_10] : memref<1x64x8xf32, #tpu.memory_space<vmem>>, vector<1x64x8xf32>
    %8 = vector.shape_cast %7 : vector<1x64x8xf32> to vector<64x8xf32>
    %9 = arith.truncf %8 : vector<64x8xf32> to vector<64x8xbf16>
    %c0_11 = arith.constant 0 : index
    %c0_12 = arith.constant 0 : index
    %10 = vector.load %arg3[%c0_11, %c0_12] : memref<8x64xbf16, #tpu.memory_space<vmem>>, vector<8x64xbf16>
    %cst_13 = arith.constant dense<0.000000e+00> : vector<64x64xf32>
    %11 = tpu.matmul %9, %10, %cst_13 {dimension_numbers = #tpu.dot_dimension_numbers<[1], [0], [0], [1], [0, 0, 1, 1], [], []>} : vector<64x8xbf16>, vector<8x64xbf16>, vector<64x64xf32> -> vector<64x64xf32>
    %c0_14 = arith.constant 0 : index
    %c0_15 = arith.constant 0 : index
    %12 = vector.load %arg4[%c0_14, %c0_15] : memref<1x64xf32, #tpu.memory_space<vmem>>, vector<1x64xf32>
    %13 = vector.broadcast %12 : vector<1x64xf32> to vector<64x64xf32>
    %14 = arith.addf %11, %13 : vector<64x64xf32>
    %cst_16 = arith.constant 0.000000e+00 : f32
    %15 = vector.broadcast %cst_16 : f32 to vector<64x64xf32>
    %16 = arith.maximumf %14, %15 : vector<64x64xf32>
    %c16 = arith.constant 16 : index
    %c0_17 = arith.constant 0 : index
    %17 = vector.load %arg17[%c16, %c0_17] : memref<80x64xf32, #tpu.memory_space<vmem>>, vector<64x64xf32>
    tpu.vector_store %arg17[%c16, %c0_17], %16 {strides = array<i32>} : memref<80x64xf32, #tpu.memory_space<vmem>>, vector<64x64xf32>,
    %c0_18 = arith.constant 0 : index
    %c0_19 = arith.constant 0 : index
    %c0_20 = arith.constant 0 : index
    %18 = vector.load %arg7[%c0_18, %c0_19, %c0_20] : memref<4x16x64xbf16, #tpu.memory_space<vmem>>, vector<1x16x64xbf16>
    %19 = vector.shape_cast %18 : vector<1x16x64xbf16> to vector<16x64xbf16>
    %cst_21 = arith.constant dense<0.000000e+00> : vector<64x64xf32>
    %20 = tpu.matmul %4, %19, %cst_21 {dimension_numbers = #tpu.dot_dimension_numbers<[1], [0], [0], [1], [0, 0, 1, 1], [], []>} : vector<64x16xbf16>, vector<16x64xbf16>, vector<64x64xf32> -> vector<64x64xf32>
    %c0_22 = arith.constant 0 : index
    %c0_23 = arith.constant 0 : index
    %c0_24 = arith.constant 0 : index
    %21 = vector.load %arg6[%c0_22, %c0_23, %c0_24] : memref<4x1x64xf32, #tpu.memory_space<vmem>>, vector<1x1x64xf32>
    %22 = vector.shape_cast %21 : vector<1x1x64xf32> to vector<1x64xf32>
    %23 = vector.broadcast %22 : vector<1x64xf32> to vector<64x64xf32>
    %24 = arith.addf %20, %23 : vector<64x64xf32>
    %c14 = arith.constant 14 : index
    %c0_25 = arith.constant 0 : index
    %25 = vector.load %arg17[%c14, %c0_25] : memref<80x64xf32, #tpu.memory_space<vmem>>, vector<64x64xf32>
    %26 = arith.truncf %25 : vector<64x64xf32> to vector<64x64xbf16>
    %c0_26 = arith.constant 0 : index
    %c0_27 = arith.constant 0 : index
    %c0_28 = arith.constant 0 : index
    %c0_29 = arith.constant 0 : index
    %27 = vector.load %arg5[%c0_26, %c0_27, %c0_28, %c0_29] : memref<4x3x64x64xbf16, #tpu.memory_space<vmem>>, vector<1x1x64x64xbf16>
    %28 = vector.shape_cast %27 : vector<1x1x64x64xbf16> to vector<64x64xbf16>
    %cst_30 = arith.constant dense<0.000000e+00> : vector<64x64xf32>
    %29 = tpu.matmul %26, %28, %cst_30 {dimension_numbers = #tpu.dot_dimension_numbers<[1], [0], [0], [1], [0, 0, 1, 1], [], []>} : vector<64x64xbf16>, vector<64x64xbf16>, vector<64x64xf32> -> vector<64x64xf32>
    %30 = arith.addf %24, %29 : vector<64x64xf32>
    %c15 = arith.constant 15 : index
    %c0_31 = arith.constant 0 : index
    %31 = vector.load %arg17[%c15, %c0_31] : memref<80x64xf32, #tpu.memory_space<vmem>>, vector<64x64xf32>
    %32 = arith.truncf %31 : vector<64x64xf32> to vector<64x64xbf16>
    %c0_32 = arith.constant 0 : index
    %c1 = arith.constant 1 : index
    %c0_33 = arith.constant 0 : index
    %c0_34 = arith.constant 0 : index
    %33 = vector.load %arg5[%c0_32, %c1, %c0_33, %c0_34] : memref<4x3x64x64xbf16, #tpu.memory_space<vmem>>, vector<1x1x64x64xbf16>
    %34 = vector.shape_cast %33 : vector<1x1x64x64xbf16> to vector<64x64xbf16>
    %cst_35 = arith.constant dense<0.000000e+00> : vector<64x64xf32>
    %35 = tpu.matmul %32, %34, %cst_35 {dimension_numbers = #tpu.dot_dimension_numbers<[1], [0], [0], [1], [0, 0, 1, 1], [], []>} : vector<64x64xbf16>, vector<64x64xbf16>, vector<64x64xf32> -> vector<64x64xf32>
    %36 = arith.addf %30, %35 : vector<64x64xf32>
    %37 = arith.truncf %16 : vector<64x64xf32> to vector<64x64xbf16>
    %c0_36 = arith.constant 0 : index
    %c2 = arith.constant 2 : index
    %c0_37 = arith.constant 0 : index
    %c0_38 = arith.constant 0 : index
    %38 = vector.load %arg5[%c0_36, %c2, %c0_37, %c0_38] : memref<4x3x64x64xbf16, #tpu.memory_space<vmem>>, vector<1x1x64x64xbf16>
    %39 = vector.shape_cast %38 : vector<1x1x64x64xbf16> to vector<64x64xbf16>
    %cst_39 = arith.constant dense<0.000000e+00> : vector<64x64xf32>
    %40 = tpu.matmul %37, %39, %cst_39 {dimension_numbers = #tpu.dot_dimension_numbers<[1], [0], [0], [1], [0, 0, 1, 1], [], []>} : vector<64x64xbf16>, vector<64x64xbf16>, vector<64x64xf32> -> vector<64x64xf32>
    %41 = arith.addf %36, %40 : vector<64x64xf32>
    %42 = arith.truncf %41 : vector<64x64xf32> to vector<64x64xbf16>
    %cst_40 = arith.constant dense<0.000000e+00> : vector<64x64xf32>
    %43 = tpu.matmul %42, %5, %cst_40 {dimension_numbers = #tpu.dot_dimension_numbers<[1], [0], [0], [1], [0, 0, 1, 1], [], []>} : vector<64x64xbf16>, vector<64x64xbf16>, vector<64x64xf32> -> vector<64x64xf32>
    %44 = math.tanh %41 : vector<64x64xf32>
    %45 = arith.negf %43 : vector<64x64xf32>
    %46 = math.exp %45 : vector<64x64xf32>
    %cst_41 = arith.constant 1.000000e+00 : f32
    %47 = vector.broadcast %cst_41 : f32 to vector<64x64xf32>
    %48 = arith.addf %47, %46 : vector<64x64xf32>
    %49 = arith.divf %47, %48 : vector<64x64xf32>
    %50 = arith.mulf %44, %49 : vector<64x64xf32>
    %51 = arith.truncf %50 : vector<64x64xf32> to vector<64x64xbf16>
    %c0_42 = arith.constant 0 : index
    %c0_43 = arith.constant 0 : index
    %c0_44 = arith.constant 0 : index
    %52 = vector.load %arg8[%c0_42, %c0_43, %c0_44] : memref<4x64x64xbf16, #tpu.memory_space<vmem>>, vector<1x64x64xbf16>
    %53 = vector.shape_cast %52 : vector<1x64x64xbf16> to vector<64x64xbf16>
    %cst_45 = arith.constant dense<0.000000e+00> : vector<64x64xf32>
    %54 = tpu.matmul %51, %53, %cst_45 {dimension_numbers = #tpu.dot_dimension_numbers<[1], [0], [0], [1], [0, 0, 1, 1], [], []>} : vector<64x64xbf16>, vector<64x64xbf16>, vector<64x64xf32> -> vector<64x64xf32>
    %c0_46 = arith.constant 0 : index
    %c0_47 = arith.constant 0 : index
    %c0_48 = arith.constant 0 : index
    %55 = vector.load %arg9[%c0_46, %c0_47, %c0_48] : memref<4x1x64xf32, #tpu.memory_space<vmem>>, vector<1x1x64xf32>
    %56 = vector.shape_cast %55 : vector<1x1x64xf32> to vector<1x64xf32>
    %57 = vector.broadcast %56 : vector<1x64xf32> to vector<64x64xf32>
    %58 = arith.addf %54, %57 : vector<64x64xf32>
    %59 = arith.addf %16, %58 : vector<64x64xf32>
    %60 = vector.broadcast %6 : vector<1x64xf32> to vector<64x64xf32>
    %61 = arith.mulf %59, %60 : vector<64x64xf32>
    %c16_49 = arith.constant 16 : index
    %c0_50 = arith.constant 0 : index
    %62 = vector.load %arg17[%c16_49, %c0_50] : memref<80x64xf32, #tpu.memory_space<vmem>>, vector<64x64xf32>
    tpu.vector_store %arg17[%c16_49, %c0_50], %61 {strides = array<i32>} : memref<80x64xf32, #tpu.memory_space<vmem>>, vector<64x64xf32>,
    %c1_51 = arith.constant 1 : index
    %c0_52 = arith.constant 0 : index
    %c0_53 = arith.constant 0 : index
    %63 = vector.load %arg7[%c1_51, %c0_52, %c0_53] : memref<4x16x64xbf16, #tpu.memory_space<vmem>>, vector<1x16x64xbf16>
    %64 = vector.shape_cast %63 : vector<1x16x64xbf16> to vector<16x64xbf16>
    %cst_54 = arith.constant dense<0.000000e+00> : vector<64x64xf32>
    %65 = tpu.matmul %4, %64, %cst_54 {dimension_numbers = #tpu.dot_dimension_numbers<[1], [0], [0], [1], [0, 0, 1, 1], [], []>} : vector<64x16xbf16>, vector<16x64xbf16>, vector<64x64xf32> -> vector<64x64xf32>
    %c1_55 = arith.constant 1 : index
    %c0_56 = arith.constant 0 : index
    %c0_57 = arith.constant 0 : index
    %66 = vector.load %arg6[%c1_55, %c0_56, %c0_57] : memref<4x1x64xf32, #tpu.memory_space<vmem>>, vector<1x1x64xf32>
    %67 = vector.shape_cast %66 : vector<1x1x64xf32> to vector<1x64xf32>
    %68 = vector.broadcast %67 : vector<1x64xf32> to vector<64x64xf32>
    %69 = arith.addf %65, %68 : vector<64x64xf32>
    %c12 = arith.constant 12 : index
    %c0_58 = arith.constant 0 : index
    %70 = vector.load %arg17[%c12, %c0_58] : memref<80x64xf32, #tpu.memory_space<vmem>>, vector<64x64xf32>
    %71 = arith.truncf %70 : vector<64x64xf32> to vector<64x64xbf16>
    %c1_59 = arith.constant 1 : index
    %c0_60 = arith.constant 0 : index
    %c0_61 = arith.constant 0 : index
    %c0_62 = arith.constant 0 : index
    %72 = vector.load %arg5[%c1_59, %c0_60, %c0_61, %c0_62] : memref<4x3x64x64xbf16, #tpu.memory_space<vmem>>, vector<1x1x64x64xbf16>
    %73 = vector.shape_cast %72 : vector<1x1x64x64xbf16> to vector<64x64xbf16>
    %cst_63 = arith.constant dense<0.000000e+00> : vector<64x64xf32>
    %74 = tpu.matmul %71, %73, %cst_63 {dimension_numbers = #tpu.dot_dimension_numbers<[1], [0], [0], [1], [0, 0, 1, 1], [], []>} : vector<64x64xbf16>, vector<64x64xbf16>, vector<64x64xf32> -> vector<64x64xf32>
    %75 = arith.addf %69, %74 : vector<64x64xf32>
    %c14_64 = arith.constant 14 : index
    %c0_65 = arith.constant 0 : index
    %76 = vector.load %arg17[%c14_64, %c0_65] : memref<80x64xf32, #tpu.memory_space<vmem>>, vector<64x64xf32>
    %77 = arith.truncf %76 : vector<64x64xf32> to vector<64x64xbf16>
    %c1_66 = arith.constant 1 : index
    %c1_67 = arith.constant 1 : index
    %c0_68 = arith.constant 0 : index
    %c0_69 = arith.constant 0 : index
    %78 = vector.load %arg5[%c1_66, %c1_67, %c0_68, %c0_69] : memref<4x3x64x64xbf16, #tpu.memory_space<vmem>>, vector<1x1x64x64xbf16>
    %79 = vector.shape_cast %78 : vector<1x1x64x64xbf16> to vector<64x64xbf16>
    %cst_70 = arith.constant dense<0.000000e+00> : vector<64x64xf32>
    %80 = tpu.matmul %77, %79, %cst_70 {dimension_numbers = #tpu.dot_dimension_numbers<[1], [0], [0], [1], [0, 0, 1, 1], [], []>} : vector<64x64xbf16>, vector<64x64xbf16>, vector<64x64xf32> -> vector<64x64xf32>
    %81 = arith.addf %75, %80 : vector<64x64xf32>
    %82 = arith.truncf %61 : vector<64x64xf32> to vector<64x64xbf16>
    %c1_71 = arith.constant 1 : index
    %c2_72 = arith.constant 2 : index
    %c0_73 = arith.constant 0 : index
    %c0_74 = arith.constant 0 : index
    %83 = vector.load %arg5[%c1_71, %c2_72, %c0_73, %c0_74] : memref<4x3x64x64xbf16, #tpu.memory_space<vmem>>, vector<1x1x64x64xbf16>
    %84 = vector.shape_cast %83 : vector<1x1x64x64xbf16> to vector<64x64xbf16>
    %cst_75 = arith.constant dense<0.000000e+00> : vector<64x64xf32>
    %85 = tpu.matmul %82, %84, %cst_75 {dimension_numbers = #tpu.dot_dimension_numbers<[1], [0], [0], [1], [0, 0, 1, 1], [], []>} : vector<64x64xbf16>, vector<64x64xbf16>, vector<64x64xf32> -> vector<64x64xf32>
    %86 = arith.addf %81, %85 : vector<64x64xf32>
    %87 = arith.truncf %86 : vector<64x64xf32> to vector<64x64xbf16>
    %cst_76 = arith.constant dense<0.000000e+00> : vector<64x64xf32>
    %88 = tpu.matmul %87, %5, %cst_76 {dimension_numbers = #tpu.dot_dimension_numbers<[1], [0], [0], [1], [0, 0, 1, 1], [], []>} : vector<64x64xbf16>, vector<64x64xbf16>, vector<64x64xf32> -> vector<64x64xf32>
    %89 = math.tanh %86 : vector<64x64xf32>
    %90 = arith.negf %88 : vector<64x64xf32>
    %91 = math.exp %90 : vector<64x64xf32>
    %cst_77 = arith.constant 1.000000e+00 : f32
    %92 = vector.broadcast %cst_77 : f32 to vector<64x64xf32>
    %93 = arith.addf %92, %91 : vector<64x64xf32>
    %94 = arith.divf %92, %93 : vector<64x64xf32>
    %95 = arith.mulf %89, %94 : vector<64x64xf32>
    %96 = arith.truncf %95 : vector<64x64xf32> to vector<64x64xbf16>
    %c1_78 = arith.constant 1 : index
    %c0_79 = arith.constant 0 : index
    %c0_80 = arith.constant 0 : index
    %97 = vector.load %arg8[%c1_78, %c0_79, %c0_80] : memref<4x64x64xbf16, #tpu.memory_space<vmem>>, vector<1x64x64xbf16>
    %98 = vector.shape_cast %97 : vector<1x64x64xbf16> to vector<64x64xbf16>
    %cst_81 = arith.constant dense<0.000000e+00> : vector<64x64xf32>
    %99 = tpu.matmul %96, %98, %cst_81 {dimension_numbers = #tpu.dot_dimension_numbers<[1], [0], [0], [1], [0, 0, 1, 1], [], []>} : vector<64x64xbf16>, vector<64x64xbf16>, vector<64x64xf32> -> vector<64x64xf32>
    %c1_82 = arith.constant 1 : index
    %c0_83 = arith.constant 0 : index
    %c0_84 = arith.constant 0 : index
    %100 = vector.load %arg9[%c1_82, %c0_83, %c0_84] : memref<4x1x64xf32, #tpu.memory_space<vmem>>, vector<1x1x64xf32>
    %101 = vector.shape_cast %100 : vector<1x1x64xf32> to vector<1x64xf32>
    %102 = vector.broadcast %101 : vector<1x64xf32> to vector<64x64xf32>
    %103 = arith.addf %99, %102 : vector<64x64xf32>
    %104 = arith.addf %61, %103 : vector<64x64xf32>
    %105 = vector.broadcast %6 : vector<1x64xf32> to vector<64x64xf32>
    %106 = arith.mulf %104, %105 : vector<64x64xf32>
    %c16_85 = arith.constant 16 : index
    %c0_86 = arith.constant 0 : index
    %107 = vector.load %arg17[%c16_85, %c0_86] : memref<80x64xf32, #tpu.memory_space<vmem>>, vector<64x64xf32>
    tpu.vector_store %arg17[%c16_85, %c0_86], %106 {strides = array<i32>} : memref<80x64xf32, #tpu.memory_space<vmem>>, vector<64x64xf32>,
    %c2_87 = arith.constant 2 : index
    %c0_88 = arith.constant 0 : index
    %c0_89 = arith.constant 0 : index
    %108 = vector.load %arg7[%c2_87, %c0_88, %c0_89] : memref<4x16x64xbf16, #tpu.memory_space<vmem>>, vector<1x16x64xbf16>
    %109 = vector.shape_cast %108 : vector<1x16x64xbf16> to vector<16x64xbf16>
    %cst_90 = arith.constant dense<0.000000e+00> : vector<64x64xf32>
    %110 = tpu.matmul %4, %109, %cst_90 {dimension_numbers = #tpu.dot_dimension_numbers<[1], [0], [0], [1], [0, 0, 1, 1], [], []>} : vector<64x16xbf16>, vector<16x64xbf16>, vector<64x64xf32> -> vector<64x64xf32>
    %c2_91 = arith.constant 2 : index
    %c0_92 = arith.constant 0 : index
    %c0_93 = arith.constant 0 : index
    %111 = vector.load %arg6[%c2_91, %c0_92, %c0_93] : memref<4x1x64xf32, #tpu.memory_space<vmem>>, vector<1x1x64xf32>
    %112 = vector.shape_cast %111 : vector<1x1x64xf32> to vector<1x64xf32>
    %113 = vector.broadcast %112 : vector<1x64xf32> to vector<64x64xf32>
    %114 = arith.addf %110, %113 : vector<64x64xf32>
    %c8 = arith.constant 8 : index
    %c0_94 = arith.constant 0 : index
    %115 = vector.load %arg17[%c8, %c0_94] : memref<80x64xf32, #tpu.memory_space<vmem>>, vector<64x64xf32>
    %116 = arith.truncf %115 : vector<64x64xf32> to vector<64x64xbf16>
    %c2_95 = arith.constant 2 : index
    %c0_96 = arith.constant 0 : index
    %c0_97 = arith.constant 0 : index
    %c0_98 = arith.constant 0 : index
    %117 = vector.load %arg5[%c2_95, %c0_96, %c0_97, %c0_98] : memref<4x3x64x64xbf16, #tpu.memory_space<vmem>>, vector<1x1x64x64xbf16>
    %118 = vector.shape_cast %117 : vector<1x1x64x64xbf16> to vector<64x64xbf16>
    %cst_99 = arith.constant dense<0.000000e+00> : vector<64x64xf32>
    %119 = tpu.matmul %116, %118, %cst_99 {dimension_numbers = #tpu.dot_dimension_numbers<[1], [0], [0], [1], [0, 0, 1, 1], [], []>} : vector<64x64xbf16>, vector<64x64xbf16>, vector<64x64xf32> -> vector<64x64xf32>
    %120 = arith.addf %114, %119 : vector<64x64xf32>
    %c12_100 = arith.constant 12 : index
    %c0_101 = arith.constant 0 : index
    %121 = vector.load %arg17[%c12_100, %c0_101] : memref<80x64xf32, #tpu.memory_space<vmem>>, vector<64x64xf32>
    %122 = arith.truncf %121 : vector<64x64xf32> to vector<64x64xbf16>
    %c2_102 = arith.constant 2 : index
    %c1_103 = arith.constant 1 : index
    %c0_104 = arith.constant 0 : index
    %c0_105 = arith.constant 0 : index
    %123 = vector.load %arg5[%c2_102, %c1_103, %c0_104, %c0_105] : memref<4x3x64x64xbf16, #tpu.memory_space<vmem>>, vector<1x1x64x64xbf16>
    %124 = vector.shape_cast %123 : vector<1x1x64x64xbf16> to vector<64x64xbf16>
    %cst_106 = arith.constant dense<0.000000e+00> : vector<64x64xf32>
    %125 = tpu.matmul %122, %124, %cst_106 {dimension_numbers = #tpu.dot_dimension_numbers<[1], [0], [0], [1], [0, 0, 1, 1], [], []>} : vector<64x64xbf16>, vector<64x64xbf16>, vector<64x64xf32> -> vector<64x64xf32>
    %126 = arith.addf %120, %125 : vector<64x64xf32>
    %127 = arith.truncf %106 : vector<64x64xf32> to vector<64x64xbf16>
    %c2_107 = arith.constant 2 : index
    %c2_108 = arith.constant 2 : index
    %c0_109 = arith.constant 0 : index
    %c0_110 = arith.constant 0 : index
    %128 = vector.load %arg5[%c2_107, %c2_108, %c0_109, %c0_110] : memref<4x3x64x64xbf16, #tpu.memory_space<vmem>>, vector<1x1x64x64xbf16>
    %129 = vector.shape_cast %128 : vector<1x1x64x64xbf16> to vector<64x64xbf16>
    %cst_111 = arith.constant dense<0.000000e+00> : vector<64x64xf32>
    %130 = tpu.matmul %127, %129, %cst_111 {dimension_numbers = #tpu.dot_dimension_numbers<[1], [0], [0], [1], [0, 0, 1, 1], [], []>} : vector<64x64xbf16>, vector<64x64xbf16>, vector<64x64xf32> -> vector<64x64xf32>
    %131 = arith.addf %126, %130 : vector<64x64xf32>
    %132 = arith.truncf %131 : vector<64x64xf32> to vector<64x64xbf16>
    %cst_112 = arith.constant dense<0.000000e+00> : vector<64x64xf32>
    %133 = tpu.matmul %132, %5, %cst_112 {dimension_numbers = #tpu.dot_dimension_numbers<[1], [0], [0], [1], [0, 0, 1, 1], [], []>} : vector<64x64xbf16>, vector<64x64xbf16>, vector<64x64xf32> -> vector<64x64xf32>
    %134 = math.tanh %131 : vector<64x64xf32>
    %135 = arith.negf %133 : vector<64x64xf32>
    %136 = math.exp %135 : vector<64x64xf32>
    %cst_113 = arith.constant 1.000000e+00 : f32
    %137 = vector.broadcast %cst_113 : f32 to vector<64x64xf32>
    %138 = arith.addf %137, %136 : vector<64x64xf32>
    %139 = arith.divf %137, %138 : vector<64x64xf32>
    %140 = arith.mulf %134, %139 : vector<64x64xf32>
    %141 = arith.truncf %140 : vector<64x64xf32> to vector<64x64xbf16>
    %c2_114 = arith.constant 2 : index
    %c0_115 = arith.constant 0 : index
    %c0_116 = arith.constant 0 : index
    %142 = vector.load %arg8[%c2_114, %c0_115, %c0_116] : memref<4x64x64xbf16, #tpu.memory_space<vmem>>, vector<1x64x64xbf16>
    %143 = vector.shape_cast %142 : vector<1x64x64xbf16> to vector<64x64xbf16>
    %cst_117 = arith.constant dense<0.000000e+00> : vector<64x64xf32>
    %144 = tpu.matmul %141, %143, %cst_117 {dimension_numbers = #tpu.dot_dimension_numbers<[1], [0], [0], [1], [0, 0, 1, 1], [], []>} : vector<64x64xbf16>, vector<64x64xbf16>, vector<64x64xf32> -> vector<64x64xf32>
    %c2_118 = arith.constant 2 : index
    %c0_119 = arith.constant 0 : index
    %c0_120 = arith.constant 0 : index
    %145 = vector.load %arg9[%c2_118, %c0_119, %c0_120] : memref<4x1x64xf32, #tpu.memory_space<vmem>>, vector<1x1x64xf32>
    %146 = vector.shape_cast %145 : vector<1x1x64xf32> to vector<1x64xf32>
    %147 = vector.broadcast %146 : vector<1x64xf32> to vector<64x64xf32>
    %148 = arith.addf %144, %147 : vector<64x64xf32>
    %149 = arith.addf %106, %148 : vector<64x64xf32>
    %150 = vector.broadcast %6 : vector<1x64xf32> to vector<64x64xf32>
    %151 = arith.mulf %149, %150 : vector<64x64xf32>
    %c16_121 = arith.constant 16 : index
    %c0_122 = arith.constant 0 : index
    %152 = vector.load %arg17[%c16_121, %c0_122] : memref<80x64xf32, #tpu.memory_space<vmem>>, vector<64x64xf32>
    tpu.vector_store %arg17[%c16_121, %c0_122], %151 {strides = array<i32>} : memref<80x64xf32, #tpu.memory_space<vmem>>, vector<64x64xf32>,
    %c3 = arith.constant 3 : index
    %c0_123 = arith.constant 0 : index
    %c0_124 = arith.constant 0 : index
    %153 = vector.load %arg7[%c3, %c0_123, %c0_124] : memref<4x16x64xbf16, #tpu.memory_space<vmem>>, vector<1x16x64xbf16>
    %154 = vector.shape_cast %153 : vector<1x16x64xbf16> to vector<16x64xbf16>
    %cst_125 = arith.constant dense<0.000000e+00> : vector<64x64xf32>
    %155 = tpu.matmul %4, %154, %cst_125 {dimension_numbers = #tpu.dot_dimension_numbers<[1], [0], [0], [1], [0, 0, 1, 1], [], []>} : vector<64x16xbf16>, vector<16x64xbf16>, vector<64x64xf32> -> vector<64x64xf32>
    %c3_126 = arith.constant 3 : index
    %c0_127 = arith.constant 0 : index
    %c0_128 = arith.constant 0 : index
    %156 = vector.load %arg6[%c3_126, %c0_127, %c0_128] : memref<4x1x64xf32, #tpu.memory_space<vmem>>, vector<1x1x64xf32>
    %157 = vector.shape_cast %156 : vector<1x1x64xf32> to vector<1x64xf32>
    %158 = vector.broadcast %157 : vector<1x64xf32> to vector<64x64xf32>
    %159 = arith.addf %155, %158 : vector<64x64xf32>
    %c0_129 = arith.constant 0 : index
    %c0_130 = arith.constant 0 : index
    %160 = vector.load %arg17[%c0_129, %c0_130] : memref<80x64xf32, #tpu.memory_space<vmem>>, vector<64x64xf32>
    %161 = arith.truncf %160 : vector<64x64xf32> to vector<64x64xbf16>
    %c3_131 = arith.constant 3 : index
    %c0_132 = arith.constant 0 : index
    %c0_133 = arith.constant 0 : index
    %c0_134 = arith.constant 0 : index
    %162 = vector.load %arg5[%c3_131, %c0_132, %c0_133, %c0_134] : memref<4x3x64x64xbf16, #tpu.memory_space<vmem>>, vector<1x1x64x64xbf16>
    %163 = vector.shape_cast %162 : vector<1x1x64x64xbf16> to vector<64x64xbf16>
    %cst_135 = arith.constant dense<0.000000e+00> : vector<64x64xf32>
    %164 = tpu.matmul %161, %163, %cst_135 {dimension_numbers = #tpu.dot_dimension_numbers<[1], [0], [0], [1], [0, 0, 1, 1], [], []>} : vector<64x64xbf16>, vector<64x64xbf16>, vector<64x64xf32> -> vector<64x64xf32>
    %165 = arith.addf %159, %164 : vector<64x64xf32>
    %c8_136 = arith.constant 8 : index
    %c0_137 = arith.constant 0 : index
    %166 = vector.load %arg17[%c8_136, %c0_137] : memref<80x64xf32, #tpu.memory_space<vmem>>, vector<64x64xf32>
    %167 = arith.truncf %166 : vector<64x64xf32> to vector<64x64xbf16>
    %c3_138 = arith.constant 3 : index
    %c1_139 = arith.constant 1 : index
    %c0_140 = arith.constant 0 : index
    %c0_141 = arith.constant 0 : index
    %168 = vector.load %arg5[%c3_138, %c1_139, %c0_140, %c0_141] : memref<4x3x64x64xbf16, #tpu.memory_space<vmem>>, vector<1x1x64x64xbf16>
    %169 = vector.shape_cast %168 : vector<1x1x64x64xbf16> to vector<64x64xbf16>
    %cst_142 = arith.constant dense<0.000000e+00> : vector<64x64xf32>
    %170 = tpu.matmul %167, %169, %cst_142 {dimension_numbers = #tpu.dot_dimension_numbers<[1], [0], [0], [1], [0, 0, 1, 1], [], []>} : vector<64x64xbf16>, vector<64x64xbf16>, vector<64x64xf32> -> vector<64x64xf32>
    %171 = arith.addf %165, %170 : vector<64x64xf32>
    %172 = arith.truncf %151 : vector<64x64xf32> to vector<64x64xbf16>
    %c3_143 = arith.constant 3 : index
    %c2_144 = arith.constant 2 : index
    %c0_145 = arith.constant 0 : index
    %c0_146 = arith.constant 0 : index
    %173 = vector.load %arg5[%c3_143, %c2_144, %c0_145, %c0_146] : memref<4x3x64x64xbf16, #tpu.memory_space<vmem>>, vector<1x1x64x64xbf16>
    %174 = vector.shape_cast %173 : vector<1x1x64x64xbf16> to vector<64x64xbf16>
    %cst_147 = arith.constant dense<0.000000e+00> : vector<64x64xf32>
    %175 = tpu.matmul %172, %174, %cst_147 {dimension_numbers = #tpu.dot_dimension_numbers<[1], [0], [0], [1], [0, 0, 1, 1], [], []>} : vector<64x64xbf16>, vector<64x64xbf16>, vector<64x64xf32> -> vector<64x64xf32>
    %176 = arith.addf %171, %175 : vector<64x64xf32>
    %177 = arith.truncf %176 : vector<64x64xf32> to vector<64x64xbf16>
    %cst_148 = arith.constant dense<0.000000e+00> : vector<64x64xf32>
    %178 = tpu.matmul %177, %5, %cst_148 {dimension_numbers = #tpu.dot_dimension_numbers<[1], [0], [0], [1], [0, 0, 1, 1], [], []>} : vector<64x64xbf16>, vector<64x64xbf16>, vector<64x64xf32> -> vector<64x64xf32>
    %179 = math.tanh %176 : vector<64x64xf32>
    %180 = arith.negf %178 : vector<64x64xf32>
    %181 = math.exp %180 : vector<64x64xf32>
    %cst_149 = arith.constant 1.000000e+00 : f32
    %182 = vector.broadcast %cst_149 : f32 to vector<64x64xf32>
    %183 = arith.addf %182, %181 : vector<64x64xf32>
    %184 = arith.divf %182, %183 : vector<64x64xf32>
    %185 = arith.mulf %179, %184 : vector<64x64xf32>
    %186 = arith.truncf %185 : vector<64x64xf32> to vector<64x64xbf16>
    %c3_150 = arith.constant 3 : index
    %c0_151 = arith.constant 0 : index
    %c0_152 = arith.constant 0 : index
    %187 = vector.load %arg8[%c3_150, %c0_151, %c0_152] : memref<4x64x64xbf16, #tpu.memory_space<vmem>>, vector<1x64x64xbf16>
    %188 = vector.shape_cast %187 : vector<1x64x64xbf16> to vector<64x64xbf16>
    %cst_153 = arith.constant dense<0.000000e+00> : vector<64x64xf32>
    %189 = tpu.matmul %186, %188, %cst_153 {dimension_numbers = #tpu.dot_dimension_numbers<[1], [0], [0], [1], [0, 0, 1, 1], [], []>} : vector<64x64xbf16>, vector<64x64xbf16>, vector<64x64xf32> -> vector<64x64xf32>
    %c3_154 = arith.constant 3 : index
    %c0_155 = arith.constant 0 : index
    %c0_156 = arith.constant 0 : index
    %190 = vector.load %arg9[%c3_154, %c0_155, %c0_156] : memref<4x1x64xf32, #tpu.memory_space<vmem>>, vector<1x1x64xf32>
    %191 = vector.shape_cast %190 : vector<1x1x64xf32> to vector<1x64xf32>
    %192 = vector.broadcast %191 : vector<1x64xf32> to vector<64x64xf32>
    %193 = arith.addf %189, %192 : vector<64x64xf32>
    %194 = arith.addf %151, %193 : vector<64x64xf32>
    %195 = vector.broadcast %6 : vector<1x64xf32> to vector<64x64xf32>
    %196 = arith.mulf %194, %195 : vector<64x64xf32>
    %cst_157 = arith.constant 0.000000e+00 : f32
    %197 = vector.broadcast %cst_157 : f32 to vector<64x64xf32>
    %198 = arith.maximumf %196, %197 : vector<64x64xf32>
    %199 = arith.truncf %198 : vector<64x64xf32> to vector<64x64xbf16>
    %c0_158 = arith.constant 0 : index
    %c0_159 = arith.constant 0 : index
    %200 = vector.load %arg12[%c0_158, %c0_159] : memref<64x64xbf16, #tpu.memory_space<vmem>>, vector<64x64xbf16>
    %cst_160 = arith.constant dense<0.000000e+00> : vector<64x64xf32>
    %201 = tpu.matmul %199, %200, %cst_160 {dimension_numbers = #tpu.dot_dimension_numbers<[1], [0], [0], [1], [0, 0, 1, 1], [], []>} : vector<64x64xbf16>, vector<64x64xbf16>, vector<64x64xf32> -> vector<64x64xf32>
    %c0_161 = arith.constant 0 : index
    %c0_162 = arith.constant 0 : index
    %202 = vector.load %arg13[%c0_161, %c0_162] : memref<1x64xf32, #tpu.memory_space<vmem>>, vector<1x64xf32>
    %203 = vector.broadcast %202 : vector<1x64xf32> to vector<64x64xf32>
    %204 = arith.addf %201, %203 : vector<64x64xf32>
    %cst_163 = arith.constant 0.000000e+00 : f32
    %205 = vector.broadcast %cst_163 : f32 to vector<64x64xf32>
    %206 = arith.maximumf %204, %205 : vector<64x64xf32>
    %207 = arith.truncf %206 : vector<64x64xf32> to vector<64x64xbf16>
    %c0_164 = arith.constant 0 : index
    %c0_165 = arith.constant 0 : index
    %208 = vector.load %arg14[%c0_164, %c0_165] : memref<64x128xbf16, #tpu.memory_space<vmem>>, vector<64x128xbf16>
    %cst_166 = arith.constant dense<0.000000e+00> : vector<64x128xf32>
    %209 = tpu.matmul %207, %208, %cst_166 {dimension_numbers = #tpu.dot_dimension_numbers<[1], [0], [0], [1], [0, 0, 1, 1], [], []>} : vector<64x64xbf16>, vector<64x128xbf16>, vector<64x128xf32> -> vector<64x128xf32>
    %c0_167 = arith.constant 0 : index
    %c0_168 = arith.constant 0 : index
    %210 = vector.load %arg15[%c0_167, %c0_168] : memref<1x128xf32, #tpu.memory_space<vmem>>, vector<1x128xf32>
    %211 = vector.broadcast %210 : vector<1x128xf32> to vector<64x128xf32>
    %212 = arith.addf %209, %211 : vector<64x128xf32>
    %c0_169 = arith.constant 0 : index
    %c0_170 = arith.constant 0 : index
    %c0_171 = arith.constant 0 : index
    %213 = vector.load %arg16[%c0_169, %c0_170, %c0_171] : memref<1x64x128xf32, #tpu.memory_space<vmem>>, vector<1x64x128xf32>
    %214 = vector.shape_cast %213 : vector<1x64x128xf32> to vector<64x128xf32>
    %215 = vector.shape_cast %212 : vector<64x128xf32> to vector<1x64x128xf32>
    tpu.vector_store %arg16[%c0_169, %c0_170, %c0_171], %215 {strides = array<i32>} : memref<1x64x128xf32, #tpu.memory_space<vmem>>, vector<1x64x128xf32>,
    return
  }
  func.func @transform_0(%arg0: i32) -> (i32, i32, i32) {
    %c0_i32 = arith.constant 0 : i32
    %c0_i32_0 = arith.constant 0 : i32
    %c0_i32_1 = arith.constant 0 : i32
    return %arg0, %c0_i32, %c0_i32_0 : i32, i32, i32
  }
  func.func @transform_1(%arg0: i32) -> (i32, i32, i32) {
    %c0_i32 = arith.constant 0 : i32
    %c0_i32_0 = arith.constant 0 : i32
    %c0_i32_1 = arith.constant 0 : i32
    return %arg0, %c0_i32, %c0_i32_0 : i32, i32, i32
  }
  func.func @transform_2(%arg0: i32) -> (i32, i32) {
    %c0_i32 = arith.constant 0 : i32
    %c0_i32_0 = arith.constant 0 : i32
    %c0_i32_1 = arith.constant 0 : i32
    return %c0_i32, %c0_i32_0 : i32, i32
  }
  func.func @transform_3(%arg0: i32) -> (i32, i32) {
    %c0_i32 = arith.constant 0 : i32
    %c0_i32_0 = arith.constant 0 : i32
    %c0_i32_1 = arith.constant 0 : i32
    return %c0_i32, %c0_i32_0 : i32, i32
  }
  func.func @transform_4(%arg0: i32) -> (i32, i32, i32, i32) {
    %c0_i32 = arith.constant 0 : i32
    %c0_i32_0 = arith.constant 0 : i32
    %c0_i32_1 = arith.constant 0 : i32
    %c0_i32_2 = arith.constant 0 : i32
    %c0_i32_3 = arith.constant 0 : i32
    return %c0_i32, %c0_i32_0, %c0_i32_1, %c0_i32_2 : i32, i32, i32, i32
  }
  func.func @transform_5(%arg0: i32) -> (i32, i32, i32) {
    %c0_i32 = arith.constant 0 : i32
    %c0_i32_0 = arith.constant 0 : i32
    %c0_i32_1 = arith.constant 0 : i32
    %c0_i32_2 = arith.constant 0 : i32
    return %c0_i32, %c0_i32_0, %c0_i32_1 : i32, i32, i32
  }
  func.func @transform_6(%arg0: i32) -> (i32, i32, i32) {
    %c0_i32 = arith.constant 0 : i32
    %c0_i32_0 = arith.constant 0 : i32
    %c0_i32_1 = arith.constant 0 : i32
    %c0_i32_2 = arith.constant 0 : i32
    return %c0_i32, %c0_i32_0, %c0_i32_1 : i32, i32, i32
  }
  func.func @transform_7(%arg0: i32) -> (i32, i32, i32) {
    %c0_i32 = arith.constant 0 : i32
    %c0_i32_0 = arith.constant 0 : i32
    %c0_i32_1 = arith.constant 0 : i32
    %c0_i32_2 = arith.constant 0 : i32
    return %c0_i32, %c0_i32_0, %c0_i32_1 : i32, i32, i32
  }
  func.func @transform_8(%arg0: i32) -> (i32, i32, i32) {
    %c0_i32 = arith.constant 0 : i32
    %c0_i32_0 = arith.constant 0 : i32
    %c0_i32_1 = arith.constant 0 : i32
    %c0_i32_2 = arith.constant 0 : i32
    return %c0_i32, %c0_i32_0, %c0_i32_1 : i32, i32, i32
  }
  func.func @transform_9(%arg0: i32) -> (i32, i32) {
    %c0_i32 = arith.constant 0 : i32
    %c0_i32_0 = arith.constant 0 : i32
    %c0_i32_1 = arith.constant 0 : i32
    return %c0_i32, %c0_i32_0 : i32, i32
  }
  func.func @transform_10(%arg0: i32) -> (i32, i32) {
    %c0_i32 = arith.constant 0 : i32
    %c0_i32_0 = arith.constant 0 : i32
    %c0_i32_1 = arith.constant 0 : i32
    return %c0_i32, %c0_i32_0 : i32, i32
  }
  func.func @transform_11(%arg0: i32) -> (i32, i32) {
    %c0_i32 = arith.constant 0 : i32
    %c0_i32_0 = arith.constant 0 : i32
    %c0_i32_1 = arith.constant 0 : i32
    return %c0_i32, %c0_i32_0 : i32, i32
  }
  func.func @transform_12(%arg0: i32) -> (i32, i32) {
    %c0_i32 = arith.constant 0 : i32
    %c0_i32_0 = arith.constant 0 : i32
    %c0_i32_1 = arith.constant 0 : i32
    return %c0_i32, %c0_i32_0 : i32, i32
  }
  func.func @transform_13(%arg0: i32) -> (i32, i32) {
    %c0_i32 = arith.constant 0 : i32
    %c0_i32_0 = arith.constant 0 : i32
    %c0_i32_1 = arith.constant 0 : i32
    return %c0_i32, %c0_i32_0 : i32, i32
  }
  func.func @transform_14(%arg0: i32) -> (i32, i32) {
    %c0_i32 = arith.constant 0 : i32
    %c0_i32_0 = arith.constant 0 : i32
    %c0_i32_1 = arith.constant 0 : i32
    return %c0_i32, %c0_i32_0 : i32, i32
  }
  func.func @transform_15(%arg0: i32) -> (i32, i32, i32) {
    %c0_i32 = arith.constant 0 : i32
    %c0_i32_0 = arith.constant 0 : i32
    %c0_i32_1 = arith.constant 0 : i32
    return %arg0, %c0_i32, %c0_i32_0 : i32, i32, i32
  }
}

</mosaic_0001>

<llo_original>
// kernel: tpu_custom_call.1
$region0: #{tpu_custom_call.1}
  #allocation0 [shape = 'u32[]', space=smem, size = 0x4, offset = 0x4, fixed_abs, tag = 'smem constant byte address 0x4 - core index']
  #allocation1 [shape = 'u32[144,128]{1,0:T(1,128)}', space=vmem, size = 0x12000, scoped, tag = 'internal scratch']
  #allocation2 [shape = 'f32[80,64]{1,0:T(8,128)}', space=vmem, size = 0xa000, scoped, tag = 'scratch operand']
  %s0 = inlined_call_operand.vmem [shape: f32[2,64,8], index: 0, kind: input, shape index: {}]
  %s1 = inlined_call_operand.vmem [shape: f32[2,64,16], index: 1, kind: input, shape index: {}]
  %s2 = inlined_call_operand.vmem [shape: bf16[8,64], index: 2, kind: input, shape index: {}]
  %s3 = inlined_call_operand.vmem [shape: f32[1,64], index: 3, kind: input, shape index: {}]
  %s4 = inlined_call_operand.hbm [shape: bf16[4,3,64,64], index: 4, kind: input, shape index: {}]
  %s5 = inlined_call_operand.vmem [shape: f32[4,1,64], index: 5, kind: input, shape index: {}]
  %s6 = inlined_call_operand.vmem [shape: bf16[4,16,64], index: 6, kind: input, shape index: {}]
  %s7 = inlined_call_operand.vmem [shape: bf16[4,64,64], index: 7, kind: input, shape index: {}]
  %s8 = inlined_call_operand.vmem [shape: f32[4,1,64], index: 8, kind: input, shape index: {}]
  %s9 = inlined_call_operand.vmem [shape: bf16[64,64], index: 9, kind: input, shape index: {}]
  %s10 = inlined_call_operand.vmem [shape: f32[1,64], index: 10, kind: input, shape index: {}]
  %s11 = inlined_call_operand.vmem [shape: bf16[64,64], index: 11, kind: input, shape index: {}]
  %s12 = inlined_call_operand.vmem [shape: f32[1,64], index: 12, kind: input, shape index: {}]
  %s13 = inlined_call_operand.vmem [shape: bf16[64,128], index: 13, kind: input, shape index: {}]
  %s14 = inlined_call_operand.vmem [shape: f32[1,128], index: 14, kind: input, shape index: {}]
  %s15 = inlined_call_operand.hbm [shape: f32[2,64,128], index: 15, kind: output, shape index: {}]
  %s16 = sld [smem:[#allocation0]]
  $region97: #{tpu_custom_call.1} parent=0
    _
  %s18 = ssub.s32 1, %s16
  %s19 = scalar_select 0, %s18, %s16
  $region1: #{tpu_custom_call.1} parent=0
    #allocation3 [shape = 'u8[196608]{0}', space=vmem, size = 0x30000, scoped, tag = 'input window, operand 4, single buffered']
    #allocation4 [shape = 's32[2]{0}', space=sflag, size = 0x8, scoped, tag = 'scoped memory for tpu_custom_call.1']
    #allocation5 [shape = 's32[2]{0}', space=sflag, size = 0x8, scoped, tag = 'scoped memory for tpu_custom_call.1']
    #allocation6 [shape = 'u8[65536]{0}', space=vmem, size = 0x10000, scoped, tag = 'output window, operand 0']
    %20 = vsyncpa [#allocation4], 0
    %21 = vsyncpa [#allocation5], 0
    %s22 = scalar_lea.sflag [#allocation5], 1
    %23 = vsyncpa %s22, 0
    loop: start=0, step=1, limit=4
    $region2: #{tpu_custom_call.1} parent=1 // loop_pre_header
      _
    $region3: #{tpu_custom_call.1} parent=1 // loop_header
      %s25 = sphi 0, %s29
      %p26 = scmp.ge.s32.totalorder %s25, 4
      %s35 = sphi 0, %s37
      %s38 = sphi 0, %s35
      %s39 = sphi 0, %s38
      %s55 = sphi 0, %s39
      %s61 = sphi 0, %s63
      %s64 = sphi 0, %s61
      %s65 = sphi 0, %s64
      %s81 = sphi 0, %s65
      %s85 = sphi 0, %s85
      %s87 = sphi 0, %s85
      %s88 = sphi 0, %s87
      %s102 = sphi 0, %s88
      %s106 = sphi 0, %s106
      %s108 = sphi 0, %s106
      %s109 = sphi 0, %s108
      %s123 = sphi 0, %s109
      %s127 = sphi 0, %s127
      %s129 = sphi 0, %s127
      %s130 = sphi 0, %s129
      %s144 = sphi 0, %s130
      %s148 = sphi 0, %s148
      %s150 = sphi 0, %s148
      %s151 = sphi 0, %s150
      %s165 = sphi 0, %s151
      %s169 = sphi 0, %s169
      %s171 = sphi 0, %s169
      %s172 = sphi 0, %s171
      %s186 = sphi 0, %s172
      %s190 = sphi 0, %s190
      %s192 = sphi 0, %s190
      %s193 = sphi 0, %s192
      %s207 = sphi 0, %s193
      %s211 = sphi 0, %s211
      %s213 = sphi 0, %s211
      %s214 = sphi 0, %s213
      %s228 = sphi 0, %s214
      %s232 = sphi 0, %s232
      %s234 = sphi 0, %s232
      %s235 = sphi 0, %s234
      %s249 = sphi 0, %s235
      %s253 = sphi 0, %s253
      %s255 = sphi 0, %s253
      %s256 = sphi 0, %s255
      %s270 = sphi 0, %s256
      %s274 = sphi 0, %s274
      %s276 = sphi 0, %s274
      %s277 = sphi 0, %s276
      %s291 = sphi 0, %s277
      %s295 = sphi 0, %s295
      %s297 = sphi 0, %s295
      %s298 = sphi 0, %s297
      %s312 = sphi 0, %s298
      %s316 = sphi 0, %s316
      %s318 = sphi 0, %s316
      %s319 = sphi 0, %s318
      %s333 = sphi 0, %s319
      %s337 = sphi 0, %s337
      %s339 = sphi 0, %s337
      %s340 = sphi 0, %s339
      %s354 = sphi 0, %s340
      %s360 = sphi 0, %s362
      %s363 = sphi 0, %s360
      %s364 = sphi 0, %s363
      %s380 = sphi 0, %s364
    $region4: #{tpu_custom_call.1} parent=1 // loop_header_branch
      %28 = sbr.rel (%p26) target = $region8
    $region5: #{tpu_custom_call.1} parent=1 // loop_body
      %s30 = ssub.s32 %s25, 1
      %s31 = ssub.s32 %s25, 2
      %s32 = sadd.s32 %s25, 1
      %s33 = ssub.s32 %s25, %s32
      %p34 = scmp.eq.s32.totalorder %s33, 0
      %s36 = sadd.s32 %s35, 1
      %s37 = scalar_select %p34, %s35, %s36
      %p40 = pneg %p34
      %p41 = scmp.eq.s32.totalorder %s25, 1
      %p42 = por %p40, %p41
      %p43 = scmp.ne.s32.totalorder %s35, %s38
      %p44 = scmp.eq.s32.totalorder %s25, 0
      %p45 = por %p43, %p44
      %p46 = scmp.ne.s32.totalorder %s35, %s38
      %p47 = scmp.eq.s32.totalorder %s30, 1
      %p48 = por %p46, %p47
      %p49 = scmp.ne.s32.totalorder %s38, %s39
      %p50 = scmp.eq.s32.totalorder %s30, 0
      %p51 = por %p49, %p50
      %p52 = scmp.ne.s32.totalorder %s38, %s39
      %p53 = scmp.eq.s32.totalorder %s31, 1
      %p54 = por %p52, %p53
      %p56 = scmp.ne.s32.totalorder %s39, %s55
      %p57 = scmp.eq.s32.totalorder %s31, 0
      %p58 = por %p56, %p57
      %s59 = ssub.s32 %s25, %s32
      %p60 = scmp.eq.s32.totalorder %s59, 0
      %s62 = sadd.s32 %s61, 1
      %s63 = scalar_select %p60, %s61, %s62
      %p66 = pneg %p60
      %p67 = scmp.eq.s32.totalorder %s25, 1
      %p68 = por %p66, %p67
      %p69 = scmp.ne.s32.totalorder %s61, %s64
      %p70 = scmp.eq.s32.totalorder %s25, 0
      %p71 = por %p69, %p70
      %p72 = scmp.ne.s32.totalorder %s61, %s64
      %p73 = scmp.eq.s32.totalorder %s30, 1
      %p74 = por %p72, %p73
      %p75 = scmp.ne.s32.totalorder %s64, %s65
      %p76 = scmp.eq.s32.totalorder %s30, 0
      %p77 = por %p75, %p76
      %p78 = scmp.ne.s32.totalorder %s64, %s65
      %p79 = scmp.eq.s32.totalorder %s31, 1
      %p80 = por %p78, %p79
      %p82 = scmp.ne.s32.totalorder %s65, %s81
      %p83 = scmp.eq.s32.totalorder %s31, 0
      %p84 = por %p82, %p83
      %s86 = sadd.s32 %s85, 1
      %p89 = scmp.eq.s32.totalorder %s25, 1
      %p90 = scmp.ne.s32.totalorder %s85, %s87
      %p91 = scmp.eq.s32.totalorder %s25, 0
      %p92 = por %p90, %p91
      %p93 = scmp.ne.s32.totalorder %s85, %s87
      %p94 = scmp.eq.s32.totalorder %s30, 1
      %p95 = por %p93, %p94
      %p96 = scmp.ne.s32.totalorder %s87, %s88
      %p97 = scmp.eq.s32.totalorder %s30, 0
      %p98 = por %p96, %p97
      %p99 = scmp.ne.s32.totalorder %s87, %s88
      %p100 = scmp.eq.s32.totalorder %s31, 1
      %p101 = por %p99, %p100
      %p103 = scmp.ne.s32.totalorder %s88, %s102
      %p104 = scmp.eq.s32.totalorder %s31, 0
      %p105 = por %p103, %p104
      %s107 = sadd.s32 %s106, 1
      %p110 = scmp.eq.s32.totalorder %s25, 1
      %p111 = scmp.ne.s32.totalorder %s106, %s108
      %p112 = scmp.eq.s32.totalorder %s25, 0
      %p113 = por %p111, %p112
      %p114 = scmp.ne.s32.totalorder %s106, %s108
      %p115 = scmp.eq.s32.totalorder %s30, 1
      %p116 = por %p114, %p115
      %p117 = scmp.ne.s32.totalorder %s108, %s109
      %p118 = scmp.eq.s32.totalorder %s30, 0
      %p119 = por %p117, %p118
      %p120 = scmp.ne.s32.totalorder %s108, %s109
      %p121 = scmp.eq.s32.totalorder %s31, 1
      %p122 = por %p120, %p121
      %p124 = scmp.ne.s32.totalorder %s109, %s123
      %p125 = scmp.eq.s32.totalorder %s31, 0
      %p126 = por %p124, %p125
      %s128 = sadd.s32 %s127, 1
      %p131 = scmp.eq.s32.totalorder %s25, 1
      %p132 = scmp.ne.s32.totalorder %s127, %s129
      %p133 = scmp.eq.s32.totalorder %s25, 0
      %p134 = por %p132, %p133
      %p135 = scmp.ne.s32.totalorder %s127, %s129
      %p136 = scmp.eq.s32.totalorder %s30, 1
      %p137 = por %p135, %p136
      %p138 = scmp.ne.s32.totalorder %s129, %s130
      %p139 = scmp.eq.s32.totalorder %s30, 0
      %p140 = por %p138, %p139
      %p141 = scmp.ne.s32.totalorder %s129, %s130
      %p142 = scmp.eq.s32.totalorder %s31, 1
      %p143 = por %p141, %p142
      %p145 = scmp.ne.s32.totalorder %s130, %s144
      %p146 = scmp.eq.s32.totalorder %s31, 0
      %p147 = por %p145, %p146
      %s149 = sadd.s32 %s148, 1
      %p152 = scmp.eq.s32.totalorder %s25, 1
      %p153 = scmp.ne.s32.totalorder %s148, %s150
      %p154 = scmp.eq.s32.totalorder %s25, 0
      %p155 = por %p153, %p154
      %p156 = scmp.ne.s32.totalorder %s148, %s150
      %p157 = scmp.eq.s32.totalorder %s30, 1
      %p158 = por %p156, %p157
      %p159 = scmp.ne.s32.totalorder %s150, %s151
      %p160 = scmp.eq.s32.totalorder %s30, 0
      %p161 = por %p159, %p160
      %p162 = scmp.ne.s32.totalorder %s150, %s151
      %p163 = scmp.eq.s32.totalorder %s31, 1
      %p164 = por %p162, %p163
      %p166 = scmp.ne.s32.totalorder %s151, %s165
      %p167 = scmp.eq.s32.totalorder %s31, 0
      %p168 = por %p166, %p167
      %s170 = sadd.s32 %s169, 1
      %p173 = scmp.eq.s32.totalorder %s25, 1
      %p174 = scmp.ne.s32.totalorder %s169, %s171
      %p175 = scmp.eq.s32.totalorder %s25, 0
      %p176 = por %p174, %p175
      %p177 = scmp.ne.s32.totalorder %s169, %s171
      %p178 = scmp.eq.s32.totalorder %s30, 1
      %p179 = por %p177, %p178
      %p180 = scmp.ne.s32.totalorder %s171, %s172
      %p181 = scmp.eq.s32.totalorder %s30, 0
      %p182 = por %p180, %p181
      %p183 = scmp.ne.s32.totalorder %s171, %s172
      %p184 = scmp.eq.s32.totalorder %s31, 1
      %p185 = por %p183, %p184
      %p187 = scmp.ne.s32.totalorder %s172, %s186
      %p188 = scmp.eq.s32.totalorder %s31, 0
      %p189 = por %p187, %p188
      %s191 = sadd.s32 %s190, 1
      %p194 = scmp.eq.s32.totalorder %s25, 1
      %p195 = scmp.ne.s32.totalorder %s190, %s192
      %p196 = scmp.eq.s32.totalorder %s25, 0
      %p197 = por %p195, %p196
      %p198 = scmp.ne.s32.totalorder %s190, %s192
      %p199 = scmp.eq.s32.totalorder %s30, 1
      %p200 = por %p198, %p199
      %p201 = scmp.ne.s32.totalorder %s192, %s193
      %p202 = scmp.eq.s32.totalorder %s30, 0
      %p203 = por %p201, %p202
      %p204 = scmp.ne.s32.totalorder %s192, %s193
      %p205 = scmp.eq.s32.totalorder %s31, 1
      %p206 = por %p204, %p205
      %p208 = scmp.ne.s32.totalorder %s193, %s207
      %p209 = scmp.eq.s32.totalorder %s31, 0
      %p210 = por %p208, %p209
      %s212 = sadd.s32 %s211, 1
      %p215 = scmp.eq.s32.totalorder %s25, 1
      %p216 = scmp.ne.s32.totalorder %s211, %s213
      %p217 = scmp.eq.s32.totalorder %s25, 0
      %p218 = por %p216, %p217
      %p219 = scmp.ne.s32.totalorder %s211, %s213
      %p220 = scmp.eq.s32.totalorder %s30, 1
      %p221 = por %p219, %p220
      %p222 = scmp.ne.s32.totalorder %s213, %s214
      %p223 = scmp.eq.s32.totalorder %s30, 0
      %p224 = por %p222, %p223
      %p225 = scmp.ne.s32.totalorder %s213, %s214
      %p226 = scmp.eq.s32.totalorder %s31, 1
      %p227 = por %p225, %p226
      %p229 = scmp.ne.s32.totalorder %s214, %s228
      %p230 = scmp.eq.s32.totalorder %s31, 0
      %p231 = por %p229, %p230
      %s233 = sadd.s32 %s232, 1
      %p236 = scmp.eq.s32.totalorder %s25, 1
      %p237 = scmp.ne.s32.totalorder %s232, %s234
      %p238 = scmp.eq.s32.totalorder %s25, 0
      %p239 = por %p237, %p238
      %p240 = scmp.ne.s32.totalorder %s232, %s234
      %p241 = scmp.eq.s32.totalorder %s30, 1
      %p242 = por %p240, %p241
      %p243 = scmp.ne.s32.totalorder %s234, %s235
      %p244 = scmp.eq.s32.totalorder %s30, 0
      %p245 = por %p243, %p244
      %p246 = scmp.ne.s32.totalorder %s234, %s235
      %p247 = scmp.eq.s32.totalorder %s31, 1
      %p248 = por %p246, %p247
      %p250 = scmp.ne.s32.totalorder %s235, %s249
      %p251 = scmp.eq.s32.totalorder %s31, 0
      %p252 = por %p250, %p251
      %s254 = sadd.s32 %s253, 1
      %p257 = scmp.eq.s32.totalorder %s25, 1
      %p258 = scmp.ne.s32.totalorder %s253, %s255
      %p259 = scmp.eq.s32.totalorder %s25, 0
      %p260 = por %p258, %p259
      %p261 = scmp.ne.s32.totalorder %s253, %s255
      %p262 = scmp.eq.s32.totalorder %s30, 1
      %p263 = por %p261, %p262
      %p264 = scmp.ne.s32.totalorder %s255, %s256
      %p265 = scmp.eq.s32.totalorder %s30, 0
      %p266 = por %p264, %p265
      %p267 = scmp.ne.s32.totalorder %s255, %s256
      %p268 = scmp.eq.s32.totalorder %s31, 1
      %p269 = por %p267, %p268
      %p271 = scmp.ne.s32.totalorder %s256, %s270
      %p272 = scmp.eq.s32.totalorder %s31, 0
      %p273 = por %p271, %p272
      %s275 = sadd.s32 %s274, 1
      %p278 = scmp.eq.s32.totalorder %s25, 1
      %p279 = scmp.ne.s32.totalorder %s274, %s276
      %p280 = scmp.eq.s32.totalorder %s25, 0
      %p281 = por %p279, %p280
      %p282 = scmp.ne.s32.totalorder %s274, %s276
      %p283 = scmp.eq.s32.totalorder %s30, 1
      %p284 = por %p282, %p283
      %p285 = scmp.ne.s32.totalorder %s276, %s277
      %p286 = scmp.eq.s32.totalorder %s30, 0
      %p287 = por %p285, %p286
      %p288 = scmp.ne.s32.totalorder %s276, %s277
      %p289 = scmp.eq.s32.totalorder %s31, 1
      %p290 = por %p288, %p289
      %p292 = scmp.ne.s32.totalorder %s277, %s291
      %p293 = scmp.eq.s32.totalorder %s31, 0
      %p294 = por %p292, %p293
      %s296 = sadd.s32 %s295, 1
      %p299 = scmp.eq.s32.totalorder %s25, 1
      %p300 = scmp.ne.s32.totalorder %s295, %s297
      %p301 = scmp.eq.s32.totalorder %s25, 0
      %p302 = por %p300, %p301
      %p303 = scmp.ne.s32.totalorder %s295, %s297
      %p304 = scmp.eq.s32.totalorder %s30, 1
      %p305 = por %p303, %p304
      %p306 = scmp.ne.s32.totalorder %s297, %s298
      %p307 = scmp.eq.s32.totalorder %s30, 0
      %p308 = por %p306, %p307
      %p309 = scmp.ne.s32.totalorder %s297, %s298
      %p310 = scmp.eq.s32.totalorder %s31, 1
      %p311 = por %p309, %p310
      %p313 = scmp.ne.s32.totalorder %s298, %s312
      %p314 = scmp.eq.s32.totalorder %s31, 0
      %p315 = por %p313, %p314
      %s317 = sadd.s32 %s316, 1
      %p320 = scmp.eq.s32.totalorder %s25, 1
      %p321 = scmp.ne.s32.totalorder %s316, %s318
      %p322 = scmp.eq.s32.totalorder %s25, 0
      %p323 = por %p321, %p322
      %p324 = scmp.ne.s32.totalorder %s316, %s318
      %p325 = scmp.eq.s32.totalorder %s30, 1
      %p326 = por %p324, %p325
      %p327 = scmp.ne.s32.totalorder %s318, %s319
      %p328 = scmp.eq.s32.totalorder %s30, 0
      %p329 = por %p327, %p328
      %p330 = scmp.ne.s32.totalorder %s318, %s319
      %p331 = scmp.eq.s32.totalorder %s31, 1
      %p332 = por %p330, %p331
      %p334 = scmp.ne.s32.totalorder %s319, %s333
      %p335 = scmp.eq.s32.totalorder %s31, 0
      %p336 = por %p334, %p335
      %s338 = sadd.s32 %s337, 1
      %p341 = scmp.eq.s32.totalorder %s25, 1
      %p342 = scmp.ne.s32.totalorder %s337, %s339
      %p343 = scmp.eq.s32.totalorder %s25, 0
      %p344 = por %p342, %p343
      %p345 = scmp.ne.s32.totalorder %s337, %s339
      %p346 = scmp.eq.s32.totalorder %s30, 1
      %p347 = por %p345, %p346
      %p348 = scmp.ne.s32.totalorder %s339, %s340
      %p349 = scmp.eq.s32.totalorder %s30, 0
      %p350 = por %p348, %p349
      %p351 = scmp.ne.s32.totalorder %s339, %s340
      %p352 = scmp.eq.s32.totalorder %s31, 1
      %p353 = por %p351, %p352
      %p355 = scmp.ne.s32.totalorder %s340, %s354
      %p356 = scmp.eq.s32.totalorder %s31, 0
      %p357 = por %p355, %p356
      %s358 = ssub.s32 %s25, %s32
      %p359 = scmp.eq.s32.totalorder %s358, 0
      %s361 = sadd.s32 %s360, 1
      %s362 = scalar_select %p359, %s360, %s361
      %p365 = pneg %p359
      %p366 = scmp.eq.s32.totalorder %s25, 1
      %p367 = por %p365, %p366
      %p368 = scmp.ne.s32.totalorder %s360, %s363
      %p369 = scmp.eq.s32.totalorder %s25, 0
      %p370 = por %p368, %p369
      %p371 = scmp.ne.s32.totalorder %s360, %s363
      %p372 = scmp.eq.s32.totalorder %s30, 1
      %p373 = por %p371, %p372
      %p374 = scmp.ne.s32.totalorder %s363, %s364
      %p375 = scmp.eq.s32.totalorder %s30, 0
      %p376 = por %p374, %p375
      %p377 = scmp.ne.s32.totalorder %s363, %s364
      %p378 = scmp.eq.s32.totalorder %s31, 1
      %p379 = por %p377, %p378
      %p381 = scmp.ne.s32.totalorder %s364, %s380
      %p382 = scmp.eq.s32.totalorder %s31, 0
      %p383 = por %p381, %p382
      %p384 = scmp.le.s32.totalorder 1, %s25
      %p385 = scmp.lt.s32.totalorder %s25, 3
      %p386 = pnand %p384, %p385
      %p387 = pneg %p386
      // Predicated region
      $region9: #{tpu_custom_call.1} parent=5 // pred_check
        _
      $region10: #{tpu_custom_call.1} parent=5 // pred_check_branch
        %389 = sbr.rel (%p386) target = $region12
      $region11: #{tpu_custom_call.1} parent=5 // pred_region
        %s390 = ssub.s32 %s25, 1
        // Predicated region
        $region13: #{tpu_custom_call.1} parent=11 // pred_check
          %p391 = pneg %p98
        $region14: #{tpu_custom_call.1} parent=11 // pred_check_branch
          %393 = sbr.rel (%p391) target = $region16
        $region15: #{tpu_custom_call.1} parent=11 // pred_region
          _
        $region16: #{tpu_custom_call.1} parent=11 // pred_fallthru
          _
        // Predicated region
        $region17: #{tpu_custom_call.1} parent=11 // pred_check
          %p394 = pneg %p119
        $region18: #{tpu_custom_call.1} parent=11 // pred_check_branch
          %396 = sbr.rel (%p394) target = $region20
        $region19: #{tpu_custom_call.1} parent=11 // pred_region
          _
        $region20: #{tpu_custom_call.1} parent=11 // pred_fallthru
          _
        // Predicated region
        $region21: #{tpu_custom_call.1} parent=11 // pred_check
          %p397 = pneg %p140
        $region22: #{tpu_custom_call.1} parent=11 // pred_check_branch
          %399 = sbr.rel (%p397) target = $region24
        $region23: #{tpu_custom_call.1} parent=11 // pred_region
          %s401 = ssub.s32 6144, 6144
          %402 = vsyncadd [#allocation4], %s401
          %s403 = sshll.u32 [#allocation3], 4
          %s404 = int_to_ptr.vmem [resolvable:$true] %s403
          %409 = dma.hbm_to_vmem [thread:$0]  %s4, 6144, %s404, [#allocation4], 64, 64, 4
        $region24: #{tpu_custom_call.1} parent=11 // pred_fallthru
          _
        // Predicated region
        $region25: #{tpu_custom_call.1} parent=11 // pred_check
          %p410 = pneg %p161
        $region26: #{tpu_custom_call.1} parent=11 // pred_check_branch
          %412 = sbr.rel (%p410) target = $region28
        $region27: #{tpu_custom_call.1} parent=11 // pred_region
          _
        $region28: #{tpu_custom_call.1} parent=11 // pred_fallthru
          _
        // Predicated region
        $region29: #{tpu_custom_call.1} parent=11 // pred_check
          %p413 = pneg %p182
        $region30: #{tpu_custom_call.1} parent=11 // pred_check_branch
          %415 = sbr.rel (%p413) target = $region32
        $region31: #{tpu_custom_call.1} parent=11 // pred_region
          _
        $region32: #{tpu_custom_call.1} parent=11 // pred_fallthru
          _
        // Predicated region
        $region33: #{tpu_custom_call.1} parent=11 // pred_check
          %p416 = pneg %p203
        $region34: #{tpu_custom_call.1} parent=11 // pred_check_branch
          %418 = sbr.rel (%p416) target = $region36
        $region35: #{tpu_custom_call.1} parent=11 // pred_region
          _
        $region36: #{tpu_custom_call.1} parent=11 // pred_fallthru
          _
        // Predicated region
        $region37: #{tpu_custom_call.1} parent=11 // pred_check
          %p419 = pneg %p224
        $region38: #{tpu_custom_call.1} parent=11 // pred_check_branch
          %421 = sbr.rel (%p419) target = $region40
        $region39: #{tpu_custom_call.1} parent=11 // pred_region
          _
        $region40: #{tpu_custom_call.1} parent=11 // pred_fallthru
          _
        // Predicated region
        $region41: #{tpu_custom_call.1} parent=11 // pred_check
          %p422 = pneg %p245
        $region42: #{tpu_custom_call.1} parent=11 // pred_check_branch
          %424 = sbr.rel (%p422) target = $region44
        $region43: #{tpu_custom_call.1} parent=11 // pred_region
          _
        $region44: #{tpu_custom_call.1} parent=11 // pred_fallthru
          _
        // Predicated region
        $region45: #{tpu_custom_call.1} parent=11 // pred_check
          %p425 = pneg %p266
        $region46: #{tpu_custom_call.1} parent=11 // pred_check_branch
          %427 = sbr.rel (%p425) target = $region48
        $region47: #{tpu_custom_call.1} parent=11 // pred_region
          _
        $region48: #{tpu_custom_call.1} parent=11 // pred_fallthru
          _
        // Predicated region
        $region49: #{tpu_custom_call.1} parent=11 // pred_check
          %p428 = pneg %p287
        $region50: #{tpu_custom_call.1} parent=11 // pred_check_branch
          %430 = sbr.rel (%p428) target = $region52
        $region51: #{tpu_custom_call.1} parent=11 // pred_region
          _
        $region52: #{tpu_custom_call.1} parent=11 // pred_fallthru
          _
        // Predicated region
        $region53: #{tpu_custom_call.1} parent=11 // pred_check
          %p431 = pneg %p308
        $region54: #{tpu_custom_call.1} parent=11 // pred_check_branch
          %433 = sbr.rel (%p431) target = $region56
        $region55: #{tpu_custom_call.1} parent=11 // pred_region
          _
        $region56: #{tpu_custom_call.1} parent=11 // pred_fallthru
          _
        // Predicated region
        $region57: #{tpu_custom_call.1} parent=11 // pred_check
          %p434 = pneg %p329
        $region58: #{tpu_custom_call.1} parent=11 // pred_check_branch
          %436 = sbr.rel (%p434) target = $region60
        $region59: #{tpu_custom_call.1} parent=11 // pred_region
          _
        $region60: #{tpu_custom_call.1} parent=11 // pred_fallthru
          _
        // Predicated region
        $region61: #{tpu_custom_call.1} parent=11 // pred_check
          %p437 = pneg %p350
        $region62: #{tpu_custom_call.1} parent=11 // pred_check_branch
          %439 = sbr.rel (%p437) target = $region64
        $region63: #{tpu_custom_call.1} parent=11 // pred_region
          _
        $region64: #{tpu_custom_call.1} parent=11 // pred_fallthru
          _
      $region12: #{tpu_custom_call.1} parent=5 // pred_fallthru
        _
      %p440 = scmp.lt.s32.totalorder %s25, 2
      // Predicated region
      $region65: #{tpu_custom_call.1} parent=5 // pred_check
        %p441 = pneg %p440
      $region66: #{tpu_custom_call.1} parent=5 // pred_check_branch
        %443 = sbr.rel (%p441) target = $region68
      $region67: #{tpu_custom_call.1} parent=5 // pred_region
        // Predicated region
        $region69: #{tpu_custom_call.1} parent=67 // pred_check
          %p444 = pneg %p45
        $region70: #{tpu_custom_call.1} parent=67 // pred_check_branch
          %446 = sbr.rel (%p444) target = $region72
        $region71: #{tpu_custom_call.1} parent=67 // pred_region
          %p447 = scmp.lt.s32.totalorder %s25, 1
          %s448 = scalar_select %p447, %s25, 1
          %s449 = smul.addr %s448, 8
          %s450 = smul.addr %s449, 8
          %s451 = scalar_lea.vmem %s0, %s450
        $region72: #{tpu_custom_call.1} parent=67 // pred_fallthru
          _
        // Predicated region
        $region73: #{tpu_custom_call.1} parent=67 // pred_check
          %p452 = pneg %p71
        $region74: #{tpu_custom_call.1} parent=67 // pred_check_branch
          %454 = sbr.rel (%p452) target = $region76
        $region75: #{tpu_custom_call.1} parent=67 // pred_region
          %p455 = scmp.lt.s32.totalorder %s25, 1
          %s456 = scalar_select %p455, %s25, 1
          %s457 = smul.addr %s456, 8
          %s458 = smul.addr %s457, 8
          %s459 = scalar_lea.vmem %s1, %s458
        $region76: #{tpu_custom_call.1} parent=67 // pred_fallthru
          _
      $region68: #{tpu_custom_call.1} parent=5 // pred_fallthru
        _
      %p460 = scmp.le.s32.totalorder 1, %s25
      %p461 = scmp.lt.s32.totalorder %s25, 3
      %p462 = pnand %p460, %p461
      %p463 = pneg %p462
      // Predicated region
      $region77: #{tpu_custom_call.1} parent=5 // pred_check
        _
      $region78: #{tpu_custom_call.1} parent=5 // pred_check_branch
        %465 = sbr.rel (%p462) target = $region80
      $region79: #{tpu_custom_call.1} parent=5 // pred_region
        %s466 = ssub.s32 %s25, 1
        // Predicated region
        $region81: #{tpu_custom_call.1} parent=79 // pred_check
          %p467 = pneg %p140
        $region82: #{tpu_custom_call.1} parent=79 // pred_check_branch
          %469 = sbr.rel (%p467) target = $region84
        $region83: #{tpu_custom_call.1} parent=79 // pred_region
          %470 = dma.done [#allocation4], 6144
        $region84: #{tpu_custom_call.1} parent=79 // pred_fallthru
          _
        %p471 = scmp.lt.s32.totalorder %s30, 1
        %s472 = scalar_select %p471, %s30, 1
        %s473 = smul.addr %s472, 8
        %s474 = smul.addr %s473, 8
        %s475 = scalar_lea.vmem %s0, %s474
        %p476 = pneg %p51
        %p477 = pneg %p48
        %p478 = scmp.lt.s32.totalorder %s30, 1
        %s479 = scalar_select %p478, %s30, 1
        %s480 = smul.addr %s479, 8
        %s481 = smul.addr %s480, 8
        %s482 = scalar_lea.vmem %s1, %s481
        %p483 = pneg %p77
        %p484 = pneg %p74
        %p485 = pneg %p98
        %p486 = pneg %p95
        %p487 = pneg %p119
        %p488 = pneg %p116
        %p489 = pneg %p140
        %p490 = pneg %p137
        %p491 = pneg %p161
        %p492 = pneg %p158
        %p493 = pneg %p182
        %p494 = pneg %p179
        %p495 = pneg %p203
        %p496 = pneg %p200
        %p497 = pneg %p224
        %p498 = pneg %p221
        %p499 = pneg %p245
        %p500 = pneg %p242
        %p501 = pneg %p266
        %p502 = pneg %p263
        %p503 = pneg %p287
        %p504 = pneg %p284
        %p505 = pneg %p308
        %p506 = pneg %p305
        %p507 = pneg %p329
        %p508 = pneg %p326
        %p509 = pneg %p350
        %p510 = pneg %p347
        %p511 = pneg %p376
        %p512 = pneg %p373
        %s513 = sand.u32 %s363, 1
        %s514 = scalar_lea.sflag [#allocation5], %s513
        %s515 = sand.u32 %s363, 1
        %s516 = smul.addr %s515, 64
        %s517 = scalar_lea.vmem [#allocation6], %s516
        %p518 = scmp.lt.s32.totalorder %s30, 1
        %s519 = scalar_select %p518, %s30, 1
        %s520 = smul.addr %s519, 8
        %s521 = smul.addr %s520, 8
        %s522 = scalar_lea.vmem %s0, %s521
        %p523 = scmp.lt.s32.totalorder %s30, 1
        %s524 = scalar_select %p523, %s30, 1
        %s525 = smul.addr %s524, 8
        %s526 = smul.addr %s525, 8
        %s527 = scalar_lea.vmem %s1, %s526
        %vm529 = vcmask 523264
        %530 = vst.msk [vmem:[#allocation2] sm:$0xff] %vm529, 0.0
        %531 = vst.msk [vmem:[#allocation2 + $0x8] sm:$0xff] %vm529, 0.0
        %v532 = vld [vmem:[%s527] sm:$0xff]
        %v533 = vld [vmem:[%s527 + $0x8] sm:$0xff]
        %v534 = vld [vmem:[%s527 + $0x10] sm:$0xff]
        %v535 = vld [vmem:[%s527 + $0x18] sm:$0xff]
        %v536 = vld [vmem:[%s527 + $0x20] sm:$0xff]
        %v537 = vld [vmem:[%s527 + $0x28] sm:$0xff]
        %v538 = vld [vmem:[%s527 + $0x30] sm:$0xff]
        %v539 = vld [vmem:[%s527 + $0x38] sm:$0xff]
        %v540 = vpack.c.bf16 %v533, %v532
        %v541 = vpack.c.bf16 %v535, %v534
        %v542 = vpack.c.bf16 %v537, %v536
        %v543 = vpack.c.bf16 %v539, %v538
        %v544 = vld [vmem:[%s9] sm:$0xf]
        %v545 = vld [vmem:[%s9 + $0x4] sm:$0xf]
        %v546 = vld [vmem:[%s9 + $0x8] sm:$0xf]
        %v547 = vld [vmem:[%s9 + $0xc] sm:$0xf]
        %v548 = vld [vmem:[%s9 + $0x10] sm:$0xf]
        %v549 = vld [vmem:[%s9 + $0x14] sm:$0xf]
        %v550 = vld [vmem:[%s9 + $0x18] sm:$0xf]
        %v551 = vld [vmem:[%s9 + $0x1c] sm:$0xf]
        %v552 = vld [vmem:[%s10] sm:$0x1]
        %v553 = vld [vmem:[%s522] sm:$0xff]
        %v554 = vld [vmem:[%s522 + $0x8] sm:$0xff]
        %v555 = vld [vmem:[%s522 + $0x10] sm:$0xff]
        %v556 = vld [vmem:[%s522 + $0x18] sm:$0xff]
        %v557 = vld [vmem:[%s522 + $0x20] sm:$0xff]
        %v558 = vld [vmem:[%s522 + $0x28] sm:$0xff]
        %v559 = vld [vmem:[%s522 + $0x30] sm:$0xff]
        %v560 = vld [vmem:[%s522 + $0x38] sm:$0xff]
        %v561 = vpack.c.bf16 %v554, %v553
        %v562 = vpack.c.bf16 %v556, %v555
        %v563 = vpack.c.bf16 %v558, %v557
        %v564 = vpack.c.bf16 %v560, %v559
        %v565 = vld [vmem:[%s2] sm:$0xf]
        %v566 = vld [vmem:[%s3] sm:$0x1]
        %v568 = vlaneseq
        %v569 = vshrl.u32 %v568, 7
        %v570 = vsub.s32 0, %v569
        %v571 = vrot.slane %v566, %v570
        %vm573 = vcmask 64512
        %v575 = vsel %vm573, %v561, 0
        %v578 = vsel %vm573, %v562, 0
        %v581 = vsel %vm573, %v563, 0
        %v584 = vsel %vm573, %v564, 0
        %vm586 = vcmask 1043456
        %v588 = vsel %vm586, %v565, 0
        %590 = vmatprep.subr.bf16.mxu0 0
        %591 = vmatpush1.bf16.msra.mxu0 %v588
        %592 = vmatprep.subr.bf16.mxu0 0
        %593 = vmatpush1.bf16.msra.mxu0 0
        %594 = vmatprep.subr.bf16.mxu0 0
        %595 = vmatpush1.bf16.msra.mxu0 0
        %596 = vmatprep.subr.bf16.mxu0 0
        %597 = vmatpush1.bf16.msra.mxu0 0
        %598 = vmatprep.subr.bf16.mxu0 0
        %599 = vmatpush1.bf16.msra.mxu0 0
        %600 = vmatprep.subr.bf16.mxu0 0
        %601 = vmatpush1.bf16.msra.mxu0 0
        %602 = vmatprep.subr.bf16.mxu0 0
        %603 = vmatpush1.bf16.msra.mxu0 0
        %604 = vmatprep.subr.bf16.mxu0 0
        %605 = vmatpush1.bf16.msra.mxu0 0
        %606 = vmatprep.subr.bf16.mxu0 0
        %607 = vmatpush1.bf16.msra.mxu0 0
        %608 = vmatprep.subr.bf16.mxu0 0
        %609 = vmatpush1.bf16.msra.mxu0 0
        %610 = vmatprep.subr.bf16.mxu0 0
        %611 = vmatpush1.bf16.msra.mxu0 0
        %612 = vmatprep.subr.bf16.mxu0 0
        %613 = vmatpush1.bf16.msra.mxu0 0
        %614 = vmatprep.subr.bf16.mxu0 0
        %615 = vmatpush1.bf16.msra.mxu0 0
        %616 = vmatprep.subr.bf16.mxu0 0
        %617 = vmatpush1.bf16.msra.mxu0 0
        %618 = vmatprep.subr.bf16.mxu0 0
        %619 = vmatpush1.bf16.msra.mxu0 0
        %620 = vmatprep.subr.bf16.mxu0 0
        %621 = vmatpush1.bf16.msra.mxu0 0
        %622 = vmatprep.mubr.bf16.mxu0 0
        %623 = vmatmul.mubr.bf16.gmra.mrb[0].mxu0 %v575
        %v624 = vpop.f32.mrb[0].mxu0
        %v625 = vadd.f32 %v571, %v624
        %v626 = vpop.f32.mrb[0].mxu0
        %v627 = vpop.f32.mrb[0].mxu0
        %v628 = vadd.f32 %v571, %v627
        %v629 = vpop.f32.mrb[0].mxu0
        %630 = vmatprep.mubr.bf16.mxu0 0
        %631 = vmatmul.mubr.bf16.gmra.mrb[0].mxu0 %v578
        %v632 = vpop.f32.mrb[0].mxu0
        %v633 = vadd.f32 %v571, %v632
        %v634 = vpop.f32.mrb[0].mxu0
        %v635 = vpop.f32.mrb[0].mxu0
        %v636 = vadd.f32 %v571, %v635
        %v637 = vpop.f32.mrb[0].mxu0
        %638 = vmatprep.mubr.bf16.mxu0 0
        %639 = vmatmul.mubr.bf16.gmra.mrb[0].mxu0 %v581
        %v640 = vpop.f32.mrb[0].mxu0
        %v641 = vadd.f32 %v571, %v640
        %v642 = vpop.f32.mrb[0].mxu0
        %v643 = vpop.f32.mrb[0].mxu0
        %v644 = vadd.f32 %v571, %v643
        %v645 = vpop.f32.mrb[0].mxu0
        %646 = vmatprep.mubr.bf16.mxu0 0
        %647 = vmatmul.mubr.bf16.gmra.mrb[0].mxu0 %v584
        %v648 = vpop.f32.mrb[0].mxu0
        %v649 = vadd.f32 %v571, %v648
        %v650 = vpop.f32.mrb[0].mxu0
        %v651 = vpop.f32.mrb[0].mxu0
        %v652 = vadd.f32 %v571, %v651
        %v653 = vpop.f32.mrb[0].mxu0
        %654 = vdwg.mxu0
        %v655 = vmax.f32 %v625, 0.0
        %v656 = vmax.f32 %v628, 0.0
        %v657 = vmax.f32 %v633, 0.0
        %v658 = vmax.f32 %v636, 0.0
        %v659 = vmax.f32 %v641, 0.0
        %v660 = vmax.f32 %v644, 0.0
        %v661 = vmax.f32 %v649, 0.0
        %v662 = vmax.f32 %v652, 0.0
        %663 = vst.msk [vmem:[#allocation2 + $0x10] sm:$0xff] %vm529, %v655
        %664 = vst.msk [vmem:[#allocation2 + $0x18] sm:$0xff] %vm529, %v656
        %665 = vst.msk [vmem:[#allocation2 + $0x20] sm:$0xff] %vm529, %v657
        %666 = vst.msk [vmem:[#allocation2 + $0x28] sm:$0xff] %vm529, %v658
        %667 = vst.msk [vmem:[#allocation2 + $0x30] sm:$0xff] %vm529, %v659
        %668 = vst.msk [vmem:[#allocation2 + $0x38] sm:$0xff] %vm529, %v660
        %669 = vst.msk [vmem:[#allocation2 + $0x40] sm:$0xff] %vm529, %v661
        %670 = vst.msk [vmem:[#allocation2 + $0x48] sm:$0xff] %vm529, %v662
        %v671 = vld [vmem:[%s6] sm:$0xf]
        %v672 = vld [vmem:[%s6 + $0x4] sm:$0xf]
        %v673 = vld [vmem:[%s5] sm:$0x1]
        %v675 = vlaneseq
        %v676 = vshrl.u32 %v675, 7
        %v677 = vsub.s32 0, %v676
        %v678 = vrot.slane %v673, %v677
        %v682 = vunpack.c.l.b16 %v671
        %v683 = vunpack.c.l.b16 %v672
        %v684 = vpack.c.b16 %v683, %v682
        %vm686 = vcmask 130048
        %v688 = vsel %vm686, %v540, 0
        %v691 = vsel %vm686, %v541, 0
        %v694 = vsel %vm686, %v542, 0
        %v697 = vsel %vm686, %v543, 0
        %699 = vmatprep.subr.bf16.mxu0 0
        %700 = vmatpush1.bf16.msra.mxu0 %v684
        %701 = vmatprep.subr.bf16.mxu0 0
        %702 = vmatpush1.bf16.msra.mxu0 0
        %703 = vmatprep.subr.bf16.mxu0 0
        %704 = vmatpush1.bf16.msra.mxu0 0
        %705 = vmatprep.subr.bf16.mxu0 0
        %706 = vmatpush1.bf16.msra.mxu0 0
        %707 = vmatprep.subr.bf16.mxu0 0
        %708 = vmatpush1.bf16.msra.mxu0 0
        %709 = vmatprep.subr.bf16.mxu0 0
        %710 = vmatpush1.bf16.msra.mxu0 0
        %711 = vmatprep.subr.bf16.mxu0 0
        %712 = vmatpush1.bf16.msra.mxu0 0
        %713 = vmatprep.subr.bf16.mxu0 0
        %714 = vmatpush1.bf16.msra.mxu0 0
        %715 = vmatprep.subr.bf16.mxu0 0
        %716 = vmatpush1.bf16.msra.mxu0 0
        %717 = vmatprep.subr.bf16.mxu0 0
        %718 = vmatpush1.bf16.msra.mxu0 0
        %719 = vmatprep.subr.bf16.mxu0 0
        %720 = vmatpush1.bf16.msra.mxu0 0
        %721 = vmatprep.subr.bf16.mxu0 0
        %722 = vmatpush1.bf16.msra.mxu0 0
        %723 = vmatprep.subr.bf16.mxu0 0
        %724 = vmatpush1.bf16.msra.mxu0 0
        %725 = vmatprep.subr.bf16.mxu0 0
        %726 = vmatpush1.bf16.msra.mxu0 0
        %727 = vmatprep.subr.bf16.mxu0 0
        %728 = vmatpush1.bf16.msra.mxu0 0
        %729 = vmatprep.subr.bf16.mxu0 0
        %730 = vmatpush1.bf16.msra.mxu0 0
        %731 = vmatprep.mubr.bf16.mxu0 0
        %732 = vmatmul.mubr.bf16.gmra.mrb[0].mxu0 %v688
        %v733 = vpop.f32.mrb[0].mxu0
        %v734 = vadd.f32 %v678, %v733
        %v735 = vpop.f32.mrb[0].mxu0
        %v736 = vpop.f32.mrb[0].mxu0
        %v737 = vadd.f32 %v678, %v736
        %v738 = vpop.f32.mrb[0].mxu0
        %739 = vmatprep.mubr.bf16.mxu0 0
        %740 = vmatmul.mubr.bf16.gmra.mrb[0].mxu0 %v691
        %v741 = vpop.f32.mrb[0].mxu0
        %v742 = vadd.f32 %v678, %v741
        %v743 = vpop.f32.mrb[0].mxu0
        %v744 = vpop.f32.mrb[0].mxu0
        %v745 = vadd.f32 %v678, %v744
        %v746 = vpop.f32.mrb[0].mxu0
        %747 = vmatprep.mubr.bf16.mxu0 0
        %748 = vmatmul.mubr.bf16.gmra.mrb[0].mxu0 %v694
        %v749 = vpop.f32.mrb[0].mxu0
        %v750 = vadd.f32 %v678, %v749
        %v751 = vpop.f32.mrb[0].mxu0
        %v752 = vpop.f32.mrb[0].mxu0
        %v753 = vadd.f32 %v678, %v752
        %v754 = vpop.f32.mrb[0].mxu0
        %755 = vmatprep.mubr.bf16.mxu0 0
        %756 = vmatmul.mubr.bf16.gmra.mrb[0].mxu0 %v697
        %v757 = vpop.f32.mrb[0].mxu0
        %v758 = vadd.f32 %v678, %v757
        %v759 = vpop.f32.mrb[0].mxu0
        %v760 = vpop.f32.mrb[0].mxu0
        %v761 = vadd.f32 %v678, %v760
        %v762 = vpop.f32.mrb[0].mxu0
        %763 = vdwg.mxu0
        %v764 = vld [vmem:[#allocation2 + $0xe] sm:$0xff]
        %v765 = vld [vmem:[#allocation2 + $0x16] sm:$0xff]
        %v766 = vld [vmem:[#allocation2 + $0x1e] sm:$0xff]
        %v767 = vld [vmem:[#allocation2 + $0x26] sm:$0xff]
        %v768 = vld [vmem:[#allocation2 + $0x2e] sm:$0xff]
        %v769 = vld [vmem:[#allocation2 + $0x36] sm:$0xff]
        %v770 = vld [vmem:[#allocation2 + $0x3e] sm:$0xff]
        %v771 = vld [vmem:[#allocation2 + $0x46] sm:$0xff]
        %v772 = vpack.c.bf16 %v765, %v764
        %v773 = vpack.c.bf16 %v767, %v766
        %v774 = vpack.c.bf16 %v769, %v768
        %v775 = vpack.c.bf16 %v771, %v770
        %v776 = vld [vmem:[#allocation3] sm:$0xf]
        %v777 = vld [vmem:[#allocation3 + $0x4] sm:$0xf]
        %v778 = vld [vmem:[#allocation3 + $0x8] sm:$0xf]
        %v779 = vld [vmem:[#allocation3 + $0xc] sm:$0xf]
        %v780 = vld [vmem:[#allocation3 + $0x10] sm:$0xf]
        %v781 = vld [vmem:[#allocation3 + $0x14] sm:$0xf]
        %v782 = vld [vmem:[#allocation3 + $0x18] sm:$0xf]
        %v783 = vld [vmem:[#allocation3 + $0x1c] sm:$0xf]
        %v792 = vunpack.c.l.b16 %v776
        %v793 = vunpack.c.l.b16 %v777
        %v794 = vunpack.c.l.b16 %v778
        %v795 = vunpack.c.l.b16 %v779
        %v796 = vunpack.c.l.b16 %v780
        %v797 = vunpack.c.l.b16 %v781
        %v798 = vunpack.c.l.b16 %v782
        %v799 = vunpack.c.l.b16 %v783
        %v800 = vpack.c.b16 %v793, %v792
        %v801 = vpack.c.b16 %v795, %v794
        %v802 = vpack.c.b16 %v797, %v796
        %v803 = vpack.c.b16 %v799, %v798
        %v809 = vsel %vm529, %v772, 0
        %v812 = vsel %vm529, %v773, 0
        %v815 = vsel %vm529, %v774, 0
        %v818 = vsel %vm529, %v775, 0
        %820 = vmatprep.subr.bf16.mxu0 0
        %821 = vmatpush1.bf16.msra.mxu0 %v800
        %822 = vmatprep.subr.bf16.mxu0 0
        %823 = vmatpush1.bf16.msra.mxu0 %v801
        %824 = vmatprep.subr.bf16.mxu0 0
        %825 = vmatpush1.bf16.msra.mxu0 %v802
        %826 = vmatprep.subr.bf16.mxu0 0
        %827 = vmatpush1.bf16.msra.mxu0 %v803
        %828 = vmatprep.subr.bf16.mxu0 0
        %829 = vmatpush1.bf16.msra.mxu0 0
        %830 = vmatprep.subr.bf16.mxu0 0
        %831 = vmatpush1.bf16.msra.mxu0 0
        %832 = vmatprep.subr.bf16.mxu0 0
        %833 = vmatpush1.bf16.msra.mxu0 0
        %834 = vmatprep.subr.bf16.mxu0 0
        %835 = vmatpush1.bf16.msra.mxu0 0
        %836 = vmatprep.subr.bf16.mxu0 0
        %837 = vmatpush1.bf16.msra.mxu0 0
        %838 = vmatprep.subr.bf16.mxu0 0
        %839 = vmatpush1.bf16.msra.mxu0 0
        %840 = vmatprep.subr.bf16.mxu0 0
        %841 = vmatpush1.bf16.msra.mxu0 0
        %842 = vmatprep.subr.bf16.mxu0 0
        %843 = vmatpush1.bf16.msra.mxu0 0
        %844 = vmatprep.subr.bf16.mxu0 0
        %845 = vmatpush1.bf16.msra.mxu0 0
        %846 = vmatprep.subr.bf16.mxu0 0
        %847 = vmatpush1.bf16.msra.mxu0 0
        %848 = vmatprep.subr.bf16.mxu0 0
        %849 = vmatpush1.bf16.msra.mxu0 0
        %850 = vmatprep.subr.bf16.mxu0 0
        %851 = vmatpush1.bf16.msra.mxu0 0
        %852 = vmatprep.mubr.bf16.mxu0 0
        %853 = vmatmul.mubr.bf16.gmra.mrb[0].mxu0 %v809
        %v854 = vpop.f32.mrb[0].mxu0
        %v855 = vadd.f32 0.0, %v854
        %v856 = vpop.f32.mrb[0].mxu0
        %v857 = vpop.f32.mrb[0].mxu0
        %v858 = vadd.f32 0.0, %v857
        %v859 = vpop.f32.mrb[0].mxu0
        %860 = vmatprep.mubr.bf16.mxu0 0
        %861 = vmatmul.mubr.bf16.gmra.mrb[0].mxu0 %v812
        %v862 = vpop.f32.mrb[0].mxu0
        %v863 = vadd.f32 0.0, %v862
        %v864 = vpop.f32.mrb[0].mxu0
        %v865 = vpop.f32.mrb[0].mxu0
        %v866 = vadd.f32 0.0, %v865
        %v867 = vpop.f32.mrb[0].mxu0
        %868 = vmatprep.mubr.bf16.mxu0 0
        %869 = vmatmul.mubr.bf16.gmra.mrb[0].mxu0 %v815
        %v870 = vpop.f32.mrb[0].mxu0
        %v871 = vadd.f32 0.0, %v870
        %v872 = vpop.f32.mrb[0].mxu0
        %v873 = vpop.f32.mrb[0].mxu0
        %v874 = vadd.f32 0.0, %v873
        %v875 = vpop.f32.mrb[0].mxu0
        %876 = vmatprep.mubr.bf16.mxu0 0
        %877 = vmatmul.mubr.bf16.gmra.mrb[0].mxu0 %v818
        %v878 = vpop.f32.mrb[0].mxu0
        %v879 = vadd.f32 0.0, %v878
        %v880 = vpop.f32.mrb[0].mxu0
        %v881 = vpop.f32.mrb[0].mxu0
        %v882 = vadd.f32 0.0, %v881
        %v883 = vpop.f32.mrb[0].mxu0
        %884 = vdwg.mxu0
        %v885 = vadd.f32 %v734, %v855
        %v886 = vadd.f32 %v737, %v858
        %v887 = vadd.f32 %v742, %v863
        %v888 = vadd.f32 %v745, %v866
        %v889 = vadd.f32 %v750, %v871
        %v890 = vadd.f32 %v753, %v874
        %v891 = vadd.f32 %v758, %v879
        %v892 = vadd.f32 %v761, %v882
        %v893 = vld [vmem:[#allocation2 + $0xf] sm:$0xff]
        %v894 = vld [vmem:[#allocation2 + $0x17] sm:$0xff]
        %v895 = vld [vmem:[#allocation2 + $0x1f] sm:$0xff]
        %v896 = vld [vmem:[#allocation2 + $0x27] sm:$0xff]
        %v897 = vld [vmem:[#allocation2 + $0x2f] sm:$0xff]
        %v898 = vld [vmem:[#allocation2 + $0x37] sm:$0xff]
        %v899 = vld [vmem:[#allocation2 + $0x3f] sm:$0xff]
        %v900 = vld [vmem:[#allocation2 + $0x47] sm:$0xff]
        %v901 = vpack.c.bf16 %v894, %v893
        %v902 = vpack.c.bf16 %v896, %v895
        %v903 = vpack.c.bf16 %v898, %v897
        %v904 = vpack.c.bf16 %v900, %v899
        %s905 = scalar_lea.vmem [#allocation3], 32
        %v906 = vld [vmem:[%s905] sm:$0xf]
        %v907 = vld [vmem:[%s905 + $0x4] sm:$0xf]
        %v908 = vld [vmem:[%s905 + $0x8] sm:$0xf]
        %v909 = vld [vmem:[%s905 + $0xc] sm:$0xf]
        %v910 = vld [vmem:[%s905 + $0x10] sm:$0xf]
        %v911 = vld [vmem:[%s905 + $0x14] sm:$0xf]
        %v912 = vld [vmem:[%s905 + $0x18] sm:$0xf]
        %v913 = vld [vmem:[%s905 + $0x1c] sm:$0xf]
        %v922 = vunpack.c.l.b16 %v906
        %v923 = vunpack.c.l.b16 %v907
        %v924 = vunpack.c.l.b16 %v908
        %v925 = vunpack.c.l.b16 %v909
        %v926 = vunpack.c.l.b16 %v910
        %v927 = vunpack.c.l.b16 %v911
        %v928 = vunpack.c.l.b16 %v912
        %v929 = vunpack.c.l.b16 %v913
        %v930 = vpack.c.b16 %v923, %v922
        %v931 = vpack.c.b16 %v925, %v924
        %v932 = vpack.c.b16 %v927, %v926
        %v933 = vpack.c.b16 %v929, %v928
        %v939 = vsel %vm529, %v901, 0
        %v942 = vsel %vm529, %v902, 0
        %v945 = vsel %vm529, %v903, 0
        %v948 = vsel %vm529, %v904, 0
        %950 = vmatprep.subr.bf16.mxu0 0
        %951 = vmatpush1.bf16.msra.mxu0 %v930
        %952 = vmatprep.subr.bf16.mxu0 0
        %953 = vmatpush1.bf16.msra.mxu0 %v931
        %954 = vmatprep.subr.bf16.mxu0 0
        %955 = vmatpush1.bf16.msra.mxu0 %v932
        %956 = vmatprep.subr.bf16.mxu0 0
        %957 = vmatpush1.bf16.msra.mxu0 %v933
        %958 = vmatprep.subr.bf16.mxu0 0
        %959 = vmatpush1.bf16.msra.mxu0 0
        %960 = vmatprep.subr.bf16.mxu0 0
        %961 = vmatpush1.bf16.msra.mxu0 0
        %962 = vmatprep.subr.bf16.mxu0 0
        %963 = vmatpush1.bf16.msra.mxu0 0
        %964 = vmatprep.subr.bf16.mxu0 0
        %965 = vmatpush1.bf16.msra.mxu0 0
        %966 = vmatprep.subr.bf16.mxu0 0
        %967 = vmatpush1.bf16.msra.mxu0 0
        %968 = vmatprep.subr.bf16.mxu0 0
        %969 = vmatpush1.bf16.msra.mxu0 0
        %970 = vmatprep.subr.bf16.mxu0 0
        %971 = vmatpush1.bf16.msra.mxu0 0
        %972 = vmatprep.subr.bf16.mxu0 0
        %973 = vmatpush1.bf16.msra.mxu0 0
        %974 = vmatprep.subr.bf16.mxu0 0
        %975 = vmatpush1.bf16.msra.mxu0 0
        %976 = vmatprep.subr.bf16.mxu0 0
        %977 = vmatpush1.bf16.msra.mxu0 0
        %978 = vmatprep.subr.bf16.mxu0 0
        %979 = vmatpush1.bf16.msra.mxu0 0
        %980 = vmatprep.subr.bf16.mxu0 0
        %981 = vmatpush1.bf16.msra.mxu0 0
        %982 = vmatprep.mubr.bf16.mxu0 0
        %983 = vmatmul.mubr.bf16.gmra.mrb[0].mxu0 %v939
        %v984 = vpop.f32.mrb[0].mxu0
        %v985 = vadd.f32 0.0, %v984
        %v986 = vpop.f32.mrb[0].mxu0
        %v987 = vpop.f32.mrb[0].mxu0
        %v988 = vadd.f32 0.0, %v987
        %v989 = vpop.f32.mrb[0].mxu0
        %990 = vmatprep.mubr.bf16.mxu0 0
        %991 = vmatmul.mubr.bf16.gmra.mrb[0].mxu0 %v942
        %v992 = vpop.f32.mrb[0].mxu0
        %v993 = vadd.f32 0.0, %v992
        %v994 = vpop.f32.mrb[0].mxu0
        %v995 = vpop.f32.mrb[0].mxu0
        %v996 = vadd.f32 0.0, %v995
        %v997 = vpop.f32.mrb[0].mxu0
        %998 = vmatprep.mubr.bf16.mxu0 0
        %999 = vmatmul.mubr.bf16.gmra.mrb[0].mxu0 %v945
        %v1000 = vpop.f32.mrb[0].mxu0
        %v1001 = vadd.f32 0.0, %v1000
        %v1002 = vpop.f32.mrb[0].mxu0
        %v1003 = vpop.f32.mrb[0].mxu0
        %v1004 = vadd.f32 0.0, %v1003
        %v1005 = vpop.f32.mrb[0].mxu0
        %1006 = vmatprep.mubr.bf16.mxu0 0
        %1007 = vmatmul.mubr.bf16.gmra.mrb[0].mxu0 %v948
        %v1008 = vpop.f32.mrb[0].mxu0
        %v1009 = vadd.f32 0.0, %v1008
        %v1010 = vpop.f32.mrb[0].mxu0
        %v1011 = vpop.f32.mrb[0].mxu0
        %v1012 = vadd.f32 0.0, %v1011
        %v1013 = vpop.f32.mrb[0].mxu0
        %1014 = vdwg.mxu0
        %v1015 = vadd.f32 %v885, %v985
        %v1016 = vadd.f32 %v886, %v988
        %v1017 = vadd.f32 %v887, %v993
        %v1018 = vadd.f32 %v888, %v996
        %v1019 = vadd.f32 %v889, %v1001
        %v1020 = vadd.f32 %v890, %v1004
        %v1021 = vadd.f32 %v891, %v1009
        %v1022 = vadd.f32 %v892, %v1012
        %v1023 = vpack.c.bf16 %v656, %v655
        %v1024 = vpack.c.bf16 %v658, %v657
        %v1025 = vpack.c.bf16 %v660, %v659
        %v1026 = vpack.c.bf16 %v662, %v661
        %s1027 = scalar_lea.vmem [#allocation3], 64
        %v1028 = vld [vmem:[%s1027] sm:$0xf]
        %v1029 = vld [vmem:[%s1027 + $0x4] sm:$0xf]
        %v1030 = vld [vmem:[%s1027 + $0x8] sm:$0xf]
        %v1031 = vld [vmem:[%s1027 + $0xc] sm:$0xf]
        %v1032 = vld [vmem:[%s1027 + $0x10] sm:$0xf]
        %v1033 = vld [vmem:[%s1027 + $0x14] sm:$0xf]
        %v1034 = vld [vmem:[%s1027 + $0x18] sm:$0xf]
        %v1035 = vld [vmem:[%s1027 + $0x1c] sm:$0xf]
        %v1044 = vunpack.c.l.b16 %v1028
        %v1045 = vunpack.c.l.b16 %v1029
        %v1046 = vunpack.c.l.b16 %v1030
        %v1047 = vunpack.c.l.b16 %v1031
        %v1048 = vunpack.c.l.b16 %v1032
        %v1049 = vunpack.c.l.b16 %v1033
        %v1050 = vunpack.c.l.b16 %v1034
        %v1051 = vunpack.c.l.b16 %v1035
        %v1052 = vpack.c.b16 %v1045, %v1044
        %v1053 = vpack.c.b16 %v1047, %v1046
        %v1054 = vpack.c.b16 %v1049, %v1048
        %v1055 = vpack.c.b16 %v1051, %v1050
        %v1061 = vsel %vm529, %v1023, 0
        %v1064 = vsel %vm529, %v1024, 0
        %v1067 = vsel %vm529, %v1025, 0
        %v1070 = vsel %vm529, %v1026, 0
        %1072 = vmatprep.subr.bf16.mxu0 0
        %1073 = vmatpush1.bf16.msra.mxu0 %v1052
        %1074 = vmatprep.subr.bf16.mxu0 0
        %1075 = vmatpush1.bf16.msra.mxu0 %v1053
        %1076 = vmatprep.subr.bf16.mxu0 0
        %1077 = vmatpush1.bf16.msra.mxu0 %v1054
        %1078 = vmatprep.subr.bf16.mxu0 0
        %1079 = vmatpush1.bf16.msra.mxu0 %v1055
        %1080 = vmatprep.subr.bf16.mxu0 0
        %1081 = vmatpush1.bf16.msra.mxu0 0
        %1082 = vmatprep.subr.bf16.mxu0 0
        %1083 = vmatpush1.bf16.msra.mxu0 0
        %1084 = vmatprep.subr.bf16.mxu0 0
        %1085 = vmatpush1.bf16.msra.mxu0 0
        %1086 = vmatprep.subr.bf16.mxu0 0
        %1087 = vmatpush1.bf16.msra.mxu0 0
        %1088 = vmatprep.subr.bf16.mxu0 0
        %1089 = vmatpush1.bf16.msra.mxu0 0
        %1090 = vmatprep.subr.bf16.mxu0 0
        %1091 = vmatpush1.bf16.msra.mxu0 0
        %1092 = vmatprep.subr.bf16.mxu0 0
        %1093 = vmatpush1.bf16.msra.mxu0 0
        %1094 = vmatprep.subr.bf16.mxu0 0
        %1095 = vmatpush1.bf16.msra.mxu0 0
        %1096 = vmatprep.subr.bf16.mxu0 0
        %1097 = vmatpush1.bf16.msra.mxu0 0
        %1098 = vmatprep.subr.bf16.mxu0 0
        %1099 = vmatpush1.bf16.msra.mxu0 0
        %1100 = vmatprep.subr.bf16.mxu0 0
        %1101 = vmatpush1.bf16.msra.mxu0 0
        %1102 = vmatprep.subr.bf16.mxu0 0
        %1103 = vmatpush1.bf16.msra.mxu0 0
        %1104 = vmatprep.mubr.bf16.mxu0 0
        %1105 = vmatmul.mubr.bf16.gmra.mrb[0].mxu0 %v1061
        %v1106 = vpop.f32.mrb[0].mxu0
        %v1107 = vadd.f32 0.0, %v1106
        %v1108 = vpop.f32.mrb[0].mxu0
        %v1109 = vpop.f32.mrb[0].mxu0
        %v1110 = vadd.f32 0.0, %v1109
        %v1111 = vpop.f32.mrb[0].mxu0
        %1112 = vmatprep.mubr.bf16.mxu0 0
        %1113 = vmatmul.mubr.bf16.gmra.mrb[0].mxu0 %v1064
        %v1114 = vpop.f32.mrb[0].mxu0
        %v1115 = vadd.f32 0.0, %v1114
        %v1116 = vpop.f32.mrb[0].mxu0
        %v1117 = vpop.f32.mrb[0].mxu0
        %v1118 = vadd.f32 0.0, %v1117
        %v1119 = vpop.f32.mrb[0].mxu0
        %1120 = vmatprep.mubr.bf16.mxu0 0
        %1121 = vmatmul.mubr.bf16.gmra.mrb[0].mxu0 %v1067
        %v1122 = vpop.f32.mrb[0].mxu0
        %v1123 = vadd.f32 0.0, %v1122
        %v1124 = vpop.f32.mrb[0].mxu0
        %v1125 = vpop.f32.mrb[0].mxu0
        %v1126 = vadd.f32 0.0, %v1125
        %v1127 = vpop.f32.mrb[0].mxu0
        %1128 = vmatprep.mubr.bf16.mxu0 0
        %1129 = vmatmul.mubr.bf16.gmra.mrb[0].mxu0 %v1070
        %v1130 = vpop.f32.mrb[0].mxu0
        %v1131 = vadd.f32 0.0, %v1130
        %v1132 = vpop.f32.mrb[0].mxu0
        %v1133 = vpop.f32.mrb[0].mxu0
        %v1134 = vadd.f32 0.0, %v1133
        %v1135 = vpop.f32.mrb[0].mxu0
        %1136 = vdwg.mxu0
        %v1137 = vadd.f32 %v1015, %v1107
        %v1138 = vadd.f32 %v1016, %v1110
        %v1139 = vadd.f32 %v1017, %v1115
        %v1140 = vadd.f32 %v1018, %v1118
        %v1141 = vadd.f32 %v1019, %v1123
        %v1142 = vadd.f32 %v1020, %v1126
        %v1143 = vadd.f32 %v1021, %v1131
        %v1144 = vadd.f32 %v1022, %v1134
        %v1145 = vpack.c.bf16 %v1138, %v1137
        %v1146 = vpack.c.bf16 %v1140, %v1139
        %v1147 = vpack.c.bf16 %v1142, %v1141
        %v1148 = vpack.c.bf16 %v1144, %v1143
        %v1157 = vunpack.c.l.b16 %v544
        %v1158 = vunpack.c.l.b16 %v545
        %v1159 = vunpack.c.l.b16 %v546
        %v1160 = vunpack.c.l.b16 %v547
        %v1161 = vunpack.c.l.b16 %v548
        %v1162 = vunpack.c.l.b16 %v549
        %v1163 = vunpack.c.l.b16 %v550
        %v1164 = vunpack.c.l.b16 %v551
        %v1165 = vpack.c.b16 %v1158, %v1157
        %v1166 = vpack.c.b16 %v1160, %v1159
        %v1167 = vpack.c.b16 %v1162, %v1161
        %v1168 = vpack.c.b16 %v1164, %v1163
        %v1174 = vsel %vm529, %v1145, 0
        %v1177 = vsel %vm529, %v1146, 0
        %v1180 = vsel %vm529, %v1147, 0
        %v1183 = vsel %vm529, %v1148, 0
        %1185 = vmatprep.subr.bf16.mxu0 0
        %1186 = vmatpush1.bf16.msra.mxu0 %v1165
        %1187 = vmatprep.subr.bf16.mxu0 0
        %1188 = vmatpush1.bf16.msra.mxu0 %v1166
        %1189 = vmatprep.subr.bf16.mxu0 0
        %1190 = vmatpush1.bf16.msra.mxu0 %v1167
        %1191 = vmatprep.subr.bf16.mxu0 0
        %1192 = vmatpush1.bf16.msra.mxu0 %v1168
        %1193 = vmatprep.subr.bf16.mxu0 0
        %1194 = vmatpush1.bf16.msra.mxu0 0
        %1195 = vmatprep.subr.bf16.mxu0 0
        %1196 = vmatpush1.bf16.msra.mxu0 0
        %1197 = vmatprep.subr.bf16.mxu0 0
        %1198 = vmatpush1.bf16.msra.mxu0 0
        %1199 = vmatprep.subr.bf16.mxu0 0
        %1200 = vmatpush1.bf16.msra.mxu0 0
        %1201 = vmatprep.subr.bf16.mxu0 0
        %1202 = vmatpush1.bf16.msra.mxu0 0
        %1203 = vmatprep.subr.bf16.mxu0 0
        %1204 = vmatpush1.bf16.msra.mxu0 0
        %1205 = vmatprep.subr.bf16.mxu0 0
        %1206 = vmatpush1.bf16.msra.mxu0 0
        %1207 = vmatprep.subr.bf16.mxu0 0
        %1208 = vmatpush1.bf16.msra.mxu0 0
        %1209 = vmatprep.subr.bf16.mxu0 0
        %1210 = vmatpush1.bf16.msra.mxu0 0
        %1211 = vmatprep.subr.bf16.mxu0 0
        %1212 = vmatpush1.bf16.msra.mxu0 0
        %1213 = vmatprep.subr.bf16.mxu0 0
        %1214 = vmatpush1.bf16.msra.mxu0 0
        %1215 = vmatprep.subr.bf16.mxu0 0
        %1216 = vmatpush1.bf16.msra.mxu0 0
        %1217 = vmatprep.mubr.bf16.mxu0 0
        %1218 = vmatmul.mubr.bf16.gmra.mrb[0].mxu0 %v1174
        %v1219 = vpop.f32.mrb[0].mxu0
        %v1220 = vadd.f32 0.0, %v1219
        %v1221 = vpop.f32.mrb[0].mxu0
        %v1222 = vpop.f32.mrb[0].mxu0
        %v1223 = vadd.f32 0.0, %v1222
        %v1224 = vpop.f32.mrb[0].mxu0
        %1225 = vmatprep.mubr.bf16.mxu0 0
        %1226 = vmatmul.mubr.bf16.gmra.mrb[0].mxu0 %v1177
        %v1227 = vpop.f32.mrb[0].mxu0
        %v1228 = vadd.f32 0.0, %v1227
        %v1229 = vpop.f32.mrb[0].mxu0
        %v1230 = vpop.f32.mrb[0].mxu0
        %v1231 = vadd.f32 0.0, %v1230
        %v1232 = vpop.f32.mrb[0].mxu0
        %1233 = vmatprep.mubr.bf16.mxu0 0
        %1234 = vmatmul.mubr.bf16.gmra.mrb[0].mxu0 %v1180
        %v1235 = vpop.f32.mrb[0].mxu0
        %v1236 = vadd.f32 0.0, %v1235
        %v1237 = vpop.f32.mrb[0].mxu0
        %v1238 = vpop.f32.mrb[0].mxu0
        %v1239 = vadd.f32 0.0, %v1238
        %v1240 = vpop.f32.mrb[0].mxu0
        %1241 = vmatprep.mubr.bf16.mxu0 0
        %1242 = vmatmul.mubr.bf16.gmra.mrb[0].mxu0 %v1183
        %v1243 = vpop.f32.mrb[0].mxu0
        %v1244 = vadd.f32 0.0, %v1243
        %v1245 = vpop.f32.mrb[0].mxu0
        %v1246 = vpop.f32.mrb[0].mxu0
        %v1247 = vadd.f32 0.0, %v1246
        %v1248 = vpop.f32.mrb[0].mxu0
        %1249 = vdwg.mxu0
        %v1250 = vtanh.pop %v1137
        %v1251 = vtanh.pop %v1138
        %v1252 = vtanh.pop %v1139
        %v1253 = vtanh.pop %v1140
        %v1254 = vtanh.pop %v1141
        %v1255 = vtanh.pop %v1142
        %v1256 = vtanh.pop %v1143
        %v1257 = vtanh.pop %v1144
        %v1258 = vxor.u32 %v1220, 2147483648
        %v1259 = vxor.u32 %v1223, 2147483648
        %v1260 = vxor.u32 %v1228, 2147483648
        %v1261 = vxor.u32 %v1231, 2147483648
        %v1262 = vxor.u32 %v1236, 2147483648
        %v1263 = vxor.u32 %v1239, 2147483648
        %v1264 = vxor.u32 %v1244, 2147483648
        %v1265 = vxor.u32 %v1247, 2147483648
        %v1266 = vmul.f32 %v1258, 1.442695
        %v1267 = vpow.pop %v1266
        %v1268 = vmul.f32 %v1259, 1.442695
        %v1269 = vpow.pop %v1268
        %v1270 = vmul.f32 %v1260, 1.442695
        %v1271 = vpow.pop %v1270
        %v1272 = vmul.f32 %v1261, 1.442695
        %v1273 = vpow.pop %v1272
        %v1274 = vmul.f32 %v1262, 1.442695
        %v1275 = vpow.pop %v1274
        %v1276 = vmul.f32 %v1263, 1.442695
        %v1277 = vpow.pop %v1276
        %v1278 = vmul.f32 %v1264, 1.442695
        %v1279 = vpow.pop %v1278
        %v1280 = vmul.f32 %v1265, 1.442695
        %v1281 = vpow.pop %v1280
        %v1282 = vadd.f32 %v1267, 1.0
        %v1283 = vadd.f32 %v1269, 1.0
        %v1284 = vadd.f32 %v1271, 1.0
        %v1285 = vadd.f32 %v1273, 1.0
        %v1286 = vadd.f32 %v1275, 1.0
        %v1287 = vadd.f32 %v1277, 1.0
        %v1288 = vadd.f32 %v1279, 1.0
        %v1289 = vadd.f32 %v1281, 1.0
        %v1290 = vrcp.pop %v1282
        %v1291 = vmul.f32 1.0, %v1290
        %v1292 = vrcp.pop %v1283
        %v1293 = vmul.f32 1.0, %v1292
        %v1294 = vrcp.pop %v1284
        %v1295 = vmul.f32 1.0, %v1294
        %v1296 = vrcp.pop %v1285
        %v1297 = vmul.f32 1.0, %v1296
        %v1298 = vrcp.pop %v1286
        %v1299 = vmul.f32 1.0, %v1298
        %v1300 = vrcp.pop %v1287
        %v1301 = vmul.f32 1.0, %v1300
        %v1302 = vrcp.pop %v1288
        %v1303 = vmul.f32 1.0, %v1302
        %v1304 = vrcp.pop %v1289
        %v1305 = vmul.f32 1.0, %v1304
        %v1306 = vmul.f32 %v1250, %v1291
        %v1307 = vmul.f32 %v1251, %v1293
        %v1308 = vmul.f32 %v1252, %v1295
        %v1309 = vmul.f32 %v1253, %v1297
        %v1310 = vmul.f32 %v1254, %v1299
        %v1311 = vmul.f32 %v1255, %v1301
        %v1312 = vmul.f32 %v1256, %v1303
        %v1313 = vmul.f32 %v1257, %v1305
        %v1314 = vpack.c.bf16 %v1307, %v1306
        %v1315 = vpack.c.bf16 %v1309, %v1308
        %v1316 = vpack.c.bf16 %v1311, %v1310
        %v1317 = vpack.c.bf16 %v1313, %v1312
        %v1318 = vld [vmem:[%s7] sm:$0xf]
        %v1319 = vld [vmem:[%s7 + $0x4] sm:$0xf]
        %v1320 = vld [vmem:[%s7 + $0x8] sm:$0xf]
        %v1321 = vld [vmem:[%s7 + $0xc] sm:$0xf]
        %v1322 = vld [vmem:[%s7 + $0x10] sm:$0xf]
        %v1323 = vld [vmem:[%s7 + $0x14] sm:$0xf]
        %v1324 = vld [vmem:[%s7 + $0x18] sm:$0xf]
        %v1325 = vld [vmem:[%s7 + $0x1c] sm:$0xf]
        %v1326 = vld [vmem:[%s8] sm:$0x1]
        %v1328 = vlaneseq
        %v1329 = vshrl.u32 %v1328, 7
        %v1330 = vsub.s32 0, %v1329
        %v1331 = vrot.slane %v1326, %v1330
        %v1341 = vunpack.c.l.b16 %v1318
        %v1342 = vunpack.c.l.b16 %v1319
        %v1343 = vunpack.c.l.b16 %v1320
        %v1344 = vunpack.c.l.b16 %v1321
        %v1345 = vunpack.c.l.b16 %v1322
        %v1346 = vunpack.c.l.b16 %v1323
        %v1347 = vunpack.c.l.b16 %v1324
        %v1348 = vunpack.c.l.b16 %v1325
        %v1349 = vpack.c.b16 %v1342, %v1341
        %v1350 = vpack.c.b16 %v1344, %v1343
        %v1351 = vpack.c.b16 %v1346, %v1345
        %v1352 = vpack.c.b16 %v1348, %v1347
        %v1358 = vsel %vm529, %v1314, 0
        %v1361 = vsel %vm529, %v1315, 0
        %v1364 = vsel %vm529, %v1316, 0
        %v1367 = vsel %vm529, %v1317, 0
        %1369 = vmatprep.subr.bf16.mxu0 0
        %1370 = vmatpush1.bf16.msra.mxu0 %v1349
        %1371 = vmatprep.subr.bf16.mxu0 0
        %1372 = vmatpush1.bf16.msra.mxu0 %v1350
        %1373 = vmatprep.subr.bf16.mxu0 0
        %1374 = vmatpush1.bf16.msra.mxu0 %v1351
        %1375 = vmatprep.subr.bf16.mxu0 0
        %1376 = vmatpush1.bf16.msra.mxu0 %v1352
        %1377 = vmatprep.subr.bf16.mxu0 0
        %1378 = vmatpush1.bf16.msra.mxu0 0
        %1379 = vmatprep.subr.bf16.mxu0 0
        %1380 = vmatpush1.bf16.msra.mxu0 0
        %1381 = vmatprep.subr.bf16.mxu0 0
        %1382 = vmatpush1.bf16.msra.mxu0 0
        %1383 = vmatprep.subr.bf16.mxu0 0
        %1384 = vmatpush1.bf16.msra.mxu0 0
        %1385 = vmatprep.subr.bf16.mxu0 0
        %1386 = vmatpush1.bf16.msra.mxu0 0
        %1387 = vmatprep.subr.bf16.mxu0 0
        %1388 = vmatpush1.bf16.msra.mxu0 0
        %1389 = vmatprep.subr.bf16.mxu0 0
        %1390 = vmatpush1.bf16.msra.mxu0 0
        %1391 = vmatprep.subr.bf16.mxu0 0
        %1392 = vmatpush1.bf16.msra.mxu0 0
        %1393 = vmatprep.subr.bf16.mxu0 0
        %1394 = vmatpush1.bf16.msra.mxu0 0
        %1395 = vmatprep.subr.bf16.mxu0 0
        %1396 = vmatpush1.bf16.msra.mxu0 0
        %1397 = vmatprep.subr.bf16.mxu0 0
        %1398 = vmatpush1.bf16.msra.mxu0 0
        %1399 = vmatprep.subr.bf16.mxu0 0
        %1400 = vmatpush1.bf16.msra.mxu0 0
        %1401 = vmatprep.mubr.bf16.mxu0 0
        %1402 = vmatmul.mubr.bf16.gmra.mrb[0].mxu0 %v1358
        %v1403 = vpop.f32.mrb[0].mxu0
        %v1404 = vadd.f32 %v1331, %v1403
        %v1405 = vpop.f32.mrb[0].mxu0
        %v1406 = vpop.f32.mrb[0].mxu0
        %v1407 = vadd.f32 %v1331, %v1406
        %v1408 = vpop.f32.mrb[0].mxu0
        %1409 = vmatprep.mubr.bf16.mxu0 0
        %1410 = vmatmul.mubr.bf16.gmra.mrb[0].mxu0 %v1361
        %v1411 = vpop.f32.mrb[0].mxu0
        %v1412 = vadd.f32 %v1331, %v1411
        %v1413 = vpop.f32.mrb[0].mxu0
        %v1414 = vpop.f32.mrb[0].mxu0
        %v1415 = vadd.f32 %v1331, %v1414
        %v1416 = vpop.f32.mrb[0].mxu0
        %1417 = vmatprep.mubr.bf16.mxu0 0
        %1418 = vmatmul.mubr.bf16.gmra.mrb[0].mxu0 %v1364
        %v1419 = vpop.f32.mrb[0].mxu0
        %v1420 = vadd.f32 %v1331, %v1419
        %v1421 = vpop.f32.mrb[0].mxu0
        %v1422 = vpop.f32.mrb[0].mxu0
        %v1423 = vadd.f32 %v1331, %v1422
        %v1424 = vpop.f32.mrb[0].mxu0
        %1425 = vmatprep.mubr.bf16.mxu0 0
        %1426 = vmatmul.mubr.bf16.gmra.mrb[0].mxu0 %v1367
        %v1427 = vpop.f32.mrb[0].mxu0
        %v1428 = vadd.f32 %v1331, %v1427
        %v1429 = vpop.f32.mrb[0].mxu0
        %v1430 = vpop.f32.mrb[0].mxu0
        %v1431 = vadd.f32 %v1331, %v1430
        %v1432 = vpop.f32.mrb[0].mxu0
        %1433 = vdwg.mxu0
        %v1434 = vadd.f32 %v655, %v1404
        %v1435 = vadd.f32 %v656, %v1407
        %v1436 = vadd.f32 %v657, %v1412
        %v1437 = vadd.f32 %v658, %v1415
        %v1438 = vadd.f32 %v659, %v1420
        %v1439 = vadd.f32 %v660, %v1423
        %v1440 = vadd.f32 %v661, %v1428
        %v1441 = vadd.f32 %v662, %v1431
        %v1443 = vlaneseq
        %v1444 = vshrl.u32 %v1443, 7
        %v1445 = vsub.s32 0, %v1444
        %v1446 = vrot.slane %v552, %v1445
        %v1448 = vmul.f32 %v1434, %v1446
        %v1449 = vmul.f32 %v1435, %v1446
        %v1450 = vmul.f32 %v1436, %v1446
        %v1451 = vmul.f32 %v1437, %v1446
        %v1452 = vmul.f32 %v1438, %v1446
        %v1453 = vmul.f32 %v1439, %v1446
        %v1454 = vmul.f32 %v1440, %v1446
        %v1455 = vmul.f32 %v1441, %v1446
        %1456 = vst.msk [vmem:[#allocation2 + $0x10] sm:$0xff] %vm529, %v1448
        %1457 = vst.msk [vmem:[#allocation2 + $0x18] sm:$0xff] %vm529, %v1449
        %1458 = vst.msk [vmem:[#allocation2 + $0x20] sm:$0xff] %vm529, %v1450
        %1459 = vst.msk [vmem:[#allocation2 + $0x28] sm:$0xff] %vm529, %v1451
        %1460 = vst.msk [vmem:[#allocation2 + $0x30] sm:$0xff] %vm529, %v1452
        %1461 = vst.msk [vmem:[#allocation2 + $0x38] sm:$0xff] %vm529, %v1453
        %1462 = vst.msk [vmem:[#allocation2 + $0x40] sm:$0xff] %vm529, %v1454
        %1463 = vst.msk [vmem:[#allocation2 + $0x48] sm:$0xff] %vm529, %v1455
        %s1464 = scalar_lea.vmem %s6, 8
        %v1465 = vld [vmem:[%s1464] sm:$0xf]
        %v1466 = vld [vmem:[%s1464 + $0x4] sm:$0xf]
        %s1467 = scalar_lea.vmem %s5, 1
        %v1468 = vld [vmem:[%s1467] sm:$0x1]
        %v1470 = vlaneseq
        %v1471 = vshrl.u32 %v1470, 7
        %v1472 = vsub.s32 0, %v1471
        %v1473 = vrot.slane %v1468, %v1472
        %v1477 = vunpack.c.l.b16 %v1465
        %v1478 = vunpack.c.l.b16 %v1466
        %v1479 = vpack.c.b16 %v1478, %v1477
        %1481 = vmatprep.subr.bf16.mxu0 0
        %1482 = vmatpush1.bf16.msra.mxu0 %v1479
        %1483 = vmatprep.subr.bf16.mxu0 0
        %1484 = vmatpush1.bf16.msra.mxu0 0
        %1485 = vmatprep.subr.bf16.mxu0 0
        %1486 = vmatpush1.bf16.msra.mxu0 0
        %1487 = vmatprep.subr.bf16.mxu0 0
        %1488 = vmatpush1.bf16.msra.mxu0 0
        %1489 = vmatprep.subr.bf16.mxu0 0
        %1490 = vmatpush1.bf16.msra.mxu0 0
        %1491 = vmatprep.subr.bf16.mxu0 0
        %1492 = vmatpush1.bf16.msra.mxu0 0
        %1493 = vmatprep.subr.bf16.mxu0 0
        %1494 = vmatpush1.bf16.msra.mxu0 0
        %1495 = vmatprep.subr.bf16.mxu0 0
        %1496 = vmatpush1.bf16.msra.mxu0 0
        %1497 = vmatprep.subr.bf16.mxu0 0
        %1498 = vmatpush1.bf16.msra.mxu0 0
        %1499 = vmatprep.subr.bf16.mxu0 0
        %1500 = vmatpush1.bf16.msra.mxu0 0
        %1501 = vmatprep.subr.bf16.mxu0 0
        %1502 = vmatpush1.bf16.msra.mxu0 0
        %1503 = vmatprep.subr.bf16.mxu0 0
        %1504 = vmatpush1.bf16.msra.mxu0 0
        %1505 = vmatprep.subr.bf16.mxu0 0
        %1506 = vmatpush1.bf16.msra.mxu0 0
        %1507 = vmatprep.subr.bf16.mxu0 0
        %1508 = vmatpush1.bf16.msra.mxu0 0
        %1509 = vmatprep.subr.bf16.mxu0 0
        %1510 = vmatpush1.bf16.msra.mxu0 0
        %1511 = vmatprep.subr.bf16.mxu0 0
        %1512 = vmatpush1.bf16.msra.mxu0 0
        %1513 = vmatprep.mubr.bf16.mxu0 0
        %1514 = vmatmul.mubr.bf16.gmra.mrb[0].mxu0 %v688
        %v1515 = vpop.f32.mrb[0].mxu0
        %v1516 = vadd.f32 %v1473, %v1515
        %v1517 = vpop.f32.mrb[0].mxu0
        %v1518 = vpop.f32.mrb[0].mxu0
        %v1519 = vadd.f32 %v1473, %v1518
        %v1520 = vpop.f32.mrb[0].mxu0
        %1521 = vmatprep.mubr.bf16.mxu0 0
        %1522 = vmatmul.mubr.bf16.gmra.mrb[0].mxu0 %v691
        %v1523 = vpop.f32.mrb[0].mxu0
        %v1524 = vadd.f32 %v1473, %v1523
        %v1525 = vpop.f32.mrb[0].mxu0
        %v1526 = vpop.f32.mrb[0].mxu0
        %v1527 = vadd.f32 %v1473, %v1526
        %v1528 = vpop.f32.mrb[0].mxu0
        %1529 = vmatprep.mubr.bf16.mxu0 0
        %1530 = vmatmul.mubr.bf16.gmra.mrb[0].mxu0 %v694
        %v1531 = vpop.f32.mrb[0].mxu0
        %v1532 = vadd.f32 %v1473, %v1531
        %v1533 = vpop.f32.mrb[0].mxu0
        %v1534 = vpop.f32.mrb[0].mxu0
        %v1535 = vadd.f32 %v1473, %v1534
        %v1536 = vpop.f32.mrb[0].mxu0
        %1537 = vmatprep.mubr.bf16.mxu0 0
        %1538 = vmatmul.mubr.bf16.gmra.mrb[0].mxu0 %v697
        %v1539 = vpop.f32.mrb[0].mxu0
        %v1540 = vadd.f32 %v1473, %v1539
        %v1541 = vpop.f32.mrb[0].mxu0
        %v1542 = vpop.f32.mrb[0].mxu0
        %v1543 = vadd.f32 %v1473, %v1542
        %v1544 = vpop.f32.mrb[0].mxu0
        %1545 = vdwg.mxu0
        %v1546 = vld [vmem:[#allocation2 + $0xc] sm:$0xff]
        %v1547 = vld [vmem:[#allocation2 + $0x14] sm:$0xff]
        %v1548 = vld [vmem:[#allocation2 + $0x1c] sm:$0xff]
        %v1549 = vld [vmem:[#allocation2 + $0x24] sm:$0xff]
        %v1550 = vld [vmem:[#allocation2 + $0x2c] sm:$0xff]
        %v1551 = vld [vmem:[#allocation2 + $0x34] sm:$0xff]
        %v1552 = vld [vmem:[#allocation2 + $0x3c] sm:$0xff]
        %v1553 = vld [vmem:[#allocation2 + $0x44] sm:$0xff]
        %v1554 = vpack.c.bf16 %v1547, %v1546
        %v1555 = vpack.c.bf16 %v1549, %v1548
        %v1556 = vpack.c.bf16 %v1551, %v1550
        %v1557 = vpack.c.bf16 %v1553, %v1552
        %s1558 = scalar_lea.vmem [#allocation3], 96
        %v1559 = vld [vmem:[%s1558] sm:$0xf]
        %v1560 = vld [vmem:[%s1558 + $0x4] sm:$0xf]
        %v1561 = vld [vmem:[%s1558 + $0x8] sm:$0xf]
        %v1562 = vld [vmem:[%s1558 + $0xc] sm:$0xf]
        %v1563 = vld [vmem:[%s1558 + $0x10] sm:$0xf]
        %v1564 = vld [vmem:[%s1558 + $0x14] sm:$0xf]
        %v1565 = vld [vmem:[%s1558 + $0x18] sm:$0xf]
        %v1566 = vld [vmem:[%s1558 + $0x1c] sm:$0xf]
        %v1575 = vunpack.c.l.b16 %v1559
        %v1576 = vunpack.c.l.b16 %v1560
        %v1577 = vunpack.c.l.b16 %v1561
        %v1578 = vunpack.c.l.b16 %v1562
        %v1579 = vunpack.c.l.b16 %v1563
        %v1580 = vunpack.c.l.b16 %v1564
        %v1581 = vunpack.c.l.b16 %v1565
        %v1582 = vunpack.c.l.b16 %v1566
        %v1583 = vpack.c.b16 %v1576, %v1575
        %v1584 = vpack.c.b16 %v1578, %v1577
        %v1585 = vpack.c.b16 %v1580, %v1579
        %v1586 = vpack.c.b16 %v1582, %v1581
        %v1592 = vsel %vm529, %v1554, 0
        %v1595 = vsel %vm529, %v1555, 0
        %v1598 = vsel %vm529, %v1556, 0
        %v1601 = vsel %vm529, %v1557, 0
        %1603 = vmatprep.subr.bf16.mxu0 0
        %1604 = vmatpush1.bf16.msra.mxu0 %v1583
        %1605 = vmatprep.subr.bf16.mxu0 0
        %1606 = vmatpush1.bf16.msra.mxu0 %v1584
        %1607 = vmatprep.subr.bf16.mxu0 0
        %1608 = vmatpush1.bf16.msra.mxu0 %v1585
        %1609 = vmatprep.subr.bf16.mxu0 0
        %1610 = vmatpush1.bf16.msra.mxu0 %v1586
        %1611 = vmatprep.subr.bf16.mxu0 0
        %1612 = vmatpush1.bf16.msra.mxu0 0
        %1613 = vmatprep.subr.bf16.mxu0 0
        %1614 = vmatpush1.bf16.msra.mxu0 0
        %1615 = vmatprep.subr.bf16.mxu0 0
        %1616 = vmatpush1.bf16.msra.mxu0 0
        %1617 = vmatprep.subr.bf16.mxu0 0
        %1618 = vmatpush1.bf16.msra.mxu0 0
        %1619 = vmatprep.subr.bf16.mxu0 0
        %1620 = vmatpush1.bf16.msra.mxu0 0
        %1621 = vmatprep.subr.bf16.mxu0 0
        %1622 = vmatpush1.bf16.msra.mxu0 0
        %1623 = vmatprep.subr.bf16.mxu0 0
        %1624 = vmatpush1.bf16.msra.mxu0 0
        %1625 = vmatprep.subr.bf16.mxu0 0
        %1626 = vmatpush1.bf16.msra.mxu0 0
        %1627 = vmatprep.subr.bf16.mxu0 0
        %1628 = vmatpush1.bf16.msra.mxu0 0
        %1629 = vmatprep.subr.bf16.mxu0 0
        %1630 = vmatpush1.bf16.msra.mxu0 0
        %1631 = vmatprep.subr.bf16.mxu0 0
        %1632 = vmatpush1.bf16.msra.mxu0 0
        %1633 = vmatprep.subr.bf16.mxu0 0
        %1634 = vmatpush1.bf16.msra.mxu0 0
        %1635 = vmatprep.mubr.bf16.mxu0 0
        %1636 = vmatmul.mubr.bf16.gmra.mrb[0].mxu0 %v1592
        %v1637 = vpop.f32.mrb[0].mxu0
        %v1638 = vadd.f32 0.0, %v1637
        %v1639 = vpop.f32.mrb[0].mxu0
        %v1640 = vpop.f32.mrb[0].mxu0
        %v1641 = vadd.f32 0.0, %v1640
        %v1642 = vpop.f32.mrb[0].mxu0
        %1643 = vmatprep.mubr.bf16.mxu0 0
        %1644 = vmatmul.mubr.bf16.gmra.mrb[0].mxu0 %v1595
        %v1645 = vpop.f32.mrb[0].mxu0
        %v1646 = vadd.f32 0.0, %v1645
        %v1647 = vpop.f32.mrb[0].mxu0
        %v1648 = vpop.f32.mrb[0].mxu0
        %v1649 = vadd.f32 0.0, %v1648
        %v1650 = vpop.f32.mrb[0].mxu0
        %1651 = vmatprep.mubr.bf16.mxu0 0
        %1652 = vmatmul.mubr.bf16.gmra.mrb[0].mxu0 %v1598
        %v1653 = vpop.f32.mrb[0].mxu0
        %v1654 = vadd.f32 0.0, %v1653
        %v1655 = vpop.f32.mrb[0].mxu0
        %v1656 = vpop.f32.mrb[0].mxu0
        %v1657 = vadd.f32 0.0, %v1656
        %v1658 = vpop.f32.mrb[0].mxu0
        %1659 = vmatprep.mubr.bf16.mxu0 0
        %1660 = vmatmul.mubr.bf16.gmra.mrb[0].mxu0 %v1601
        %v1661 = vpop.f32.mrb[0].mxu0
        %v1662 = vadd.f32 0.0, %v1661
        %v1663 = vpop.f32.mrb[0].mxu0
        %v1664 = vpop.f32.mrb[0].mxu0
        %v1665 = vadd.f32 0.0, %v1664
        %v1666 = vpop.f32.mrb[0].mxu0
        %1667 = vdwg.mxu0
        %v1668 = vadd.f32 %v1516, %v1638
        %v1669 = vadd.f32 %v1519, %v1641
        %v1670 = vadd.f32 %v1524, %v1646
        %v1671 = vadd.f32 %v1527, %v1649
        %v1672 = vadd.f32 %v1532, %v1654
        %v1673 = vadd.f32 %v1535, %v1657
        %v1674 = vadd.f32 %v1540, %v1662
        %v1675 = vadd.f32 %v1543, %v1665
        %v1676 = vld [vmem:[#allocation2 + $0xe] sm:$0xff]
        %v1677 = vld [vmem:[#allocation2 + $0x16] sm:$0xff]
        %v1678 = vld [vmem:[#allocation2 + $0x1e] sm:$0xff]
        %v1679 = vld [vmem:[#allocation2 + $0x26] sm:$0xff]
        %v1680 = vld [vmem:[#allocation2 + $0x2e] sm:$0xff]
        %v1681 = vld [vmem:[#allocation2 + $0x36] sm:$0xff]
        %v1682 = vld [vmem:[#allocation2 + $0x3e] sm:$0xff]
        %v1683 = vld [vmem:[#allocation2 + $0x46] sm:$0xff]
        %v1684 = vpack.c.bf16 %v1677, %v1676
        %v1685 = vpack.c.bf16 %v1679, %v1678
        %v1686 = vpack.c.bf16 %v1681, %v1680
        %v1687 = vpack.c.bf16 %v1683, %v1682
        %s1688 = scalar_lea.vmem [#allocation3], 128
        %v1689 = vld [vmem:[%s1688] sm:$0xf]
        %v1690 = vld [vmem:[%s1688 + $0x4] sm:$0xf]
        %v1691 = vld [vmem:[%s1688 + $0x8] sm:$0xf]
        %v1692 = vld [vmem:[%s1688 + $0xc] sm:$0xf]
        %v1693 = vld [vmem:[%s1688 + $0x10] sm:$0xf]
        %v1694 = vld [vmem:[%s1688 + $0x14] sm:$0xf]
        %v1695 = vld [vmem:[%s1688 + $0x18] sm:$0xf]
        %v1696 = vld [vmem:[%s1688 + $0x1c] sm:$0xf]
        %v1705 = vunpack.c.l.b16 %v1689
        %v1706 = vunpack.c.l.b16 %v1690
        %v1707 = vunpack.c.l.b16 %v1691
        %v1708 = vunpack.c.l.b16 %v1692
        %v1709 = vunpack.c.l.b16 %v1693
        %v1710 = vunpack.c.l.b16 %v1694
        %v1711 = vunpack.c.l.b16 %v1695
        %v1712 = vunpack.c.l.b16 %v1696
        %v1713 = vpack.c.b16 %v1706, %v1705
        %v1714 = vpack.c.b16 %v1708, %v1707
        %v1715 = vpack.c.b16 %v1710, %v1709
        %v1716 = vpack.c.b16 %v1712, %v1711
        %v1722 = vsel %vm529, %v1684, 0
        %v1725 = vsel %vm529, %v1685, 0
        %v1728 = vsel %vm529, %v1686, 0
        %v1731 = vsel %vm529, %v1687, 0
        %1733 = vmatprep.subr.bf16.mxu0 0
        %1734 = vmatpush1.bf16.msra.mxu0 %v1713
        %1735 = vmatprep.subr.bf16.mxu0 0
        %1736 = vmatpush1.bf16.msra.mxu0 %v1714
        %1737 = vmatprep.subr.bf16.mxu0 0
        %1738 = vmatpush1.bf16.msra.mxu0 %v1715
        %1739 = vmatprep.subr.bf16.mxu0 0
        %1740 = vmatpush1.bf16.msra.mxu0 %v1716
        %1741 = vmatprep.subr.bf16.mxu0 0
        %1742 = vmatpush1.bf16.msra.mxu0 0
        %1743 = vmatprep.subr.bf16.mxu0 0
        %1744 = vmatpush1.bf16.msra.mxu0 0
        %1745 = vmatprep.subr.bf16.mxu0 0
        %1746 = vmatpush1.bf16.msra.mxu0 0
        %1747 = vmatprep.subr.bf16.mxu0 0
        %1748 = vmatpush1.bf16.msra.mxu0 0
        %1749 = vmatprep.subr.bf16.mxu0 0
        %1750 = vmatpush1.bf16.msra.mxu0 0
        %1751 = vmatprep.subr.bf16.mxu0 0
        %1752 = vmatpush1.bf16.msra.mxu0 0
        %1753 = vmatprep.subr.bf16.mxu0 0
        %1754 = vmatpush1.bf16.msra.mxu0 0
        %1755 = vmatprep.subr.bf16.mxu0 0
        %1756 = vmatpush1.bf16.msra.mxu0 0
        %1757 = vmatprep.subr.bf16.mxu0 0
        %1758 = vmatpush1.bf16.msra.mxu0 0
        %1759 = vmatprep.subr.bf16.mxu0 0
        %1760 = vmatpush1.bf16.msra.mxu0 0
        %1761 = vmatprep.subr.bf16.mxu0 0
        %1762 = vmatpush1.bf16.msra.mxu0 0
        %1763 = vmatprep.subr.bf16.mxu0 0
        %1764 = vmatpush1.bf16.msra.mxu0 0
        %1765 = vmatprep.mubr.bf16.mxu0 0
        %1766 = vmatmul.mubr.bf16.gmra.mrb[0].mxu0 %v1722
        %v1767 = vpop.f32.mrb[0].mxu0
        %v1768 = vadd.f32 0.0, %v1767
        %v1769 = vpop.f32.mrb[0].mxu0
        %v1770 = vpop.f32.mrb[0].mxu0
        %v1771 = vadd.f32 0.0, %v1770
        %v1772 = vpop.f32.mrb[0].mxu0
        %1773 = vmatprep.mubr.bf16.mxu0 0
        %1774 = vmatmul.mubr.bf16.gmra.mrb[0].mxu0 %v1725
        %v1775 = vpop.f32.mrb[0].mxu0
        %v1776 = vadd.f32 0.0, %v1775
        %v1777 = vpop.f32.mrb[0].mxu0
        %v1778 = vpop.f32.mrb[0].mxu0
        %v1779 = vadd.f32 0.0, %v1778
        %v1780 = vpop.f32.mrb[0].mxu0
        %1781 = vmatprep.mubr.bf16.mxu0 0
        %1782 = vmatmul.mubr.bf16.gmra.mrb[0].mxu0 %v1728
        %v1783 = vpop.f32.mrb[0].mxu0
        %v1784 = vadd.f32 0.0, %v1783
        %v1785 = vpop.f32.mrb[0].mxu0
        %v1786 = vpop.f32.mrb[0].mxu0
        %v1787 = vadd.f32 0.0, %v1786
        %v1788 = vpop.f32.mrb[0].mxu0
        %1789 = vmatprep.mubr.bf16.mxu0 0
        %1790 = vmatmul.mubr.bf16.gmra.mrb[0].mxu0 %v1731
        %v1791 = vpop.f32.mrb[0].mxu0
        %v1792 = vadd.f32 0.0, %v1791
        %v1793 = vpop.f32.mrb[0].mxu0
        %v1794 = vpop.f32.mrb[0].mxu0
        %v1795 = vadd.f32 0.0, %v1794
        %v1796 = vpop.f32.mrb[0].mxu0
        %1797 = vdwg.mxu0
        %v1798 = vadd.f32 %v1668, %v1768
        %v1799 = vadd.f32 %v1669, %v1771
        %v1800 = vadd.f32 %v1670, %v1776
        %v1801 = vadd.f32 %v1671, %v1779
        %v1802 = vadd.f32 %v1672, %v1784
        %v1803 = vadd.f32 %v1673, %v1787
        %v1804 = vadd.f32 %v1674, %v1792
        %v1805 = vadd.f32 %v1675, %v1795
        %v1806 = vpack.c.bf16 %v1449, %v1448
        %v1807 = vpack.c.bf16 %v1451, %v1450
        %v1808 = vpack.c.bf16 %v1453, %v1452
        %v1809 = vpack.c.bf16 %v1455, %v1454
        %s1810 = scalar_lea.vmem [#allocation3], 160
        %v1811 = vld [vmem:[%s1810] sm:$0xf]
        %v1812 = vld [vmem:[%s1810 + $0x4] sm:$0xf]
        %v1813 = vld [vmem:[%s1810 + $0x8] sm:$0xf]
        %v1814 = vld [vmem:[%s1810 + $0xc] sm:$0xf]
        %v1815 = vld [vmem:[%s1810 + $0x10] sm:$0xf]
        %v1816 = vld [vmem:[%s1810 + $0x14] sm:$0xf]
        %v1817 = vld [vmem:[%s1810 + $0x18] sm:$0xf]
        %v1818 = vld [vmem:[%s1810 + $0x1c] sm:$0xf]
        %v1827 = vunpack.c.l.b16 %v1811
        %v1828 = vunpack.c.l.b16 %v1812
        %v1829 = vunpack.c.l.b16 %v1813
        %v1830 = vunpack.c.l.b16 %v1814
        %v1831 = vunpack.c.l.b16 %v1815
        %v1832 = vunpack.c.l.b16 %v1816
        %v1833 = vunpack.c.l.b16 %v1817
        %v1834 = vunpack.c.l.b16 %v1818
        %v1835 = vpack.c.b16 %v1828, %v1827
        %v1836 = vpack.c.b16 %v1830, %v1829
        %v1837 = vpack.c.b16 %v1832, %v1831
        %v1838 = vpack.c.b16 %v1834, %v1833
        %v1844 = vsel %vm529, %v1806, 0
        %v1847 = vsel %vm529, %v1807, 0
        %v1850 = vsel %vm529, %v1808, 0
        %v1853 = vsel %vm529, %v1809, 0
        %1855 = vmatprep.subr.bf16.mxu0 0
        %1856 = vmatpush1.bf16.msra.mxu0 %v1835
        %1857 = vmatprep.subr.bf16.mxu0 0
        %1858 = vmatpush1.bf16.msra.mxu0 %v1836
        %1859 = vmatprep.subr.bf16.mxu0 0
        %1860 = vmatpush1.bf16.msra.mxu0 %v1837
        %1861 = vmatprep.subr.bf16.mxu0 0
        %1862 = vmatpush1.bf16.msra.mxu0 %v1838
        %1863 = vmatprep.subr.bf16.mxu0 0
        %1864 = vmatpush1.bf16.msra.mxu0 0
        %1865 = vmatprep.subr.bf16.mxu0 0
        %1866 = vmatpush1.bf16.msra.mxu0 0
        %1867 = vmatprep.subr.bf16.mxu0 0
        %1868 = vmatpush1.bf16.msra.mxu0 0
        %1869 = vmatprep.subr.bf16.mxu0 0
        %1870 = vmatpush1.bf16.msra.mxu0 0
        %1871 = vmatprep.subr.bf16.mxu0 0
        %1872 = vmatpush1.bf16.msra.mxu0 0
        %1873 = vmatprep.subr.bf16.mxu0 0
        %1874 = vmatpush1.bf16.msra.mxu0 0
        %1875 = vmatprep.subr.bf16.mxu0 0
        %1876 = vmatpush1.bf16.msra.mxu0 0
        %1877 = vmatprep.subr.bf16.mxu0 0
        %1878 = vmatpush1.bf16.msra.mxu0 0
        %1879 = vmatprep.subr.bf16.mxu0 0
        %1880 = vmatpush1.bf16.msra.mxu0 0
        %1881 = vmatprep.subr.bf16.mxu0 0
        %1882 = vmatpush1.bf16.msra.mxu0 0
        %1883 = vmatprep.subr.bf16.mxu0 0
        %1884 = vmatpush1.bf16.msra.mxu0 0
        %1885 = vmatprep.subr.bf16.mxu0 0
        %1886 = vmatpush1.bf16.msra.mxu0 0
        %1887 = vmatprep.mubr.bf16.mxu0 0
        %1888 = vmatmul.mubr.bf16.gmra.mrb[0].mxu0 %v1844
        %v1889 = vpop.f32.mrb[0].mxu0
        %v1890 = vadd.f32 0.0, %v1889
        %v1891 = vpop.f32.mrb[0].mxu0
        %v1892 = vpop.f32.mrb[0].mxu0
        %v1893 = vadd.f32 0.0, %v1892
        %v1894 = vpop.f32.mrb[0].mxu0
        %1895 = vmatprep.mubr.bf16.mxu0 0
        %1896 = vmatmul.mubr.bf16.gmra.mrb[0].mxu0 %v1847
        %v1897 = vpop.f32.mrb[0].mxu0
        %v1898 = vadd.f32 0.0, %v1897
        %v1899 = vpop.f32.mrb[0].mxu0
        %v1900 = vpop.f32.mrb[0].mxu0
        %v1901 = vadd.f32 0.0, %v1900
        %v1902 = vpop.f32.mrb[0].mxu0
        %1903 = vmatprep.mubr.bf16.mxu0 0
        %1904 = vmatmul.mubr.bf16.gmra.mrb[0].mxu0 %v1850
        %v1905 = vpop.f32.mrb[0].mxu0
        %v1906 = vadd.f32 0.0, %v1905
        %v1907 = vpop.f32.mrb[0].mxu0
        %v1908 = vpop.f32.mrb[0].mxu0
        %v1909 = vadd.f32 0.0, %v1908
        %v1910 = vpop.f32.mrb[0].mxu0
        %1911 = vmatprep.mubr.bf16.mxu0 0
        %1912 = vmatmul.mubr.bf16.gmra.mrb[0].mxu0 %v1853
        %v1913 = vpop.f32.mrb[0].mxu0
        %v1914 = vadd.f32 0.0, %v1913
        %v1915 = vpop.f32.mrb[0].mxu0
        %v1916 = vpop.f32.mrb[0].mxu0
        %v1917 = vadd.f32 0.0, %v1916
        %v1918 = vpop.f32.mrb[0].mxu0
        %1919 = vdwg.mxu0
        %v1920 = vadd.f32 %v1798, %v1890
        %v1921 = vadd.f32 %v1799, %v1893
        %v1922 = vadd.f32 %v1800, %v1898
        %v1923 = vadd.f32 %v1801, %v1901
        %v1924 = vadd.f32 %v1802, %v1906
        %v1925 = vadd.f32 %v1803, %v1909
        %v1926 = vadd.f32 %v1804, %v1914
        %v1927 = vadd.f32 %v1805, %v1917
        %v1928 = vpack.c.bf16 %v1921, %v1920
        %v1929 = vpack.c.bf16 %v1923, %v1922
        %v1930 = vpack.c.bf16 %v1925, %v1924
        %v1931 = vpack.c.bf16 %v1927, %v1926
        %v1933 = vsel %vm529, %v1928, 0
        %v1936 = vsel %vm529, %v1929, 0
        %v1939 = vsel %vm529, %v1930, 0
        %v1942 = vsel %vm529, %v1931, 0
        %1944 = vmatprep.subr.bf16.mxu0 0
        %1945 = vmatpush1.bf16.msra.mxu0 %v1165
        %1946 = vmatprep.subr.bf16.mxu0 0
        %1947 = vmatpush1.bf16.msra.mxu0 %v1166
        %1948 = vmatprep.subr.bf16.mxu0 0
        %1949 = vmatpush1.bf16.msra.mxu0 %v1167
        %1950 = vmatprep.subr.bf16.mxu0 0
        %1951 = vmatpush1.bf16.msra.mxu0 %v1168
        %1952 = vmatprep.subr.bf16.mxu0 0
        %1953 = vmatpush1.bf16.msra.mxu0 0
        %1954 = vmatprep.subr.bf16.mxu0 0
        %1955 = vmatpush1.bf16.msra.mxu0 0
        %1956 = vmatprep.subr.bf16.mxu0 0
        %1957 = vmatpush1.bf16.msra.mxu0 0
        %1958 = vmatprep.subr.bf16.mxu0 0
        %1959 = vmatpush1.bf16.msra.mxu0 0
        %1960 = vmatprep.subr.bf16.mxu0 0
        %1961 = vmatpush1.bf16.msra.mxu0 0
        %1962 = vmatprep.subr.bf16.mxu0 0
        %1963 = vmatpush1.bf16.msra.mxu0 0
        %1964 = vmatprep.subr.bf16.mxu0 0
        %1965 = vmatpush1.bf16.msra.mxu0 0
        %1966 = vmatprep.subr.bf16.mxu0 0
        %1967 = vmatpush1.bf16.msra.mxu0 0
        %1968 = vmatprep.subr.bf16.mxu0 0
        %1969 = vmatpush1.bf16.msra.mxu0 0
        %1970 = vmatprep.subr.bf16.mxu0 0
        %1971 = vmatpush1.bf16.msra.mxu0 0
        %1972 = vmatprep.subr.bf16.mxu0 0
        %1973 = vmatpush1.bf16.msra.mxu0 0
        %1974 = vmatprep.subr.bf16.mxu0 0
        %1975 = vmatpush1.bf16.msra.mxu0 0
        %1976 = vmatprep.mubr.bf16.mxu0 0
        %1977 = vmatmul.mubr.bf16.gmra.mrb[0].mxu0 %v1933
        %v1978 = vpop.f32.mrb[0].mxu0
        %v1979 = vadd.f32 0.0, %v1978
        %v1980 = vpop.f32.mrb[0].mxu0
        %v1981 = vpop.f32.mrb[0].mxu0
        %v1982 = vadd.f32 0.0, %v1981
        %v1983 = vpop.f32.mrb[0].mxu0
        %1984 = vmatprep.mubr.bf16.mxu0 0
        %1985 = vmatmul.mubr.bf16.gmra.mrb[0].mxu0 %v1936
        %v1986 = vpop.f32.mrb[0].mxu0
        %v1987 = vadd.f32 0.0, %v1986
        %v1988 = vpop.f32.mrb[0].mxu0
        %v1989 = vpop.f32.mrb[0].mxu0
        %v1990 = vadd.f32 0.0, %v1989
        %v1991 = vpop.f32.mrb[0].mxu0
        %1992 = vmatprep.mubr.bf16.mxu0 0
        %1993 = vmatmul.mubr.bf16.gmra.mrb[0].mxu0 %v1939
        %v1994 = vpop.f32.mrb[0].mxu0
        %v1995 = vadd.f32 0.0, %v1994
        %v1996 = vpop.f32.mrb[0].mxu0
        %v1997 = vpop.f32.mrb[0].mxu0
        %v1998 = vadd.f32 0.0, %v1997
        %v1999 = vpop.f32.mrb[0].mxu0
        %2000 = vmatprep.mubr.bf16.mxu0 0
        %2001 = vmatmul.mubr.bf16.gmra.mrb[0].mxu0 %v1942
        %v2002 = vpop.f32.mrb[0].mxu0
        %v2003 = vadd.f32 0.0, %v2002
        %v2004 = vpop.f32.mrb[0].mxu0
        %v2005 = vpop.f32.mrb[0].mxu0
        %v2006 = vadd.f32 0.0, %v2005
        %v2007 = vpop.f32.mrb[0].mxu0
        %2008 = vdwg.mxu0
        %v2009 = vtanh.pop %v1920
        %v2010 = vtanh.pop %v1921
        %v2011 = vtanh.pop %v1922
        %v2012 = vtanh.pop %v1923
        %v2013 = vtanh.pop %v1924
        %v2014 = vtanh.pop %v1925
        %v2015 = vtanh.pop %v1926
        %v2016 = vtanh.pop %v1927
        %v2017 = vxor.u32 %v1979, 2147483648
        %v2018 = vxor.u32 %v1982, 2147483648
        %v2019 = vxor.u32 %v1987, 2147483648
        %v2020 = vxor.u32 %v1990, 2147483648
        %v2021 = vxor.u32 %v1995, 2147483648
        %v2022 = vxor.u32 %v1998, 2147483648
        %v2023 = vxor.u32 %v2003, 2147483648
        %v2024 = vxor.u32 %v2006, 2147483648
        %v2025 = vmul.f32 %v2017, 1.442695
        %v2026 = vpow.pop %v2025
        %v2027 = vmul.f32 %v2018, 1.442695
        %v2028 = vpow.pop %v2027
        %v2029 = vmul.f32 %v2019, 1.442695
        %v2030 = vpow.pop %v2029
        %v2031 = vmul.f32 %v2020, 1.442695
        %v2032 = vpow.pop %v2031
        %v2033 = vmul.f32 %v2021, 1.442695
        %v2034 = vpow.pop %v2033
        %v2035 = vmul.f32 %v2022, 1.442695
        %v2036 = vpow.pop %v2035
        %v2037 = vmul.f32 %v2023, 1.442695
        %v2038 = vpow.pop %v2037
        %v2039 = vmul.f32 %v2024, 1.442695
        %v2040 = vpow.pop %v2039
        %v2041 = vadd.f32 %v2026, 1.0
        %v2042 = vadd.f32 %v2028, 1.0
        %v2043 = vadd.f32 %v2030, 1.0
        %v2044 = vadd.f32 %v2032, 1.0
        %v2045 = vadd.f32 %v2034, 1.0
        %v2046 = vadd.f32 %v2036, 1.0
        %v2047 = vadd.f32 %v2038, 1.0
        %v2048 = vadd.f32 %v2040, 1.0
        %v2049 = vrcp.pop %v2041
        %v2050 = vmul.f32 1.0, %v2049
        %v2051 = vrcp.pop %v2042
        %v2052 = vmul.f32 1.0, %v2051
        %v2053 = vrcp.pop %v2043
        %v2054 = vmul.f32 1.0, %v2053
        %v2055 = vrcp.pop %v2044
        %v2056 = vmul.f32 1.0, %v2055
        %v2057 = vrcp.pop %v2045
        %v2058 = vmul.f32 1.0, %v2057
        %v2059 = vrcp.pop %v2046
        %v2060 = vmul.f32 1.0, %v2059
        %v2061 = vrcp.pop %v2047
        %v2062 = vmul.f32 1.0, %v2061
        %v2063 = vrcp.pop %v2048
        %v2064 = vmul.f32 1.0, %v2063
        %v2065 = vmul.f32 %v2009, %v2050
        %v2066 = vmul.f32 %v2010, %v2052
        %v2067 = vmul.f32 %v2011, %v2054
        %v2068 = vmul.f32 %v2012, %v2056
        %v2069 = vmul.f32 %v2013, %v2058
        %v2070 = vmul.f32 %v2014, %v2060
        %v2071 = vmul.f32 %v2015, %v2062
        %v2072 = vmul.f32 %v2016, %v2064
        %v2073 = vpack.c.bf16 %v2066, %v2065
        %v2074 = vpack.c.bf16 %v2068, %v2067
        %v2075 = vpack.c.bf16 %v2070, %v2069
        %v2076 = vpack.c.bf16 %v2072, %v2071
        %s2077 = scalar_lea.vmem %s7, 32
        %v2078 = vld [vmem:[%s2077] sm:$0xf]
        %v2079 = vld [vmem:[%s2077 + $0x4] sm:$0xf]
        %v2080 = vld [vmem:[%s2077 + $0x8] sm:$0xf]
        %v2081 = vld [vmem:[%s2077 + $0xc] sm:$0xf]
        %v2082 = vld [vmem:[%s2077 + $0x10] sm:$0xf]
        %v2083 = vld [vmem:[%s2077 + $0x14] sm:$0xf]
        %v2084 = vld [vmem:[%s2077 + $0x18] sm:$0xf]
        %v2085 = vld [vmem:[%s2077 + $0x1c] sm:$0xf]
        %s2086 = scalar_lea.vmem %s8, 1
        %v2087 = vld [vmem:[%s2086] sm:$0x1]
        %v2089 = vlaneseq
        %v2090 = vshrl.u32 %v2089, 7
        %v2091 = vsub.s32 0, %v2090
        %v2092 = vrot.slane %v2087, %v2091
        %v2102 = vunpack.c.l.b16 %v2078
        %v2103 = vunpack.c.l.b16 %v2079
        %v2104 = vunpack.c.l.b16 %v2080
        %v2105 = vunpack.c.l.b16 %v2081
        %v2106 = vunpack.c.l.b16 %v2082
        %v2107 = vunpack.c.l.b16 %v2083
        %v2108 = vunpack.c.l.b16 %v2084
        %v2109 = vunpack.c.l.b16 %v2085
        %v2110 = vpack.c.b16 %v2103, %v2102
        %v2111 = vpack.c.b16 %v2105, %v2104
        %v2112 = vpack.c.b16 %v2107, %v2106
        %v2113 = vpack.c.b16 %v2109, %v2108
        %v2119 = vsel %vm529, %v2073, 0
        %v2122 = vsel %vm529, %v2074, 0
        %v2125 = vsel %vm529, %v2075, 0
        %v2128 = vsel %vm529, %v2076, 0
        %2130 = vmatprep.subr.bf16.mxu0 0
        %2131 = vmatpush1.bf16.msra.mxu0 %v2110
        %2132 = vmatprep.subr.bf16.mxu0 0
        %2133 = vmatpush1.bf16.msra.mxu0 %v2111
        %2134 = vmatprep.subr.bf16.mxu0 0
        %2135 = vmatpush1.bf16.msra.mxu0 %v2112
        %2136 = vmatprep.subr.bf16.mxu0 0
        %2137 = vmatpush1.bf16.msra.mxu0 %v2113
        %2138 = vmatprep.subr.bf16.mxu0 0
        %2139 = vmatpush1.bf16.msra.mxu0 0
        %2140 = vmatprep.subr.bf16.mxu0 0
        %2141 = vmatpush1.bf16.msra.mxu0 0
        %2142 = vmatprep.subr.bf16.mxu0 0
        %2143 = vmatpush1.bf16.msra.mxu0 0
        %2144 = vmatprep.subr.bf16.mxu0 0
        %2145 = vmatpush1.bf16.msra.mxu0 0
        %2146 = vmatprep.subr.bf16.mxu0 0
        %2147 = vmatpush1.bf16.msra.mxu0 0
        %2148 = vmatprep.subr.bf16.mxu0 0
        %2149 = vmatpush1.bf16.msra.mxu0 0
        %2150 = vmatprep.subr.bf16.mxu0 0
        %2151 = vmatpush1.bf16.msra.mxu0 0
        %2152 = vmatprep.subr.bf16.mxu0 0
        %2153 = vmatpush1.bf16.msra.mxu0 0
        %2154 = vmatprep.subr.bf16.mxu0 0
        %2155 = vmatpush1.bf16.msra.mxu0 0
        %2156 = vmatprep.subr.bf16.mxu0 0
        %2157 = vmatpush1.bf16.msra.mxu0 0
        %2158 = vmatprep.subr.bf16.mxu0 0
        %2159 = vmatpush1.bf16.msra.mxu0 0
        %2160 = vmatprep.subr.bf16.mxu0 0
        %2161 = vmatpush1.bf16.msra.mxu0 0
        %2162 = vmatprep.mubr.bf16.mxu0 0
        %2163 = vmatmul.mubr.bf16.gmra.mrb[0].mxu0 %v2119
        %v2164 = vpop.f32.mrb[0].mxu0
        %v2165 = vadd.f32 %v2092, %v2164
        %v2166 = vpop.f32.mrb[0].mxu0
        %v2167 = vpop.f32.mrb[0].mxu0
        %v2168 = vadd.f32 %v2092, %v2167
        %v2169 = vpop.f32.mrb[0].mxu0
        %2170 = vmatprep.mubr.bf16.mxu0 0
        %2171 = vmatmul.mubr.bf16.gmra.mrb[0].mxu0 %v2122
        %v2172 = vpop.f32.mrb[0].mxu0
        %v2173 = vadd.f32 %v2092, %v2172
        %v2174 = vpop.f32.mrb[0].mxu0
        %v2175 = vpop.f32.mrb[0].mxu0
        %v2176 = vadd.f32 %v2092, %v2175
        %v2177 = vpop.f32.mrb[0].mxu0
        %2178 = vmatprep.mubr.bf16.mxu0 0
        %2179 = vmatmul.mubr.bf16.gmra.mrb[0].mxu0 %v2125
        %v2180 = vpop.f32.mrb[0].mxu0
        %v2181 = vadd.f32 %v2092, %v2180
        %v2182 = vpop.f32.mrb[0].mxu0
        %v2183 = vpop.f32.mrb[0].mxu0
        %v2184 = vadd.f32 %v2092, %v2183
        %v2185 = vpop.f32.mrb[0].mxu0
        %2186 = vmatprep.mubr.bf16.mxu0 0
        %2187 = vmatmul.mubr.bf16.gmra.mrb[0].mxu0 %v2128
        %v2188 = vpop.f32.mrb[0].mxu0
        %v2189 = vadd.f32 %v2092, %v2188
        %v2190 = vpop.f32.mrb[0].mxu0
        %v2191 = vpop.f32.mrb[0].mxu0
        %v2192 = vadd.f32 %v2092, %v2191
        %v2193 = vpop.f32.mrb[0].mxu0
        %2194 = vdwg.mxu0
        %v2195 = vadd.f32 %v1448, %v2165
        %v2196 = vadd.f32 %v1449, %v2168
        %v2197 = vadd.f32 %v1450, %v2173
        %v2198 = vadd.f32 %v1451, %v2176
        %v2199 = vadd.f32 %v1452, %v2181
        %v2200 = vadd.f32 %v1453, %v2184
        %v2201 = vadd.f32 %v1454, %v2189
        %v2202 = vadd.f32 %v1455, %v2192
        %v2203 = vmul.f32 %v2195, %v1446
        %v2204 = vmul.f32 %v2196, %v1446
        %v2205 = vmul.f32 %v2197, %v1446
        %v2206 = vmul.f32 %v2198, %v1446
        %v2207 = vmul.f32 %v2199, %v1446
        %v2208 = vmul.f32 %v2200, %v1446
        %v2209 = vmul.f32 %v2201, %v1446
        %v2210 = vmul.f32 %v2202, %v1446
        %2211 = vst.msk [vmem:[#allocation2 + $0x10] sm:$0xff] %vm529, %v2203
        %2212 = vst.msk [vmem:[#allocation2 + $0x18] sm:$0xff] %vm529, %v2204
        %2213 = vst.msk [vmem:[#allocation2 + $0x20] sm:$0xff] %vm529, %v2205
        %2214 = vst.msk [vmem:[#allocation2 + $0x28] sm:$0xff] %vm529, %v2206
        %2215 = vst.msk [vmem:[#allocation2 + $0x30] sm:$0xff] %vm529, %v2207
        %2216 = vst.msk [vmem:[#allocation2 + $0x38] sm:$0xff] %vm529, %v2208
        %2217 = vst.msk [vmem:[#allocation2 + $0x40] sm:$0xff] %vm529, %v2209
        %2218 = vst.msk [vmem:[#allocation2 + $0x48] sm:$0xff] %vm529, %v2210
        %s2219 = scalar_lea.vmem %s6, 16
        %v2220 = vld [vmem:[%s2219] sm:$0xf]
        %v2221 = vld [vmem:[%s2219 + $0x4] sm:$0xf]
        %s2222 = scalar_lea.vmem %s5, 2
        %v2223 = vld [vmem:[%s2222] sm:$0x1]
        %v2225 = vlaneseq
        %v2226 = vshrl.u32 %v2225, 7
        %v2227 = vsub.s32 0, %v2226
        %v2228 = vrot.slane %v2223, %v2227
        %v2232 = vunpack.c.l.b16 %v2220
        %v2233 = vunpack.c.l.b16 %v2221
        %v2234 = vpack.c.b16 %v2233, %v2232
        %2236 = vmatprep.subr.bf16.mxu0 0
        %2237 = vmatpush1.bf16.msra.mxu0 %v2234
        %2238 = vmatprep.subr.bf16.mxu0 0
        %2239 = vmatpush1.bf16.msra.mxu0 0
        %2240 = vmatprep.subr.bf16.mxu0 0
        %2241 = vmatpush1.bf16.msra.mxu0 0
        %2242 = vmatprep.subr.bf16.mxu0 0
        %2243 = vmatpush1.bf16.msra.mxu0 0
        %2244 = vmatprep.subr.bf16.mxu0 0
        %2245 = vmatpush1.bf16.msra.mxu0 0
        %2246 = vmatprep.subr.bf16.mxu0 0
        %2247 = vmatpush1.bf16.msra.mxu0 0
        %2248 = vmatprep.subr.bf16.mxu0 0
        %2249 = vmatpush1.bf16.msra.mxu0 0
        %2250 = vmatprep.subr.bf16.mxu0 0
        %2251 = vmatpush1.bf16.msra.mxu0 0
        %2252 = vmatprep.subr.bf16.mxu0 0
        %2253 = vmatpush1.bf16.msra.mxu0 0
        %2254 = vmatprep.subr.bf16.mxu0 0
        %2255 = vmatpush1.bf16.msra.mxu0 0
        %2256 = vmatprep.subr.bf16.mxu0 0
        %2257 = vmatpush1.bf16.msra.mxu0 0
        %2258 = vmatprep.subr.bf16.mxu0 0
        %2259 = vmatpush1.bf16.msra.mxu0 0
        %2260 = vmatprep.subr.bf16.mxu0 0
        %2261 = vmatpush1.bf16.msra.mxu0 0
        %2262 = vmatprep.subr.bf16.mxu0 0
        %2263 = vmatpush1.bf16.msra.mxu0 0
        %2264 = vmatprep.subr.bf16.mxu0 0
        %2265 = vmatpush1.bf16.msra.mxu0 0
        %2266 = vmatprep.subr.bf16.mxu0 0
        %2267 = vmatpush1.bf16.msra.mxu0 0
        %2268 = vmatprep.mubr.bf16.mxu0 0
        %2269 = vmatmul.mubr.bf16.gmra.mrb[0].mxu0 %v688
        %v2270 = vpop.f32.mrb[0].mxu0
        %v2271 = vadd.f32 %v2228, %v2270
        %v2272 = vpop.f32.mrb[0].mxu0
        %v2273 = vpop.f32.mrb[0].mxu0
        %v2274 = vadd.f32 %v2228, %v2273
        %v2275 = vpop.f32.mrb[0].mxu0
        %2276 = vmatprep.mubr.bf16.mxu0 0
        %2277 = vmatmul.mubr.bf16.gmra.mrb[0].mxu0 %v691
        %v2278 = vpop.f32.mrb[0].mxu0
        %v2279 = vadd.f32 %v2228, %v2278
        %v2280 = vpop.f32.mrb[0].mxu0
        %v2281 = vpop.f32.mrb[0].mxu0
        %v2282 = vadd.f32 %v2228, %v2281
        %v2283 = vpop.f32.mrb[0].mxu0
        %2284 = vmatprep.mubr.bf16.mxu0 0
        %2285 = vmatmul.mubr.bf16.gmra.mrb[0].mxu0 %v694
        %v2286 = vpop.f32.mrb[0].mxu0
        %v2287 = vadd.f32 %v2228, %v2286
        %v2288 = vpop.f32.mrb[0].mxu0
        %v2289 = vpop.f32.mrb[0].mxu0
        %v2290 = vadd.f32 %v2228, %v2289
        %v2291 = vpop.f32.mrb[0].mxu0
        %2292 = vmatprep.mubr.bf16.mxu0 0
        %2293 = vmatmul.mubr.bf16.gmra.mrb[0].mxu0 %v697
        %v2294 = vpop.f32.mrb[0].mxu0
        %v2295 = vadd.f32 %v2228, %v2294
        %v2296 = vpop.f32.mrb[0].mxu0
        %v2297 = vpop.f32.mrb[0].mxu0
        %v2298 = vadd.f32 %v2228, %v2297
        %v2299 = vpop.f32.mrb[0].mxu0
        %2300 = vdwg.mxu0
        %v2301 = vld [vmem:[#allocation2 + $0x8] sm:$0xff]
        %v2302 = vld [vmem:[#allocation2 + $0x10] sm:$0xff]
        %v2303 = vld [vmem:[#allocation2 + $0x18] sm:$0xff]
        %v2304 = vld [vmem:[#allocation2 + $0x20] sm:$0xff]
        %v2305 = vld [vmem:[#allocation2 + $0x28] sm:$0xff]
        %v2306 = vld [vmem:[#allocation2 + $0x30] sm:$0xff]
        %v2307 = vld [vmem:[#allocation2 + $0x38] sm:$0xff]
        %v2308 = vld [vmem:[#allocation2 + $0x40] sm:$0xff]
        %v2309 = vpack.c.bf16 %v2302, %v2301
        %v2310 = vpack.c.bf16 %v2304, %v2303
        %v2311 = vpack.c.bf16 %v2306, %v2305
        %v2312 = vpack.c.bf16 %v2308, %v2307
        %s2313 = scalar_lea.vmem [#allocation3], 192
        %v2314 = vld [vmem:[%s2313] sm:$0xf]
        %v2315 = vld [vmem:[%s2313 + $0x4] sm:$0xf]
        %v2316 = vld [vmem:[%s2313 + $0x8] sm:$0xf]
        %v2317 = vld [vmem:[%s2313 + $0xc] sm:$0xf]
        %v2318 = vld [vmem:[%s2313 + $0x10] sm:$0xf]
        %v2319 = vld [vmem:[%s2313 + $0x14] sm:$0xf]
        %v2320 = vld [vmem:[%s2313 + $0x18] sm:$0xf]
        %v2321 = vld [vmem:[%s2313 + $0x1c] sm:$0xf]
        %v2330 = vunpack.c.l.b16 %v2314
        %v2331 = vunpack.c.l.b16 %v2315
        %v2332 = vunpack.c.l.b16 %v2316
        %v2333 = vunpack.c.l.b16 %v2317
        %v2334 = vunpack.c.l.b16 %v2318
        %v2335 = vunpack.c.l.b16 %v2319
        %v2336 = vunpack.c.l.b16 %v2320
        %v2337 = vunpack.c.l.b16 %v2321
        %v2338 = vpack.c.b16 %v2331, %v2330
        %v2339 = vpack.c.b16 %v2333, %v2332
        %v2340 = vpack.c.b16 %v2335, %v2334
        %v2341 = vpack.c.b16 %v2337, %v2336
        %v2347 = vsel %vm529, %v2309, 0
        %v2350 = vsel %vm529, %v2310, 0
        %v2353 = vsel %vm529, %v2311, 0
        %v2356 = vsel %vm529, %v2312, 0
        %2358 = vmatprep.subr.bf16.mxu0 0
        %2359 = vmatpush1.bf16.msra.mxu0 %v2338
        %2360 = vmatprep.subr.bf16.mxu0 0
        %2361 = vmatpush1.bf16.msra.mxu0 %v2339
        %2362 = vmatprep.subr.bf16.mxu0 0
        %2363 = vmatpush1.bf16.msra.mxu0 %v2340
        %2364 = vmatprep.subr.bf16.mxu0 0
        %2365 = vmatpush1.bf16.msra.mxu0 %v2341
        %2366 = vmatprep.subr.bf16.mxu0 0
        %2367 = vmatpush1.bf16.msra.mxu0 0
        %2368 = vmatprep.subr.bf16.mxu0 0
        %2369 = vmatpush1.bf16.msra.mxu0 0
        %2370 = vmatprep.subr.bf16.mxu0 0
        %2371 = vmatpush1.bf16.msra.mxu0 0
        %2372 = vmatprep.subr.bf16.mxu0 0
        %2373 = vmatpush1.bf16.msra.mxu0 0
        %2374 = vmatprep.subr.bf16.mxu0 0
        %2375 = vmatpush1.bf16.msra.mxu0 0
        %2376 = vmatprep.subr.bf16.mxu0 0
        %2377 = vmatpush1.bf16.msra.mxu0 0
        %2378 = vmatprep.subr.bf16.mxu0 0
        %2379 = vmatpush1.bf16.msra.mxu0 0
        %2380 = vmatprep.subr.bf16.mxu0 0
        %2381 = vmatpush1.bf16.msra.mxu0 0
        %2382 = vmatprep.subr.bf16.mxu0 0
        %2383 = vmatpush1.bf16.msra.mxu0 0
        %2384 = vmatprep.subr.bf16.mxu0 0
        %2385 = vmatpush1.bf16.msra.mxu0 0
        %2386 = vmatprep.subr.bf16.mxu0 0
        %2387 = vmatpush1.bf16.msra.mxu0 0
        %2388 = vmatprep.subr.bf16.mxu0 0
        %2389 = vmatpush1.bf16.msra.mxu0 0
        %2390 = vmatprep.mubr.bf16.mxu0 0
        %2391 = vmatmul.mubr.bf16.gmra.mrb[0].mxu0 %v2347
        %v2392 = vpop.f32.mrb[0].mxu0
        %v2393 = vadd.f32 0.0, %v2392
        %v2394 = vpop.f32.mrb[0].mxu0
        %v2395 = vpop.f32.mrb[0].mxu0
        %v2396 = vadd.f32 0.0, %v2395
        %v2397 = vpop.f32.mrb[0].mxu0
        %2398 = vmatprep.mubr.bf16.mxu0 0
        %2399 = vmatmul.mubr.bf16.gmra.mrb[0].mxu0 %v2350
        %v2400 = vpop.f32.mrb[0].mxu0
        %v2401 = vadd.f32 0.0, %v2400
        %v2402 = vpop.f32.mrb[0].mxu0
        %v2403 = vpop.f32.mrb[0].mxu0
        %v2404 = vadd.f32 0.0, %v2403
        %v2405 = vpop.f32.mrb[0].mxu0
        %2406 = vmatprep.mubr.bf16.mxu0 0
        %2407 = vmatmul.mubr.bf16.gmra.mrb[0].mxu0 %v2353
        %v2408 = vpop.f32.mrb[0].mxu0
        %v2409 = vadd.f32 0.0, %v2408
        %v2410 = vpop.f32.mrb[0].mxu0
        %v2411 = vpop.f32.mrb[0].mxu0
        %v2412 = vadd.f32 0.0, %v2411
        %v2413 = vpop.f32.mrb[0].mxu0
        %2414 = vmatprep.mubr.bf16.mxu0 0
        %2415 = vmatmul.mubr.bf16.gmra.mrb[0].mxu0 %v2356
        %v2416 = vpop.f32.mrb[0].mxu0
        %v2417 = vadd.f32 0.0, %v2416
        %v2418 = vpop.f32.mrb[0].mxu0
        %v2419 = vpop.f32.mrb[0].mxu0
        %v2420 = vadd.f32 0.0, %v2419
        %v2421 = vpop.f32.mrb[0].mxu0
        %2422 = vdwg.mxu0
        %v2423 = vadd.f32 %v2271, %v2393
        %v2424 = vadd.f32 %v2274, %v2396
        %v2425 = vadd.f32 %v2279, %v2401
        %v2426 = vadd.f32 %v2282, %v2404
        %v2427 = vadd.f32 %v2287, %v2409
        %v2428 = vadd.f32 %v2290, %v2412
        %v2429 = vadd.f32 %v2295, %v2417
        %v2430 = vadd.f32 %v2298, %v2420
        %v2431 = vld [vmem:[#allocation2 + $0xc] sm:$0xff]
        %v2432 = vld [vmem:[#allocation2 + $0x14] sm:$0xff]
        %v2433 = vld [vmem:[#allocation2 + $0x1c] sm:$0xff]
        %v2434 = vld [vmem:[#allocation2 + $0x24] sm:$0xff]
        %v2435 = vld [vmem:[#allocation2 + $0x2c] sm:$0xff]
        %v2436 = vld [vmem:[#allocation2 + $0x34] sm:$0xff]
        %v2437 = vld [vmem:[#allocation2 + $0x3c] sm:$0xff]
        %v2438 = vld [vmem:[#allocation2 + $0x44] sm:$0xff]
        %v2439 = vpack.c.bf16 %v2432, %v2431
        %v2440 = vpack.c.bf16 %v2434, %v2433
        %v2441 = vpack.c.bf16 %v2436, %v2435
        %v2442 = vpack.c.bf16 %v2438, %v2437
        %s2443 = scalar_lea.vmem [#allocation3], 224
        %v2444 = vld [vmem:[%s2443] sm:$0xf]
        %v2445 = vld [vmem:[%s2443 + $0x4] sm:$0xf]
        %v2446 = vld [vmem:[%s2443 + $0x8] sm:$0xf]
        %v2447 = vld [vmem:[%s2443 + $0xc] sm:$0xf]
        %v2448 = vld [vmem:[%s2443 + $0x10] sm:$0xf]
        %v2449 = vld [vmem:[%s2443 + $0x14] sm:$0xf]
        %v2450 = vld [vmem:[%s2443 + $0x18] sm:$0xf]
        %v2451 = vld [vmem:[%s2443 + $0x1c] sm:$0xf]
        %v2460 = vunpack.c.l.b16 %v2444
        %v2461 = vunpack.c.l.b16 %v2445
        %v2462 = vunpack.c.l.b16 %v2446
        %v2463 = vunpack.c.l.b16 %v2447
        %v2464 = vunpack.c.l.b16 %v2448
        %v2465 = vunpack.c.l.b16 %v2449
        %v2466 = vunpack.c.l.b16 %v2450
        %v2467 = vunpack.c.l.b16 %v2451
        %v2468 = vpack.c.b16 %v2461, %v2460
        %v2469 = vpack.c.b16 %v2463, %v2462
        %v2470 = vpack.c.b16 %v2465, %v2464
        %v2471 = vpack.c.b16 %v2467, %v2466
        %v2477 = vsel %vm529, %v2439, 0
        %v2480 = vsel %vm529, %v2440, 0
        %v2483 = vsel %vm529, %v2441, 0
        %v2486 = vsel %vm529, %v2442, 0
        %2488 = vmatprep.subr.bf16.mxu0 0
        %2489 = vmatpush1.bf16.msra.mxu0 %v2468
        %2490 = vmatprep.subr.bf16.mxu0 0
        %2491 = vmatpush1.bf16.msra.mxu0 %v2469
        %2492 = vmatprep.subr.bf16.mxu0 0
        %2493 = vmatpush1.bf16.msra.mxu0 %v2470
        %2494 = vmatprep.subr.bf16.mxu0 0
        %2495 = vmatpush1.bf16.msra.mxu0 %v2471
        %2496 = vmatprep.subr.bf16.mxu0 0
        %2497 = vmatpush1.bf16.msra.mxu0 0
        %2498 = vmatprep.subr.bf16.mxu0 0
        %2499 = vmatpush1.bf16.msra.mxu0 0
        %2500 = vmatprep.subr.bf16.mxu0 0
        %2501 = vmatpush1.bf16.msra.mxu0 0
        %2502 = vmatprep.subr.bf16.mxu0 0
        %2503 = vmatpush1.bf16.msra.mxu0 0
        %2504 = vmatprep.subr.bf16.mxu0 0
        %2505 = vmatpush1.bf16.msra.mxu0 0
        %2506 = vmatprep.subr.bf16.mxu0 0
        %2507 = vmatpush1.bf16.msra.mxu0 0
        %2508 = vmatprep.subr.bf16.mxu0 0
        %2509 = vmatpush1.bf16.msra.mxu0 0
        %2510 = vmatprep.subr.bf16.mxu0 0
        %2511 = vmatpush1.bf16.msra.mxu0 0
        %2512 = vmatprep.subr.bf16.mxu0 0
        %2513 = vmatpush1.bf16.msra.mxu0 0
        %2514 = vmatprep.subr.bf16.mxu0 0
        %2515 = vmatpush1.bf16.msra.mxu0 0
        %2516 = vmatprep.subr.bf16.mxu0 0
        %2517 = vmatpush1.bf16.msra.mxu0 0
        %2518 = vmatprep.subr.bf16.mxu0 0
        %2519 = vmatpush1.bf16.msra.mxu0 0
        %2520 = vmatprep.mubr.bf16.mxu0 0
        %2521 = vmatmul.mubr.bf16.gmra.mrb[0].mxu0 %v2477
        %v2522 = vpop.f32.mrb[0].mxu0
        %v2523 = vadd.f32 0.0, %v2522
        %v2524 = vpop.f32.mrb[0].mxu0
        %v2525 = vpop.f32.mrb[0].mxu0
        %v2526 = vadd.f32 0.0, %v2525
        %v2527 = vpop.f32.mrb[0].mxu0
        %2528 = vmatprep.mubr.bf16.mxu0 0
        %2529 = vmatmul.mubr.bf16.gmra.mrb[0].mxu0 %v2480
        %v2530 = vpop.f32.mrb[0].mxu0
        %v2531 = vadd.f32 0.0, %v2530
        %v2532 = vpop.f32.mrb[0].mxu0
        %v2533 = vpop.f32.mrb[0].mxu0
        %v2534 = vadd.f32 0.0, %v2533
        %v2535 = vpop.f32.mrb[0].mxu0
        %2536 = vmatprep.mubr.bf16.mxu0 0
        %2537 = vmatmul.mubr.bf16.gmra.mrb[0].mxu0 %v2483
        %v2538 = vpop.f32.mrb[0].mxu0
        %v2539 = vadd.f32 0.0, %v2538
        %v2540 = vpop.f32.mrb[0].mxu0
        %v2541 = vpop.f32.mrb[0].mxu0
        %v2542 = vadd.f32 0.0, %v2541
        %v2543 = vpop.f32.mrb[0].mxu0
        %2544 = vmatprep.mubr.bf16.mxu0 0
        %2545 = vmatmul.mubr.bf16.gmra.mrb[0].mxu0 %v2486
        %v2546 = vpop.f32.mrb[0].mxu0
        %v2547 = vadd.f32 0.0, %v2546
        %v2548 = vpop.f32.mrb[0].mxu0
        %v2549 = vpop.f32.mrb[0].mxu0
        %v2550 = vadd.f32 0.0, %v2549
        %v2551 = vpop.f32.mrb[0].mxu0
        %2552 = vdwg.mxu0
        %v2553 = vadd.f32 %v2423, %v2523
        %v2554 = vadd.f32 %v2424, %v2526
        %v2555 = vadd.f32 %v2425, %v2531
        %v2556 = vadd.f32 %v2426, %v2534
        %v2557 = vadd.f32 %v2427, %v2539
        %v2558 = vadd.f32 %v2428, %v2542
        %v2559 = vadd.f32 %v2429, %v2547
        %v2560 = vadd.f32 %v2430, %v2550
        %v2561 = vpack.c.bf16 %v2204, %v2203
        %v2562 = vpack.c.bf16 %v2206, %v2205
        %v2563 = vpack.c.bf16 %v2208, %v2207
        %v2564 = vpack.c.bf16 %v2210, %v2209
        %s2565 = scalar_lea.vmem [#allocation3], 256
        %v2566 = vld [vmem:[%s2565] sm:$0xf]
        %v2567 = vld [vmem:[%s2565 + $0x4] sm:$0xf]
        %v2568 = vld [vmem:[%s2565 + $0x8] sm:$0xf]
        %v2569 = vld [vmem:[%s2565 + $0xc] sm:$0xf]
        %v2570 = vld [vmem:[%s2565 + $0x10] sm:$0xf]
        %v2571 = vld [vmem:[%s2565 + $0x14] sm:$0xf]
        %v2572 = vld [vmem:[%s2565 + $0x18] sm:$0xf]
        %v2573 = vld [vmem:[%s2565 + $0x1c] sm:$0xf]
        %v2582 = vunpack.c.l.b16 %v2566
        %v2583 = vunpack.c.l.b16 %v2567
        %v2584 = vunpack.c.l.b16 %v2568
        %v2585 = vunpack.c.l.b16 %v2569
        %v2586 = vunpack.c.l.b16 %v2570
        %v2587 = vunpack.c.l.b16 %v2571
        %v2588 = vunpack.c.l.b16 %v2572
        %v2589 = vunpack.c.l.b16 %v2573
        %v2590 = vpack.c.b16 %v2583, %v2582
        %v2591 = vpack.c.b16 %v2585, %v2584
        %v2592 = vpack.c.b16 %v2587, %v2586
        %v2593 = vpack.c.b16 %v2589, %v2588
        %v2599 = vsel %vm529, %v2561, 0
        %v2602 = vsel %vm529, %v2562, 0
        %v2605 = vsel %vm529, %v2563, 0
        %v2608 = vsel %vm529, %v2564, 0
        %2610 = vmatprep.subr.bf16.mxu0 0
        %2611 = vmatpush1.bf16.msra.mxu0 %v2590
        %2612 = vmatprep.subr.bf16.mxu0 0
        %2613 = vmatpush1.bf16.msra.mxu0 %v2591
        %2614 = vmatprep.subr.bf16.mxu0 0
        %2615 = vmatpush1.bf16.msra.mxu0 %v2592
        %2616 = vmatprep.subr.bf16.mxu0 0
        %2617 = vmatpush1.bf16.msra.mxu0 %v2593
        %2618 = vmatprep.subr.bf16.mxu0 0
        %2619 = vmatpush1.bf16.msra.mxu0 0
        %2620 = vmatprep.subr.bf16.mxu0 0
        %2621 = vmatpush1.bf16.msra.mxu0 0
        %2622 = vmatprep.subr.bf16.mxu0 0
        %2623 = vmatpush1.bf16.msra.mxu0 0
        %2624 = vmatprep.subr.bf16.mxu0 0
        %2625 = vmatpush1.bf16.msra.mxu0 0
        %2626 = vmatprep.subr.bf16.mxu0 0
        %2627 = vmatpush1.bf16.msra.mxu0 0
        %2628 = vmatprep.subr.bf16.mxu0 0
        %2629 = vmatpush1.bf16.msra.mxu0 0
        %2630 = vmatprep.subr.bf16.mxu0 0
        %2631 = vmatpush1.bf16.msra.mxu0 0
        %2632 = vmatprep.subr.bf16.mxu0 0
        %2633 = vmatpush1.bf16.msra.mxu0 0
        %2634 = vmatprep.subr.bf16.mxu0 0
        %2635 = vmatpush1.bf16.msra.mxu0 0
        %2636 = vmatprep.subr.bf16.mxu0 0
        %2637 = vmatpush1.bf16.msra.mxu0 0
        %2638 = vmatprep.subr.bf16.mxu0 0
        %2639 = vmatpush1.bf16.msra.mxu0 0
        %2640 = vmatprep.subr.bf16.mxu0 0
        %2641 = vmatpush1.bf16.msra.mxu0 0
        %2642 = vmatprep.mubr.bf16.mxu0 0
        %2643 = vmatmul.mubr.bf16.gmra.mrb[0].mxu0 %v2599
        %v2644 = vpop.f32.mrb[0].mxu0
        %v2645 = vadd.f32 0.0, %v2644
        %v2646 = vpop.f32.mrb[0].mxu0
        %v2647 = vpop.f32.mrb[0].mxu0
        %v2648 = vadd.f32 0.0, %v2647
        %v2649 = vpop.f32.mrb[0].mxu0
        %2650 = vmatprep.mubr.bf16.mxu0 0
        %2651 = vmatmul.mubr.bf16.gmra.mrb[0].mxu0 %v2602
        %v2652 = vpop.f32.mrb[0].mxu0
        %v2653 = vadd.f32 0.0, %v2652
        %v2654 = vpop.f32.mrb[0].mxu0
        %v2655 = vpop.f32.mrb[0].mxu0
        %v2656 = vadd.f32 0.0, %v2655
        %v2657 = vpop.f32.mrb[0].mxu0
        %2658 = vmatprep.mubr.bf16.mxu0 0
        %2659 = vmatmul.mubr.bf16.gmra.mrb[0].mxu0 %v2605
        %v2660 = vpop.f32.mrb[0].mxu0
        %v2661 = vadd.f32 0.0, %v2660
        %v2662 = vpop.f32.mrb[0].mxu0
        %v2663 = vpop.f32.mrb[0].mxu0
        %v2664 = vadd.f32 0.0, %v2663
        %v2665 = vpop.f32.mrb[0].mxu0
        %2666 = vmatprep.mubr.bf16.mxu0 0
        %2667 = vmatmul.mubr.bf16.gmra.mrb[0].mxu0 %v2608
        %v2668 = vpop.f32.mrb[0].mxu0
        %v2669 = vadd.f32 0.0, %v2668
        %v2670 = vpop.f32.mrb[0].mxu0
        %v2671 = vpop.f32.mrb[0].mxu0
        %v2672 = vadd.f32 0.0, %v2671
        %v2673 = vpop.f32.mrb[0].mxu0
        %2674 = vdwg.mxu0
        %v2675 = vadd.f32 %v2553, %v2645
        %v2676 = vadd.f32 %v2554, %v2648
        %v2677 = vadd.f32 %v2555, %v2653
        %v2678 = vadd.f32 %v2556, %v2656
        %v2679 = vadd.f32 %v2557, %v2661
        %v2680 = vadd.f32 %v2558, %v2664
        %v2681 = vadd.f32 %v2559, %v2669
        %v2682 = vadd.f32 %v2560, %v2672
        %v2683 = vpack.c.bf16 %v2676, %v2675
        %v2684 = vpack.c.bf16 %v2678, %v2677
        %v2685 = vpack.c.bf16 %v2680, %v2679
        %v2686 = vpack.c.bf16 %v2682, %v2681
        %v2688 = vsel %vm529, %v2683, 0
        %v2691 = vsel %vm529, %v2684, 0
        %v2694 = vsel %vm529, %v2685, 0
        %v2697 = vsel %vm529, %v2686, 0
        %2699 = vmatprep.subr.bf16.mxu0 0
        %2700 = vmatpush1.bf16.msra.mxu0 %v1165
        %2701 = vmatprep.subr.bf16.mxu0 0
        %2702 = vmatpush1.bf16.msra.mxu0 %v1166
        %2703 = vmatprep.subr.bf16.mxu0 0
        %2704 = vmatpush1.bf16.msra.mxu0 %v1167
        %2705 = vmatprep.subr.bf16.mxu0 0
        %2706 = vmatpush1.bf16.msra.mxu0 %v1168
        %2707 = vmatprep.subr.bf16.mxu0 0
        %2708 = vmatpush1.bf16.msra.mxu0 0
        %2709 = vmatprep.subr.bf16.mxu0 0
        %2710 = vmatpush1.bf16.msra.mxu0 0
        %2711 = vmatprep.subr.bf16.mxu0 0
        %2712 = vmatpush1.bf16.msra.mxu0 0
        %2713 = vmatprep.subr.bf16.mxu0 0
        %2714 = vmatpush1.bf16.msra.mxu0 0
        %2715 = vmatprep.subr.bf16.mxu0 0
        %2716 = vmatpush1.bf16.msra.mxu0 0
        %2717 = vmatprep.subr.bf16.mxu0 0
        %2718 = vmatpush1.bf16.msra.mxu0 0
        %2719 = vmatprep.subr.bf16.mxu0 0
        %2720 = vmatpush1.bf16.msra.mxu0 0
        %2721 = vmatprep.subr.bf16.mxu0 0
        %2722 = vmatpush1.bf16.msra.mxu0 0
        %2723 = vmatprep.subr.bf16.mxu0 0
        %2724 = vmatpush1.bf16.msra.mxu0 0
        %2725 = vmatprep.subr.bf16.mxu0 0
        %2726 = vmatpush1.bf16.msra.mxu0 0
        %2727 = vmatprep.subr.bf16.mxu0 0
        %2728 = vmatpush1.bf16.msra.mxu0 0
        %2729 = vmatprep.subr.bf16.mxu0 0
        %2730 = vmatpush1.bf16.msra.mxu0 0
        %2731 = vmatprep.mubr.bf16.mxu0 0
        %2732 = vmatmul.mubr.bf16.gmra.mrb[0].mxu0 %v2688
        %v2733 = vpop.f32.mrb[0].mxu0
        %v2734 = vadd.f32 0.0, %v2733
        %v2735 = vpop.f32.mrb[0].mxu0
        %v2736 = vpop.f32.mrb[0].mxu0
        %v2737 = vadd.f32 0.0, %v2736
        %v2738 = vpop.f32.mrb[0].mxu0
        %2739 = vmatprep.mubr.bf16.mxu0 0
        %2740 = vmatmul.mubr.bf16.gmra.mrb[0].mxu0 %v2691
        %v2741 = vpop.f32.mrb[0].mxu0
        %v2742 = vadd.f32 0.0, %v2741
        %v2743 = vpop.f32.mrb[0].mxu0
        %v2744 = vpop.f32.mrb[0].mxu0
        %v2745 = vadd.f32 0.0, %v2744
        %v2746 = vpop.f32.mrb[0].mxu0
        %2747 = vmatprep.mubr.bf16.mxu0 0
        %2748 = vmatmul.mubr.bf16.gmra.mrb[0].mxu0 %v2694
        %v2749 = vpop.f32.mrb[0].mxu0
        %v2750 = vadd.f32 0.0, %v2749
        %v2751 = vpop.f32.mrb[0].mxu0
        %v2752 = vpop.f32.mrb[0].mxu0
        %v2753 = vadd.f32 0.0, %v2752
        %v2754 = vpop.f32.mrb[0].mxu0
        %2755 = vmatprep.mubr.bf16.mxu0 0
        %2756 = vmatmul.mubr.bf16.gmra.mrb[0].mxu0 %v2697
        %v2757 = vpop.f32.mrb[0].mxu0
        %v2758 = vadd.f32 0.0, %v2757
        %v2759 = vpop.f32.mrb[0].mxu0
        %v2760 = vpop.f32.mrb[0].mxu0
        %v2761 = vadd.f32 0.0, %v2760
        %v2762 = vpop.f32.mrb[0].mxu0
        %2763 = vdwg.mxu0
        %v2764 = vtanh.pop %v2675
        %v2765 = vtanh.pop %v2676
        %v2766 = vtanh.pop %v2677
        %v2767 = vtanh.pop %v2678
        %v2768 = vtanh.pop %v2679
        %v2769 = vtanh.pop %v2680
        %v2770 = vtanh.pop %v2681
        %v2771 = vtanh.pop %v2682
        %v2772 = vxor.u32 %v2734, 2147483648
        %v2773 = vxor.u32 %v2737, 2147483648
        %v2774 = vxor.u32 %v2742, 2147483648
        %v2775 = vxor.u32 %v2745, 2147483648
        %v2776 = vxor.u32 %v2750, 2147483648
        %v2777 = vxor.u32 %v2753, 2147483648
        %v2778 = vxor.u32 %v2758, 2147483648
        %v2779 = vxor.u32 %v2761, 2147483648
        %v2780 = vmul.f32 %v2772, 1.442695
        %v2781 = vpow.pop %v2780
        %v2782 = vmul.f32 %v2773, 1.442695
        %v2783 = vpow.pop %v2782
        %v2784 = vmul.f32 %v2774, 1.442695
        %v2785 = vpow.pop %v2784
        %v2786 = vmul.f32 %v2775, 1.442695
        %v2787 = vpow.pop %v2786
        %v2788 = vmul.f32 %v2776, 1.442695
        %v2789 = vpow.pop %v2788
        %v2790 = vmul.f32 %v2777, 1.442695
        %v2791 = vpow.pop %v2790
        %v2792 = vmul.f32 %v2778, 1.442695
        %v2793 = vpow.pop %v2792
        %v2794 = vmul.f32 %v2779, 1.442695
        %v2795 = vpow.pop %v2794
        %v2796 = vadd.f32 %v2781, 1.0
        %v2797 = vadd.f32 %v2783, 1.0
        %v2798 = vadd.f32 %v2785, 1.0
        %v2799 = vadd.f32 %v2787, 1.0
        %v2800 = vadd.f32 %v2789, 1.0
        %v2801 = vadd.f32 %v2791, 1.0
        %v2802 = vadd.f32 %v2793, 1.0
        %v2803 = vadd.f32 %v2795, 1.0
        %v2804 = vrcp.pop %v2796
        %v2805 = vmul.f32 1.0, %v2804
        %v2806 = vrcp.pop %v2797
        %v2807 = vmul.f32 1.0, %v2806
        %v2808 = vrcp.pop %v2798
        %v2809 = vmul.f32 1.0, %v2808
        %v2810 = vrcp.pop %v2799
        %v2811 = vmul.f32 1.0, %v2810
        %v2812 = vrcp.pop %v2800
        %v2813 = vmul.f32 1.0, %v2812
        %v2814 = vrcp.pop %v2801
        %v2815 = vmul.f32 1.0, %v2814
        %v2816 = vrcp.pop %v2802
        %v2817 = vmul.f32 1.0, %v2816
        %v2818 = vrcp.pop %v2803
        %v2819 = vmul.f32 1.0, %v2818
        %v2820 = vmul.f32 %v2764, %v2805
        %v2821 = vmul.f32 %v2765, %v2807
        %v2822 = vmul.f32 %v2766, %v2809
        %v2823 = vmul.f32 %v2767, %v2811
        %v2824 = vmul.f32 %v2768, %v2813
        %v2825 = vmul.f32 %v2769, %v2815
        %v2826 = vmul.f32 %v2770, %v2817
        %v2827 = vmul.f32 %v2771, %v2819
        %v2828 = vpack.c.bf16 %v2821, %v2820
        %v2829 = vpack.c.bf16 %v2823, %v2822
        %v2830 = vpack.c.bf16 %v2825, %v2824
        %v2831 = vpack.c.bf16 %v2827, %v2826
        %s2832 = scalar_lea.vmem %s7, 64
        %v2833 = vld [vmem:[%s2832] sm:$0xf]
        %v2834 = vld [vmem:[%s2832 + $0x4] sm:$0xf]
        %v2835 = vld [vmem:[%s2832 + $0x8] sm:$0xf]
        %v2836 = vld [vmem:[%s2832 + $0xc] sm:$0xf]
        %v2837 = vld [vmem:[%s2832 + $0x10] sm:$0xf]
        %v2838 = vld [vmem:[%s2832 + $0x14] sm:$0xf]
        %v2839 = vld [vmem:[%s2832 + $0x18] sm:$0xf]
        %v2840 = vld [vmem:[%s2832 + $0x1c] sm:$0xf]
        %s2841 = scalar_lea.vmem %s8, 2
        %v2842 = vld [vmem:[%s2841] sm:$0x1]
        %v2844 = vlaneseq
        %v2845 = vshrl.u32 %v2844, 7
        %v2846 = vsub.s32 0, %v2845
        %v2847 = vrot.slane %v2842, %v2846
        %v2857 = vunpack.c.l.b16 %v2833
        %v2858 = vunpack.c.l.b16 %v2834
        %v2859 = vunpack.c.l.b16 %v2835
        %v2860 = vunpack.c.l.b16 %v2836
        %v2861 = vunpack.c.l.b16 %v2837
        %v2862 = vunpack.c.l.b16 %v2838
        %v2863 = vunpack.c.l.b16 %v2839
        %v2864 = vunpack.c.l.b16 %v2840
        %v2865 = vpack.c.b16 %v2858, %v2857
        %v2866 = vpack.c.b16 %v2860, %v2859
        %v2867 = vpack.c.b16 %v2862, %v2861
        %v2868 = vpack.c.b16 %v2864, %v2863
        %v2874 = vsel %vm529, %v2828, 0
        %v2877 = vsel %vm529, %v2829, 0
        %v2880 = vsel %vm529, %v2830, 0
        %v2883 = vsel %vm529, %v2831, 0
        %2885 = vmatprep.subr.bf16.mxu0 0
        %2886 = vmatpush1.bf16.msra.mxu0 %v2865
        %2887 = vmatprep.subr.bf16.mxu0 0
        %2888 = vmatpush1.bf16.msra.mxu0 %v2866
        %2889 = vmatprep.subr.bf16.mxu0 0
        %2890 = vmatpush1.bf16.msra.mxu0 %v2867
        %2891 = vmatprep.subr.bf16.mxu0 0
        %2892 = vmatpush1.bf16.msra.mxu0 %v2868
        %2893 = vmatprep.subr.bf16.mxu0 0
        %2894 = vmatpush1.bf16.msra.mxu0 0
        %2895 = vmatprep.subr.bf16.mxu0 0
        %2896 = vmatpush1.bf16.msra.mxu0 0
        %2897 = vmatprep.subr.bf16.mxu0 0
        %2898 = vmatpush1.bf16.msra.mxu0 0
        %2899 = vmatprep.subr.bf16.mxu0 0
        %2900 = vmatpush1.bf16.msra.mxu0 0
        %2901 = vmatprep.subr.bf16.mxu0 0
        %2902 = vmatpush1.bf16.msra.mxu0 0
        %2903 = vmatprep.subr.bf16.mxu0 0
        %2904 = vmatpush1.bf16.msra.mxu0 0
        %2905 = vmatprep.subr.bf16.mxu0 0
        %2906 = vmatpush1.bf16.msra.mxu0 0
        %2907 = vmatprep.subr.bf16.mxu0 0
        %2908 = vmatpush1.bf16.msra.mxu0 0
        %2909 = vmatprep.subr.bf16.mxu0 0
        %2910 = vmatpush1.bf16.msra.mxu0 0
        %2911 = vmatprep.subr.bf16.mxu0 0
        %2912 = vmatpush1.bf16.msra.mxu0 0
        %2913 = vmatprep.subr.bf16.mxu0 0
        %2914 = vmatpush1.bf16.msra.mxu0 0
        %2915 = vmatprep.subr.bf16.mxu0 0
        %2916 = vmatpush1.bf16.msra.mxu0 0
        %2917 = vmatprep.mubr.bf16.mxu0 0
        %2918 = vmatmul.mubr.bf16.gmra.mrb[0].mxu0 %v2874
        %v2919 = vpop.f32.mrb[0].mxu0
        %v2920 = vadd.f32 %v2847, %v2919
        %v2921 = vpop.f32.mrb[0].mxu0
        %v2922 = vpop.f32.mrb[0].mxu0
        %v2923 = vadd.f32 %v2847, %v2922
        %v2924 = vpop.f32.mrb[0].mxu0
        %2925 = vmatprep.mubr.bf16.mxu0 0
        %2926 = vmatmul.mubr.bf16.gmra.mrb[0].mxu0 %v2877
        %v2927 = vpop.f32.mrb[0].mxu0
        %v2928 = vadd.f32 %v2847, %v2927
        %v2929 = vpop.f32.mrb[0].mxu0
        %v2930 = vpop.f32.mrb[0].mxu0
        %v2931 = vadd.f32 %v2847, %v2930
        %v2932 = vpop.f32.mrb[0].mxu0
        %2933 = vmatprep.mubr.bf16.mxu0 0
        %2934 = vmatmul.mubr.bf16.gmra.mrb[0].mxu0 %v2880
        %v2935 = vpop.f32.mrb[0].mxu0
        %v2936 = vadd.f32 %v2847, %v2935
        %v2937 = vpop.f32.mrb[0].mxu0
        %v2938 = vpop.f32.mrb[0].mxu0
        %v2939 = vadd.f32 %v2847, %v2938
        %v2940 = vpop.f32.mrb[0].mxu0
        %2941 = vmatprep.mubr.bf16.mxu0 0
        %2942 = vmatmul.mubr.bf16.gmra.mrb[0].mxu0 %v2883
        %v2943 = vpop.f32.mrb[0].mxu0
        %v2944 = vadd.f32 %v2847, %v2943
        %v2945 = vpop.f32.mrb[0].mxu0
        %v2946 = vpop.f32.mrb[0].mxu0
        %v2947 = vadd.f32 %v2847, %v2946
        %v2948 = vpop.f32.mrb[0].mxu0
        %2949 = vdwg.mxu0
        %v2950 = vadd.f32 %v2203, %v2920
        %v2951 = vadd.f32 %v2204, %v2923
        %v2952 = vadd.f32 %v2205, %v2928
        %v2953 = vadd.f32 %v2206, %v2931
        %v2954 = vadd.f32 %v2207, %v2936
        %v2955 = vadd.f32 %v2208, %v2939
        %v2956 = vadd.f32 %v2209, %v2944
        %v2957 = vadd.f32 %v2210, %v2947
        %v2958 = vmul.f32 %v2950, %v1446
        %v2959 = vmul.f32 %v2951, %v1446
        %v2960 = vmul.f32 %v2952, %v1446
        %v2961 = vmul.f32 %v2953, %v1446
        %v2962 = vmul.f32 %v2954, %v1446
        %v2963 = vmul.f32 %v2955, %v1446
        %v2964 = vmul.f32 %v2956, %v1446
        %v2965 = vmul.f32 %v2957, %v1446
        %2966 = vst.msk [vmem:[#allocation2 + $0x10] sm:$0xff] %vm529, %v2958
        %2967 = vst.msk [vmem:[#allocation2 + $0x18] sm:$0xff] %vm529, %v2959
        %2968 = vst.msk [vmem:[#allocation2 + $0x20] sm:$0xff] %vm529, %v2960
        %2969 = vst.msk [vmem:[#allocation2 + $0x28] sm:$0xff] %vm529, %v2961
        %2970 = vst.msk [vmem:[#allocation2 + $0x30] sm:$0xff] %vm529, %v2962
        %2971 = vst.msk [vmem:[#allocation2 + $0x38] sm:$0xff] %vm529, %v2963
        %2972 = vst.msk [vmem:[#allocation2 + $0x40] sm:$0xff] %vm529, %v2964
        %2973 = vst.msk [vmem:[#allocation2 + $0x48] sm:$0xff] %vm529, %v2965
        %s2974 = scalar_lea.vmem %s6, 24
        %v2975 = vld [vmem:[%s2974] sm:$0xf]
        %v2976 = vld [vmem:[%s2974 + $0x4] sm:$0xf]
        %s2977 = scalar_lea.vmem %s5, 3
        %v2978 = vld [vmem:[%s2977] sm:$0x1]
        %v2980 = vlaneseq
        %v2981 = vshrl.u32 %v2980, 7
        %v2982 = vsub.s32 0, %v2981
        %v2983 = vrot.slane %v2978, %v2982
        %v2987 = vunpack.c.l.b16 %v2975
        %v2988 = vunpack.c.l.b16 %v2976
        %v2989 = vpack.c.b16 %v2988, %v2987
        %2991 = vmatprep.subr.bf16.mxu0 0
        %2992 = vmatpush1.bf16.msra.mxu0 %v2989
        %2993 = vmatprep.subr.bf16.mxu0 0
        %2994 = vmatpush1.bf16.msra.mxu0 0
        %2995 = vmatprep.subr.bf16.mxu0 0
        %2996 = vmatpush1.bf16.msra.mxu0 0
        %2997 = vmatprep.subr.bf16.mxu0 0
        %2998 = vmatpush1.bf16.msra.mxu0 0
        %2999 = vmatprep.subr.bf16.mxu0 0
        %3000 = vmatpush1.bf16.msra.mxu0 0
        %3001 = vmatprep.subr.bf16.mxu0 0
        %3002 = vmatpush1.bf16.msra.mxu0 0
        %3003 = vmatprep.subr.bf16.mxu0 0
        %3004 = vmatpush1.bf16.msra.mxu0 0
        %3005 = vmatprep.subr.bf16.mxu0 0
        %3006 = vmatpush1.bf16.msra.mxu0 0
        %3007 = vmatprep.subr.bf16.mxu0 0
        %3008 = vmatpush1.bf16.msra.mxu0 0
        %3009 = vmatprep.subr.bf16.mxu0 0
        %3010 = vmatpush1.bf16.msra.mxu0 0
        %3011 = vmatprep.subr.bf16.mxu0 0
        %3012 = vmatpush1.bf16.msra.mxu0 0
        %3013 = vmatprep.subr.bf16.mxu0 0
        %3014 = vmatpush1.bf16.msra.mxu0 0
        %3015 = vmatprep.subr.bf16.mxu0 0
        %3016 = vmatpush1.bf16.msra.mxu0 0
        %3017 = vmatprep.subr.bf16.mxu0 0
        %3018 = vmatpush1.bf16.msra.mxu0 0
        %3019 = vmatprep.subr.bf16.mxu0 0
        %3020 = vmatpush1.bf16.msra.mxu0 0
        %3021 = vmatprep.subr.bf16.mxu0 0
        %3022 = vmatpush1.bf16.msra.mxu0 0
        %3023 = vmatprep.mubr.bf16.mxu0 0
        %3024 = vmatmul.mubr.bf16.gmra.mrb[0].mxu0 %v688
        %v3025 = vpop.f32.mrb[0].mxu0
        %v3026 = vadd.f32 %v2983, %v3025
        %v3027 = vpop.f32.mrb[0].mxu0
        %v3028 = vpop.f32.mrb[0].mxu0
        %v3029 = vadd.f32 %v2983, %v3028
        %v3030 = vpop.f32.mrb[0].mxu0
        %3031 = vmatprep.mubr.bf16.mxu0 0
        %3032 = vmatmul.mubr.bf16.gmra.mrb[0].mxu0 %v691
        %v3033 = vpop.f32.mrb[0].mxu0
        %v3034 = vadd.f32 %v2983, %v3033
        %v3035 = vpop.f32.mrb[0].mxu0
        %v3036 = vpop.f32.mrb[0].mxu0
        %v3037 = vadd.f32 %v2983, %v3036
        %v3038 = vpop.f32.mrb[0].mxu0
        %3039 = vmatprep.mubr.bf16.mxu0 0
        %3040 = vmatmul.mubr.bf16.gmra.mrb[0].mxu0 %v694
        %v3041 = vpop.f32.mrb[0].mxu0
        %v3042 = vadd.f32 %v2983, %v3041
        %v3043 = vpop.f32.mrb[0].mxu0
        %v3044 = vpop.f32.mrb[0].mxu0
        %v3045 = vadd.f32 %v2983, %v3044
        %v3046 = vpop.f32.mrb[0].mxu0
        %3047 = vmatprep.mubr.bf16.mxu0 0
        %3048 = vmatmul.mubr.bf16.gmra.mrb[0].mxu0 %v697
        %v3049 = vpop.f32.mrb[0].mxu0
        %v3050 = vadd.f32 %v2983, %v3049
        %v3051 = vpop.f32.mrb[0].mxu0
        %v3052 = vpop.f32.mrb[0].mxu0
        %v3053 = vadd.f32 %v2983, %v3052
        %v3054 = vpop.f32.mrb[0].mxu0
        %3055 = vdwg.mxu0
        %v3056 = vld [vmem:[#allocation2] sm:$0xff]
        %v3057 = vld [vmem:[#allocation2 + $0x8] sm:$0xff]
        %v3058 = vld [vmem:[#allocation2 + $0x10] sm:$0xff]
        %v3059 = vld [vmem:[#allocation2 + $0x18] sm:$0xff]
        %v3060 = vld [vmem:[#allocation2 + $0x20] sm:$0xff]
        %v3061 = vld [vmem:[#allocation2 + $0x28] sm:$0xff]
        %v3062 = vld [vmem:[#allocation2 + $0x30] sm:$0xff]
        %v3063 = vld [vmem:[#allocation2 + $0x38] sm:$0xff]
        %v3064 = vpack.c.bf16 %v3057, %v3056
        %v3065 = vpack.c.bf16 %v3059, %v3058
        %v3066 = vpack.c.bf16 %v3061, %v3060
        %v3067 = vpack.c.bf16 %v3063, %v3062
        %s3068 = scalar_lea.vmem [#allocation3], 288
        %v3069 = vld [vmem:[%s3068] sm:$0xf]
        %v3070 = vld [vmem:[%s3068 + $0x4] sm:$0xf]
        %v3071 = vld [vmem:[%s3068 + $0x8] sm:$0xf]
        %v3072 = vld [vmem:[%s3068 + $0xc] sm:$0xf]
        %v3073 = vld [vmem:[%s3068 + $0x10] sm:$0xf]
        %v3074 = vld [vmem:[%s3068 + $0x14] sm:$0xf]
        %v3075 = vld [vmem:[%s3068 + $0x18] sm:$0xf]
        %v3076 = vld [vmem:[%s3068 + $0x1c] sm:$0xf]
        %v3085 = vunpack.c.l.b16 %v3069
        %v3086 = vunpack.c.l.b16 %v3070
        %v3087 = vunpack.c.l.b16 %v3071
        %v3088 = vunpack.c.l.b16 %v3072
        %v3089 = vunpack.c.l.b16 %v3073
        %v3090 = vunpack.c.l.b16 %v3074
        %v3091 = vunpack.c.l.b16 %v3075
        %v3092 = vunpack.c.l.b16 %v3076
        %v3093 = vpack.c.b16 %v3086, %v3085
        %v3094 = vpack.c.b16 %v3088, %v3087
        %v3095 = vpack.c.b16 %v3090, %v3089
        %v3096 = vpack.c.b16 %v3092, %v3091
        %v3102 = vsel %vm529, %v3064, 0
        %v3105 = vsel %vm529, %v3065, 0
        %v3108 = vsel %vm529, %v3066, 0
        %v3111 = vsel %vm529, %v3067, 0
        %3113 = vmatprep.subr.bf16.mxu0 0
        %3114 = vmatpush1.bf16.msra.mxu0 %v3093
        %3115 = vmatprep.subr.bf16.mxu0 0
        %3116 = vmatpush1.bf16.msra.mxu0 %v3094
        %3117 = vmatprep.subr.bf16.mxu0 0
        %3118 = vmatpush1.bf16.msra.mxu0 %v3095
        %3119 = vmatprep.subr.bf16.mxu0 0
        %3120 = vmatpush1.bf16.msra.mxu0 %v3096
        %3121 = vmatprep.subr.bf16.mxu0 0
        %3122 = vmatpush1.bf16.msra.mxu0 0
        %3123 = vmatprep.subr.bf16.mxu0 0
        %3124 = vmatpush1.bf16.msra.mxu0 0
        %3125 = vmatprep.subr.bf16.mxu0 0
        %3126 = vmatpush1.bf16.msra.mxu0 0
        %3127 = vmatprep.subr.bf16.mxu0 0
        %3128 = vmatpush1.bf16.msra.mxu0 0
        %3129 = vmatprep.subr.bf16.mxu0 0
        %3130 = vmatpush1.bf16.msra.mxu0 0
        %3131 = vmatprep.subr.bf16.mxu0 0
        %3132 = vmatpush1.bf16.msra.mxu0 0
        %3133 = vmatprep.subr.bf16.mxu0 0
        %3134 = vmatpush1.bf16.msra.mxu0 0
        %3135 = vmatprep.subr.bf16.mxu0 0
        %3136 = vmatpush1.bf16.msra.mxu0 0
        %3137 = vmatprep.subr.bf16.mxu0 0
        %3138 = vmatpush1.bf16.msra.mxu0 0
        %3139 = vmatprep.subr.bf16.mxu0 0
        %3140 = vmatpush1.bf16.msra.mxu0 0
        %3141 = vmatprep.subr.bf16.mxu0 0
        %3142 = vmatpush1.bf16.msra.mxu0 0
        %3143 = vmatprep.subr.bf16.mxu0 0
        %3144 = vmatpush1.bf16.msra.mxu0 0
        %3145 = vmatprep.mubr.bf16.mxu0 0
        %3146 = vmatmul.mubr.bf16.gmra.mrb[0].mxu0 %v3102
        %v3147 = vpop.f32.mrb[0].mxu0
        %v3148 = vadd.f32 0.0, %v3147
        %v3149 = vpop.f32.mrb[0].mxu0
        %v3150 = vpop.f32.mrb[0].mxu0
        %v3151 = vadd.f32 0.0, %v3150
        %v3152 = vpop.f32.mrb[0].mxu0
        %3153 = vmatprep.mubr.bf16.mxu0 0
        %3154 = vmatmul.mubr.bf16.gmra.mrb[0].mxu0 %v3105
        %v3155 = vpop.f32.mrb[0].mxu0
        %v3156 = vadd.f32 0.0, %v3155
        %v3157 = vpop.f32.mrb[0].mxu0
        %v3158 = vpop.f32.mrb[0].mxu0
        %v3159 = vadd.f32 0.0, %v3158
        %v3160 = vpop.f32.mrb[0].mxu0
        %3161 = vmatprep.mubr.bf16.mxu0 0
        %3162 = vmatmul.mubr.bf16.gmra.mrb[0].mxu0 %v3108
        %v3163 = vpop.f32.mrb[0].mxu0
        %v3164 = vadd.f32 0.0, %v3163
        %v3165 = vpop.f32.mrb[0].mxu0
        %v3166 = vpop.f32.mrb[0].mxu0
        %v3167 = vadd.f32 0.0, %v3166
        %v3168 = vpop.f32.mrb[0].mxu0
        %3169 = vmatprep.mubr.bf16.mxu0 0
        %3170 = vmatmul.mubr.bf16.gmra.mrb[0].mxu0 %v3111
        %v3171 = vpop.f32.mrb[0].mxu0
        %v3172 = vadd.f32 0.0, %v3171
        %v3173 = vpop.f32.mrb[0].mxu0
        %v3174 = vpop.f32.mrb[0].mxu0
        %v3175 = vadd.f32 0.0, %v3174
        %v3176 = vpop.f32.mrb[0].mxu0
        %3177 = vdwg.mxu0
        %v3178 = vadd.f32 %v3026, %v3148
        %v3179 = vadd.f32 %v3029, %v3151
        %v3180 = vadd.f32 %v3034, %v3156
        %v3181 = vadd.f32 %v3037, %v3159
        %v3182 = vadd.f32 %v3042, %v3164
        %v3183 = vadd.f32 %v3045, %v3167
        %v3184 = vadd.f32 %v3050, %v3172
        %v3185 = vadd.f32 %v3053, %v3175
        %v3186 = vld [vmem:[#allocation2 + $0x8] sm:$0xff]
        %v3187 = vld [vmem:[#allocation2 + $0x10] sm:$0xff]
        %v3188 = vld [vmem:[#allocation2 + $0x18] sm:$0xff]
        %v3189 = vld [vmem:[#allocation2 + $0x20] sm:$0xff]
        %v3190 = vld [vmem:[#allocation2 + $0x28] sm:$0xff]
        %v3191 = vld [vmem:[#allocation2 + $0x30] sm:$0xff]
        %v3192 = vld [vmem:[#allocation2 + $0x38] sm:$0xff]
        %v3193 = vld [vmem:[#allocation2 + $0x40] sm:$0xff]
        %v3194 = vpack.c.bf16 %v3187, %v3186
        %v3195 = vpack.c.bf16 %v3189, %v3188
        %v3196 = vpack.c.bf16 %v3191, %v3190
        %v3197 = vpack.c.bf16 %v3193, %v3192
        %s3198 = scalar_lea.vmem [#allocation3], 320
        %v3199 = vld [vmem:[%s3198] sm:$0xf]
        %v3200 = vld [vmem:[%s3198 + $0x4] sm:$0xf]
        %v3201 = vld [vmem:[%s3198 + $0x8] sm:$0xf]
        %v3202 = vld [vmem:[%s3198 + $0xc] sm:$0xf]
        %v3203 = vld [vmem:[%s3198 + $0x10] sm:$0xf]
        %v3204 = vld [vmem:[%s3198 + $0x14] sm:$0xf]
        %v3205 = vld [vmem:[%s3198 + $0x18] sm:$0xf]
        %v3206 = vld [vmem:[%s3198 + $0x1c] sm:$0xf]
        %v3215 = vunpack.c.l.b16 %v3199
        %v3216 = vunpack.c.l.b16 %v3200
        %v3217 = vunpack.c.l.b16 %v3201
        %v3218 = vunpack.c.l.b16 %v3202
        %v3219 = vunpack.c.l.b16 %v3203
        %v3220 = vunpack.c.l.b16 %v3204
        %v3221 = vunpack.c.l.b16 %v3205
        %v3222 = vunpack.c.l.b16 %v3206
        %v3223 = vpack.c.b16 %v3216, %v3215
        %v3224 = vpack.c.b16 %v3218, %v3217
        %v3225 = vpack.c.b16 %v3220, %v3219
        %v3226 = vpack.c.b16 %v3222, %v3221
        %v3232 = vsel %vm529, %v3194, 0
        %v3235 = vsel %vm529, %v3195, 0
        %v3238 = vsel %vm529, %v3196, 0
        %v3241 = vsel %vm529, %v3197, 0
        %3243 = vmatprep.subr.bf16.mxu0 0
        %3244 = vmatpush1.bf16.msra.mxu0 %v3223
        %3245 = vmatprep.subr.bf16.mxu0 0
        %3246 = vmatpush1.bf16.msra.mxu0 %v3224
        %3247 = vmatprep.subr.bf16.mxu0 0
        %3248 = vmatpush1.bf16.msra.mxu0 %v3225
        %3249 = vmatprep.subr.bf16.mxu0 0
        %3250 = vmatpush1.bf16.msra.mxu0 %v3226
        %3251 = vmatprep.subr.bf16.mxu0 0
        %3252 = vmatpush1.bf16.msra.mxu0 0
        %3253 = vmatprep.subr.bf16.mxu0 0
        %3254 = vmatpush1.bf16.msra.mxu0 0
        %3255 = vmatprep.subr.bf16.mxu0 0
        %3256 = vmatpush1.bf16.msra.mxu0 0
        %3257 = vmatprep.subr.bf16.mxu0 0
        %3258 = vmatpush1.bf16.msra.mxu0 0
        %3259 = vmatprep.subr.bf16.mxu0 0
        %3260 = vmatpush1.bf16.msra.mxu0 0
        %3261 = vmatprep.subr.bf16.mxu0 0
        %3262 = vmatpush1.bf16.msra.mxu0 0
        %3263 = vmatprep.subr.bf16.mxu0 0
        %3264 = vmatpush1.bf16.msra.mxu0 0
        %3265 = vmatprep.subr.bf16.mxu0 0
        %3266 = vmatpush1.bf16.msra.mxu0 0
        %3267 = vmatprep.subr.bf16.mxu0 0
        %3268 = vmatpush1.bf16.msra.mxu0 0
        %3269 = vmatprep.subr.bf16.mxu0 0
        %3270 = vmatpush1.bf16.msra.mxu0 0
        %3271 = vmatprep.subr.bf16.mxu0 0
        %3272 = vmatpush1.bf16.msra.mxu0 0
        %3273 = vmatprep.subr.bf16.mxu0 0
        %3274 = vmatpush1.bf16.msra.mxu0 0
        %3275 = vmatprep.mubr.bf16.mxu0 0
        %3276 = vmatmul.mubr.bf16.gmra.mrb[0].mxu0 %v3232
        %v3277 = vpop.f32.mrb[0].mxu0
        %v3278 = vadd.f32 0.0, %v3277
        %v3279 = vpop.f32.mrb[0].mxu0
        %v3280 = vpop.f32.mrb[0].mxu0
        %v3281 = vadd.f32 0.0, %v3280
        %v3282 = vpop.f32.mrb[0].mxu0
        %3283 = vmatprep.mubr.bf16.mxu0 0
        %3284 = vmatmul.mubr.bf16.gmra.mrb[0].mxu0 %v3235
        %v3285 = vpop.f32.mrb[0].mxu0
        %v3286 = vadd.f32 0.0, %v3285
        %v3287 = vpop.f32.mrb[0].mxu0
        %v3288 = vpop.f32.mrb[0].mxu0
        %v3289 = vadd.f32 0.0, %v3288
        %v3290 = vpop.f32.mrb[0].mxu0
        %3291 = vmatprep.mubr.bf16.mxu0 0
        %3292 = vmatmul.mubr.bf16.gmra.mrb[0].mxu0 %v3238
        %v3293 = vpop.f32.mrb[0].mxu0
        %v3294 = vadd.f32 0.0, %v3293
        %v3295 = vpop.f32.mrb[0].mxu0
        %v3296 = vpop.f32.mrb[0].mxu0
        %v3297 = vadd.f32 0.0, %v3296
        %v3298 = vpop.f32.mrb[0].mxu0
        %3299 = vmatprep.mubr.bf16.mxu0 0
        %3300 = vmatmul.mubr.bf16.gmra.mrb[0].mxu0 %v3241
        %v3301 = vpop.f32.mrb[0].mxu0
        %v3302 = vadd.f32 0.0, %v3301
        %v3303 = vpop.f32.mrb[0].mxu0
        %v3304 = vpop.f32.mrb[0].mxu0
        %v3305 = vadd.f32 0.0, %v3304
        %v3306 = vpop.f32.mrb[0].mxu0
        %3307 = vdwg.mxu0
        %v3308 = vadd.f32 %v3178, %v3278
        %v3309 = vadd.f32 %v3179, %v3281
        %v3310 = vadd.f32 %v3180, %v3286
        %v3311 = vadd.f32 %v3181, %v3289
        %v3312 = vadd.f32 %v3182, %v3294
        %v3313 = vadd.f32 %v3183, %v3297
        %v3314 = vadd.f32 %v3184, %v3302
        %v3315 = vadd.f32 %v3185, %v3305
        %v3316 = vpack.c.bf16 %v2959, %v2958
        %v3317 = vpack.c.bf16 %v2961, %v2960
        %v3318 = vpack.c.bf16 %v2963, %v2962
        %v3319 = vpack.c.bf16 %v2965, %v2964
        %s3320 = scalar_lea.vmem [#allocation3], 352
        %v3321 = vld [vmem:[%s3320] sm:$0xf]
        %v3322 = vld [vmem:[%s3320 + $0x4] sm:$0xf]
        %v3323 = vld [vmem:[%s3320 + $0x8] sm:$0xf]
        %v3324 = vld [vmem:[%s3320 + $0xc] sm:$0xf]
        %v3325 = vld [vmem:[%s3320 + $0x10] sm:$0xf]
        %v3326 = vld [vmem:[%s3320 + $0x14] sm:$0xf]
        %v3327 = vld [vmem:[%s3320 + $0x18] sm:$0xf]
        %v3328 = vld [vmem:[%s3320 + $0x1c] sm:$0xf]
        %v3337 = vunpack.c.l.b16 %v3321
        %v3338 = vunpack.c.l.b16 %v3322
        %v3339 = vunpack.c.l.b16 %v3323
        %v3340 = vunpack.c.l.b16 %v3324
        %v3341 = vunpack.c.l.b16 %v3325
        %v3342 = vunpack.c.l.b16 %v3326
        %v3343 = vunpack.c.l.b16 %v3327
        %v3344 = vunpack.c.l.b16 %v3328
        %v3345 = vpack.c.b16 %v3338, %v3337
        %v3346 = vpack.c.b16 %v3340, %v3339
        %v3347 = vpack.c.b16 %v3342, %v3341
        %v3348 = vpack.c.b16 %v3344, %v3343
        %v3354 = vsel %vm529, %v3316, 0
        %v3357 = vsel %vm529, %v3317, 0
        %v3360 = vsel %vm529, %v3318, 0
        %v3363 = vsel %vm529, %v3319, 0
        %3365 = vmatprep.subr.bf16.mxu0 0
        %3366 = vmatpush1.bf16.msra.mxu0 %v3345
        %3367 = vmatprep.subr.bf16.mxu0 0
        %3368 = vmatpush1.bf16.msra.mxu0 %v3346
        %3369 = vmatprep.subr.bf16.mxu0 0
        %3370 = vmatpush1.bf16.msra.mxu0 %v3347
        %3371 = vmatprep.subr.bf16.mxu0 0
        %3372 = vmatpush1.bf16.msra.mxu0 %v3348
        %3373 = vmatprep.subr.bf16.mxu0 0
        %3374 = vmatpush1.bf16.msra.mxu0 0
        %3375 = vmatprep.subr.bf16.mxu0 0
        %3376 = vmatpush1.bf16.msra.mxu0 0
        %3377 = vmatprep.subr.bf16.mxu0 0
        %3378 = vmatpush1.bf16.msra.mxu0 0
        %3379 = vmatprep.subr.bf16.mxu0 0
        %3380 = vmatpush1.bf16.msra.mxu0 0
        %3381 = vmatprep.subr.bf16.mxu0 0
        %3382 = vmatpush1.bf16.msra.mxu0 0
        %3383 = vmatprep.subr.bf16.mxu0 0
        %3384 = vmatpush1.bf16.msra.mxu0 0
        %3385 = vmatprep.subr.bf16.mxu0 0
        %3386 = vmatpush1.bf16.msra.mxu0 0
        %3387 = vmatprep.subr.bf16.mxu0 0
        %3388 = vmatpush1.bf16.msra.mxu0 0
        %3389 = vmatprep.subr.bf16.mxu0 0
        %3390 = vmatpush1.bf16.msra.mxu0 0
        %3391 = vmatprep.subr.bf16.mxu0 0
        %3392 = vmatpush1.bf16.msra.mxu0 0
        %3393 = vmatprep.subr.bf16.mxu0 0
        %3394 = vmatpush1.bf16.msra.mxu0 0
        %3395 = vmatprep.subr.bf16.mxu0 0
        %3396 = vmatpush1.bf16.msra.mxu0 0
        %3397 = vmatprep.mubr.bf16.mxu0 0
        %3398 = vmatmul.mubr.bf16.gmra.mrb[0].mxu0 %v3354
        %v3399 = vpop.f32.mrb[0].mxu0
        %v3400 = vadd.f32 0.0, %v3399
        %v3401 = vpop.f32.mrb[0].mxu0
        %v3402 = vpop.f32.mrb[0].mxu0
        %v3403 = vadd.f32 0.0, %v3402
        %v3404 = vpop.f32.mrb[0].mxu0
        %3405 = vmatprep.mubr.bf16.mxu0 0
        %3406 = vmatmul.mubr.bf16.gmra.mrb[0].mxu0 %v3357
        %v3407 = vpop.f32.mrb[0].mxu0
        %v3408 = vadd.f32 0.0, %v3407
        %v3409 = vpop.f32.mrb[0].mxu0
        %v3410 = vpop.f32.mrb[0].mxu0
        %v3411 = vadd.f32 0.0, %v3410
        %v3412 = vpop.f32.mrb[0].mxu0
        %3413 = vmatprep.mubr.bf16.mxu0 0
        %3414 = vmatmul.mubr.bf16.gmra.mrb[0].mxu0 %v3360
        %v3415 = vpop.f32.mrb[0].mxu0
        %v3416 = vadd.f32 0.0, %v3415
        %v3417 = vpop.f32.mrb[0].mxu0
        %v3418 = vpop.f32.mrb[0].mxu0
        %v3419 = vadd.f32 0.0, %v3418
        %v3420 = vpop.f32.mrb[0].mxu0
        %3421 = vmatprep.mubr.bf16.mxu0 0
        %3422 = vmatmul.mubr.bf16.gmra.mrb[0].mxu0 %v3363
        %v3423 = vpop.f32.mrb[0].mxu0
        %v3424 = vadd.f32 0.0, %v3423
        %v3425 = vpop.f32.mrb[0].mxu0
        %v3426 = vpop.f32.mrb[0].mxu0
        %v3427 = vadd.f32 0.0, %v3426
        %v3428 = vpop.f32.mrb[0].mxu0
        %3429 = vdwg.mxu0
        %v3430 = vadd.f32 %v3308, %v3400
        %v3431 = vadd.f32 %v3309, %v3403
        %v3432 = vadd.f32 %v3310, %v3408
        %v3433 = vadd.f32 %v3311, %v3411
        %v3434 = vadd.f32 %v3312, %v3416
        %v3435 = vadd.f32 %v3313, %v3419
        %v3436 = vadd.f32 %v3314, %v3424
        %v3437 = vadd.f32 %v3315, %v3427
        %v3438 = vpack.c.bf16 %v3431, %v3430
        %v3439 = vpack.c.bf16 %v3433, %v3432
        %v3440 = vpack.c.bf16 %v3435, %v3434
        %v3441 = vpack.c.bf16 %v3437, %v3436
        %v3443 = vsel %vm529, %v3438, 0
        %v3446 = vsel %vm529, %v3439, 0
        %v3449 = vsel %vm529, %v3440, 0
        %v3452 = vsel %vm529, %v3441, 0
        %3454 = vmatprep.subr.bf16.mxu0 0
        %3455 = vmatpush1.bf16.msra.mxu0 %v1165
        %3456 = vmatprep.subr.bf16.mxu0 0
        %3457 = vmatpush1.bf16.msra.mxu0 %v1166
        %3458 = vmatprep.subr.bf16.mxu0 0
        %3459 = vmatpush1.bf16.msra.mxu0 %v1167
        %3460 = vmatprep.subr.bf16.mxu0 0
        %3461 = vmatpush1.bf16.msra.mxu0 %v1168
        %3462 = vmatprep.subr.bf16.mxu0 0
        %3463 = vmatpush1.bf16.msra.mxu0 0
        %3464 = vmatprep.subr.bf16.mxu0 0
        %3465 = vmatpush1.bf16.msra.mxu0 0
        %3466 = vmatprep.subr.bf16.mxu0 0
        %3467 = vmatpush1.bf16.msra.mxu0 0
        %3468 = vmatprep.subr.bf16.mxu0 0
        %3469 = vmatpush1.bf16.msra.mxu0 0
        %3470 = vmatprep.subr.bf16.mxu0 0
        %3471 = vmatpush1.bf16.msra.mxu0 0
        %3472 = vmatprep.subr.bf16.mxu0 0
        %3473 = vmatpush1.bf16.msra.mxu0 0
        %3474 = vmatprep.subr.bf16.mxu0 0
        %3475 = vmatpush1.bf16.msra.mxu0 0
        %3476 = vmatprep.subr.bf16.mxu0 0
        %3477 = vmatpush1.bf16.msra.mxu0 0
        %3478 = vmatprep.subr.bf16.mxu0 0
        %3479 = vmatpush1.bf16.msra.mxu0 0
        %3480 = vmatprep.subr.bf16.mxu0 0
        %3481 = vmatpush1.bf16.msra.mxu0 0
        %3482 = vmatprep.subr.bf16.mxu0 0
        %3483 = vmatpush1.bf16.msra.mxu0 0
        %3484 = vmatprep.subr.bf16.mxu0 0
        %3485 = vmatpush1.bf16.msra.mxu0 0
        %3486 = vmatprep.mubr.bf16.mxu0 0
        %3487 = vmatmul.mubr.bf16.gmra.mrb[0].mxu0 %v3443
        %v3488 = vpop.f32.mrb[0].mxu0
        %v3489 = vadd.f32 0.0, %v3488
        %v3490 = vpop.f32.mrb[0].mxu0
        %v3491 = vpop.f32.mrb[0].mxu0
        %v3492 = vadd.f32 0.0, %v3491
        %v3493 = vpop.f32.mrb[0].mxu0
        %3494 = vmatprep.mubr.bf16.mxu0 0
        %3495 = vmatmul.mubr.bf16.gmra.mrb[0].mxu0 %v3446
        %v3496 = vpop.f32.mrb[0].mxu0
        %v3497 = vadd.f32 0.0, %v3496
        %v3498 = vpop.f32.mrb[0].mxu0
        %v3499 = vpop.f32.mrb[0].mxu0
        %v3500 = vadd.f32 0.0, %v3499
        %v3501 = vpop.f32.mrb[0].mxu0
        %3502 = vmatprep.mubr.bf16.mxu0 0
        %3503 = vmatmul.mubr.bf16.gmra.mrb[0].mxu0 %v3449
        %v3504 = vpop.f32.mrb[0].mxu0
        %v3505 = vadd.f32 0.0, %v3504
        %v3506 = vpop.f32.mrb[0].mxu0
        %v3507 = vpop.f32.mrb[0].mxu0
        %v3508 = vadd.f32 0.0, %v3507
        %v3509 = vpop.f32.mrb[0].mxu0
        %3510 = vmatprep.mubr.bf16.mxu0 0
        %3511 = vmatmul.mubr.bf16.gmra.mrb[0].mxu0 %v3452
        %v3512 = vpop.f32.mrb[0].mxu0
        %v3513 = vadd.f32 0.0, %v3512
        %v3514 = vpop.f32.mrb[0].mxu0
        %v3515 = vpop.f32.mrb[0].mxu0
        %v3516 = vadd.f32 0.0, %v3515
        %v3517 = vpop.f32.mrb[0].mxu0
        %3518 = vdwg.mxu0
        %v3519 = vtanh.pop %v3430
        %v3520 = vtanh.pop %v3431
        %v3521 = vtanh.pop %v3432
        %v3522 = vtanh.pop %v3433
        %v3523 = vtanh.pop %v3434
        %v3524 = vtanh.pop %v3435
        %v3525 = vtanh.pop %v3436
        %v3526 = vtanh.pop %v3437
        %v3527 = vxor.u32 %v3489, 2147483648
        %v3528 = vxor.u32 %v3492, 2147483648
        %v3529 = vxor.u32 %v3497, 2147483648
        %v3530 = vxor.u32 %v3500, 2147483648
        %v3531 = vxor.u32 %v3505, 2147483648
        %v3532 = vxor.u32 %v3508, 2147483648
        %v3533 = vxor.u32 %v3513, 2147483648
        %v3534 = vxor.u32 %v3516, 2147483648
        %v3535 = vmul.f32 %v3527, 1.442695
        %v3536 = vpow.pop %v3535
        %v3537 = vmul.f32 %v3528, 1.442695
        %v3538 = vpow.pop %v3537
        %v3539 = vmul.f32 %v3529, 1.442695
        %v3540 = vpow.pop %v3539
        %v3541 = vmul.f32 %v3530, 1.442695
        %v3542 = vpow.pop %v3541
        %v3543 = vmul.f32 %v3531, 1.442695
        %v3544 = vpow.pop %v3543
        %v3545 = vmul.f32 %v3532, 1.442695
        %v3546 = vpow.pop %v3545
        %v3547 = vmul.f32 %v3533, 1.442695
        %v3548 = vpow.pop %v3547
        %v3549 = vmul.f32 %v3534, 1.442695
        %v3550 = vpow.pop %v3549
        %v3551 = vadd.f32 %v3536, 1.0
        %v3552 = vadd.f32 %v3538, 1.0
        %v3553 = vadd.f32 %v3540, 1.0
        %v3554 = vadd.f32 %v3542, 1.0
        %v3555 = vadd.f32 %v3544, 1.0
        %v3556 = vadd.f32 %v3546, 1.0
        %v3557 = vadd.f32 %v3548, 1.0
        %v3558 = vadd.f32 %v3550, 1.0
        %v3559 = vrcp.pop %v3551
        %v3560 = vmul.f32 1.0, %v3559
        %v3561 = vrcp.pop %v3552
        %v3562 = vmul.f32 1.0, %v3561
        %v3563 = vrcp.pop %v3553
        %v3564 = vmul.f32 1.0, %v3563
        %v3565 = vrcp.pop %v3554
        %v3566 = vmul.f32 1.0, %v3565
        %v3567 = vrcp.pop %v3555
        %v3568 = vmul.f32 1.0, %v3567
        %v3569 = vrcp.pop %v3556
        %v3570 = vmul.f32 1.0, %v3569
        %v3571 = vrcp.pop %v3557
        %v3572 = vmul.f32 1.0, %v3571
        %v3573 = vrcp.pop %v3558
        %v3574 = vmul.f32 1.0, %v3573
        %v3575 = vmul.f32 %v3519, %v3560
        %v3576 = vmul.f32 %v3520, %v3562
        %v3577 = vmul.f32 %v3521, %v3564
        %v3578 = vmul.f32 %v3522, %v3566
        %v3579 = vmul.f32 %v3523, %v3568
        %v3580 = vmul.f32 %v3524, %v3570
        %v3581 = vmul.f32 %v3525, %v3572
        %v3582 = vmul.f32 %v3526, %v3574
        %v3583 = vpack.c.bf16 %v3576, %v3575
        %v3584 = vpack.c.bf16 %v3578, %v3577
        %v3585 = vpack.c.bf16 %v3580, %v3579
        %v3586 = vpack.c.bf16 %v3582, %v3581
        %s3587 = scalar_lea.vmem %s7, 96
        %v3588 = vld [vmem:[%s3587] sm:$0xf]
        %v3589 = vld [vmem:[%s3587 + $0x4] sm:$0xf]
        %v3590 = vld [vmem:[%s3587 + $0x8] sm:$0xf]
        %v3591 = vld [vmem:[%s3587 + $0xc] sm:$0xf]
        %v3592 = vld [vmem:[%s3587 + $0x10] sm:$0xf]
        %v3593 = vld [vmem:[%s3587 + $0x14] sm:$0xf]
        %v3594 = vld [vmem:[%s3587 + $0x18] sm:$0xf]
        %v3595 = vld [vmem:[%s3587 + $0x1c] sm:$0xf]
        %s3596 = scalar_lea.vmem %s8, 3
        %v3597 = vld [vmem:[%s3596] sm:$0x1]
        %v3599 = vlaneseq
        %v3600 = vshrl.u32 %v3599, 7
        %v3601 = vsub.s32 0, %v3600
        %v3602 = vrot.slane %v3597, %v3601
        %v3612 = vunpack.c.l.b16 %v3588
        %v3613 = vunpack.c.l.b16 %v3589
        %v3614 = vunpack.c.l.b16 %v3590
        %v3615 = vunpack.c.l.b16 %v3591
        %v3616 = vunpack.c.l.b16 %v3592
        %v3617 = vunpack.c.l.b16 %v3593
        %v3618 = vunpack.c.l.b16 %v3594
        %v3619 = vunpack.c.l.b16 %v3595
        %v3620 = vpack.c.b16 %v3613, %v3612
        %v3621 = vpack.c.b16 %v3615, %v3614
        %v3622 = vpack.c.b16 %v3617, %v3616
        %v3623 = vpack.c.b16 %v3619, %v3618
        %v3629 = vsel %vm529, %v3583, 0
        %v3632 = vsel %vm529, %v3584, 0
        %v3635 = vsel %vm529, %v3585, 0
        %v3638 = vsel %vm529, %v3586, 0
        %3640 = vmatprep.subr.bf16.mxu0 0
        %3641 = vmatpush1.bf16.msra.mxu0 %v3620
        %3642 = vmatprep.subr.bf16.mxu0 0
        %3643 = vmatpush1.bf16.msra.mxu0 %v3621
        %3644 = vmatprep.subr.bf16.mxu0 0
        %3645 = vmatpush1.bf16.msra.mxu0 %v3622
        %3646 = vmatprep.subr.bf16.mxu0 0
        %3647 = vmatpush1.bf16.msra.mxu0 %v3623
        %3648 = vmatprep.subr.bf16.mxu0 0
        %3649 = vmatpush1.bf16.msra.mxu0 0
        %3650 = vmatprep.subr.bf16.mxu0 0
        %3651 = vmatpush1.bf16.msra.mxu0 0
        %3652 = vmatprep.subr.bf16.mxu0 0
        %3653 = vmatpush1.bf16.msra.mxu0 0
        %3654 = vmatprep.subr.bf16.mxu0 0
        %3655 = vmatpush1.bf16.msra.mxu0 0
        %3656 = vmatprep.subr.bf16.mxu0 0
        %3657 = vmatpush1.bf16.msra.mxu0 0
        %3658 = vmatprep.subr.bf16.mxu0 0
        %3659 = vmatpush1.bf16.msra.mxu0 0
        %3660 = vmatprep.subr.bf16.mxu0 0
        %3661 = vmatpush1.bf16.msra.mxu0 0
        %3662 = vmatprep.subr.bf16.mxu0 0
        %3663 = vmatpush1.bf16.msra.mxu0 0
        %3664 = vmatprep.subr.bf16.mxu0 0
        %3665 = vmatpush1.bf16.msra.mxu0 0
        %3666 = vmatprep.subr.bf16.mxu0 0
        %3667 = vmatpush1.bf16.msra.mxu0 0
        %3668 = vmatprep.subr.bf16.mxu0 0
        %3669 = vmatpush1.bf16.msra.mxu0 0
        %3670 = vmatprep.subr.bf16.mxu0 0
        %3671 = vmatpush1.bf16.msra.mxu0 0
        %3672 = vmatprep.mubr.bf16.mxu0 0
        %3673 = vmatmul.mubr.bf16.gmra.mrb[0].mxu0 %v3629
        %v3674 = vpop.f32.mrb[0].mxu0
        %v3675 = vadd.f32 %v3602, %v3674
        %v3676 = vpop.f32.mrb[0].mxu0
        %v3677 = vpop.f32.mrb[0].mxu0
        %v3678 = vadd.f32 %v3602, %v3677
        %v3679 = vpop.f32.mrb[0].mxu0
        %3680 = vmatprep.mubr.bf16.mxu0 0
        %3681 = vmatmul.mubr.bf16.gmra.mrb[0].mxu0 %v3632
        %v3682 = vpop.f32.mrb[0].mxu0
        %v3683 = vadd.f32 %v3602, %v3682
        %v3684 = vpop.f32.mrb[0].mxu0
        %v3685 = vpop.f32.mrb[0].mxu0
        %v3686 = vadd.f32 %v3602, %v3685
        %v3687 = vpop.f32.mrb[0].mxu0
        %3688 = vmatprep.mubr.bf16.mxu0 0
        %3689 = vmatmul.mubr.bf16.gmra.mrb[0].mxu0 %v3635
        %v3690 = vpop.f32.mrb[0].mxu0
        %v3691 = vadd.f32 %v3602, %v3690
        %v3692 = vpop.f32.mrb[0].mxu0
        %v3693 = vpop.f32.mrb[0].mxu0
        %v3694 = vadd.f32 %v3602, %v3693
        %v3695 = vpop.f32.mrb[0].mxu0
        %3696 = vmatprep.mubr.bf16.mxu0 0
        %3697 = vmatmul.mubr.bf16.gmra.mrb[0].mxu0 %v3638
        %v3698 = vpop.f32.mrb[0].mxu0
        %v3699 = vadd.f32 %v3602, %v3698
        %v3700 = vpop.f32.mrb[0].mxu0
        %v3701 = vpop.f32.mrb[0].mxu0
        %v3702 = vadd.f32 %v3602, %v3701
        %v3703 = vpop.f32.mrb[0].mxu0
        %3704 = vdwg.mxu0
        %v3705 = vadd.f32 %v2958, %v3675
        %v3706 = vadd.f32 %v2959, %v3678
        %v3707 = vadd.f32 %v2960, %v3683
        %v3708 = vadd.f32 %v2961, %v3686
        %v3709 = vadd.f32 %v2962, %v3691
        %v3710 = vadd.f32 %v2963, %v3694
        %v3711 = vadd.f32 %v2964, %v3699
        %v3712 = vadd.f32 %v2965, %v3702
        %v3713 = vmul.f32 %v3705, %v1446
        %v3714 = vmul.f32 %v3706, %v1446
        %v3715 = vmul.f32 %v3707, %v1446
        %v3716 = vmul.f32 %v3708, %v1446
        %v3717 = vmul.f32 %v3709, %v1446
        %v3718 = vmul.f32 %v3710, %v1446
        %v3719 = vmul.f32 %v3711, %v1446
        %v3720 = vmul.f32 %v3712, %v1446
        %v3721 = vmax.f32 %v3713, 0.0
        %v3722 = vmax.f32 %v3714, 0.0
        %v3723 = vmax.f32 %v3715, 0.0
        %v3724 = vmax.f32 %v3716, 0.0
        %v3725 = vmax.f32 %v3717, 0.0
        %v3726 = vmax.f32 %v3718, 0.0
        %v3727 = vmax.f32 %v3719, 0.0
        %v3728 = vmax.f32 %v3720, 0.0
        %v3729 = vpack.c.bf16 %v3722, %v3721
        %v3730 = vpack.c.bf16 %v3724, %v3723
        %v3731 = vpack.c.bf16 %v3726, %v3725
        %v3732 = vpack.c.bf16 %v3728, %v3727
        %v3733 = vld [vmem:[%s11] sm:$0xf]
        %v3734 = vld [vmem:[%s11 + $0x4] sm:$0xf]
        %v3735 = vld [vmem:[%s11 + $0x8] sm:$0xf]
        %v3736 = vld [vmem:[%s11 + $0xc] sm:$0xf]
        %v3737 = vld [vmem:[%s11 + $0x10] sm:$0xf]
        %v3738 = vld [vmem:[%s11 + $0x14] sm:$0xf]
        %v3739 = vld [vmem:[%s11 + $0x18] sm:$0xf]
        %v3740 = vld [vmem:[%s11 + $0x1c] sm:$0xf]
        %v3741 = vld [vmem:[%s12] sm:$0x1]
        %v3743 = vlaneseq
        %v3744 = vshrl.u32 %v3743, 7
        %v3745 = vsub.s32 0, %v3744
        %v3746 = vrot.slane %v3741, %v3745
        %v3756 = vunpack.c.l.b16 %v3733
        %v3757 = vunpack.c.l.b16 %v3734
        %v3758 = vunpack.c.l.b16 %v3735
        %v3759 = vunpack.c.l.b16 %v3736
        %v3760 = vunpack.c.l.b16 %v3737
        %v3761 = vunpack.c.l.b16 %v3738
        %v3762 = vunpack.c.l.b16 %v3739
        %v3763 = vunpack.c.l.b16 %v3740
        %v3764 = vpack.c.b16 %v3757, %v3756
        %v3765 = vpack.c.b16 %v3759, %v3758
        %v3766 = vpack.c.b16 %v3761, %v3760
        %v3767 = vpack.c.b16 %v3763, %v3762
        %v3773 = vsel %vm529, %v3729, 0
        %v3776 = vsel %vm529, %v3730, 0
        %v3779 = vsel %vm529, %v3731, 0
        %v3782 = vsel %vm529, %v3732, 0
        %3784 = vmatprep.subr.bf16.mxu0 0
        %3785 = vmatpush1.bf16.msra.mxu0 %v3764
        %3786 = vmatprep.subr.bf16.mxu0 0
        %3787 = vmatpush1.bf16.msra.mxu0 %v3765
        %3788 = vmatprep.subr.bf16.mxu0 0
        %3789 = vmatpush1.bf16.msra.mxu0 %v3766
        %3790 = vmatprep.subr.bf16.mxu0 0
        %3791 = vmatpush1.bf16.msra.mxu0 %v3767
        %3792 = vmatprep.subr.bf16.mxu0 0
        %3793 = vmatpush1.bf16.msra.mxu0 0
        %3794 = vmatprep.subr.bf16.mxu0 0
        %3795 = vmatpush1.bf16.msra.mxu0 0
        %3796 = vmatprep.subr.bf16.mxu0 0
        %3797 = vmatpush1.bf16.msra.mxu0 0
        %3798 = vmatprep.subr.bf16.mxu0 0
        %3799 = vmatpush1.bf16.msra.mxu0 0
        %3800 = vmatprep.subr.bf16.mxu0 0
        %3801 = vmatpush1.bf16.msra.mxu0 0
        %3802 = vmatprep.subr.bf16.mxu0 0
        %3803 = vmatpush1.bf16.msra.mxu0 0
        %3804 = vmatprep.subr.bf16.mxu0 0
        %3805 = vmatpush1.bf16.msra.mxu0 0
        %3806 = vmatprep.subr.bf16.mxu0 0
        %3807 = vmatpush1.bf16.msra.mxu0 0
        %3808 = vmatprep.subr.bf16.mxu0 0
        %3809 = vmatpush1.bf16.msra.mxu0 0
        %3810 = vmatprep.subr.bf16.mxu0 0
        %3811 = vmatpush1.bf16.msra.mxu0 0
        %3812 = vmatprep.subr.bf16.mxu0 0
        %3813 = vmatpush1.bf16.msra.mxu0 0
        %3814 = vmatprep.subr.bf16.mxu0 0
        %3815 = vmatpush1.bf16.msra.mxu0 0
        %3816 = vmatprep.mubr.bf16.mxu0 0
        %3817 = vmatmul.mubr.bf16.gmra.mrb[0].mxu0 %v3773
        %v3818 = vpop.f32.mrb[0].mxu0
        %v3819 = vadd.f32 %v3746, %v3818
        %v3820 = vpop.f32.mrb[0].mxu0
        %v3821 = vpop.f32.mrb[0].mxu0
        %v3822 = vadd.f32 %v3746, %v3821
        %v3823 = vpop.f32.mrb[0].mxu0
        %3824 = vmatprep.mubr.bf16.mxu0 0
        %3825 = vmatmul.mubr.bf16.gmra.mrb[0].mxu0 %v3776
        %v3826 = vpop.f32.mrb[0].mxu0
        %v3827 = vadd.f32 %v3746, %v3826
        %v3828 = vpop.f32.mrb[0].mxu0
        %v3829 = vpop.f32.mrb[0].mxu0
        %v3830 = vadd.f32 %v3746, %v3829
        %v3831 = vpop.f32.mrb[0].mxu0
        %3832 = vmatprep.mubr.bf16.mxu0 0
        %3833 = vmatmul.mubr.bf16.gmra.mrb[0].mxu0 %v3779
        %v3834 = vpop.f32.mrb[0].mxu0
        %v3835 = vadd.f32 %v3746, %v3834
        %v3836 = vpop.f32.mrb[0].mxu0
        %v3837 = vpop.f32.mrb[0].mxu0
        %v3838 = vadd.f32 %v3746, %v3837
        %v3839 = vpop.f32.mrb[0].mxu0
        %3840 = vmatprep.mubr.bf16.mxu0 0
        %3841 = vmatmul.mubr.bf16.gmra.mrb[0].mxu0 %v3782
        %v3842 = vpop.f32.mrb[0].mxu0
        %v3843 = vadd.f32 %v3746, %v3842
        %v3844 = vpop.f32.mrb[0].mxu0
        %v3845 = vpop.f32.mrb[0].mxu0
        %v3846 = vadd.f32 %v3746, %v3845
        %v3847 = vpop.f32.mrb[0].mxu0
        %3848 = vdwg.mxu0
        %v3849 = vmax.f32 %v3819, 0.0
        %v3850 = vmax.f32 %v3822, 0.0
        %v3851 = vmax.f32 %v3827, 0.0
        %v3852 = vmax.f32 %v3830, 0.0
        %v3853 = vmax.f32 %v3835, 0.0
        %v3854 = vmax.f32 %v3838, 0.0
        %v3855 = vmax.f32 %v3843, 0.0
        %v3856 = vmax.f32 %v3846, 0.0
        %v3857 = vpack.c.bf16 %v3850, %v3849
        %v3858 = vpack.c.bf16 %v3852, %v3851
        %v3859 = vpack.c.bf16 %v3854, %v3853
        %v3860 = vpack.c.bf16 %v3856, %v3855
        %v3861 = vld [vmem:[%s13] sm:$0xf]
        %v3862 = vld [vmem:[%s13 + $0x4] sm:$0xf]
        %v3863 = vld [vmem:[%s13 + $0x8] sm:$0xf]
        %v3864 = vld [vmem:[%s13 + $0xc] sm:$0xf]
        %v3865 = vld [vmem:[%s13 + $0x10] sm:$0xf]
        %v3866 = vld [vmem:[%s13 + $0x14] sm:$0xf]
        %v3867 = vld [vmem:[%s13 + $0x18] sm:$0xf]
        %v3868 = vld [vmem:[%s13 + $0x1c] sm:$0xf]
        %v3869 = vld [vmem:[%s14] sm:$0x1]
        %v3871 = vlaneseq
        %v3872 = vshrl.u32 %v3871, 7
        %v3873 = vsub.s32 0, %v3872
        %v3874 = vrot.slane %v3869, %v3873
        %v3884 = vunpack.c.l.b16 %v3861
        %v3885 = vunpack.c.l.b16 %v3862
        %v3886 = vunpack.c.l.b16 %v3863
        %v3887 = vunpack.c.l.b16 %v3864
        %v3888 = vunpack.c.l.b16 %v3865
        %v3889 = vunpack.c.l.b16 %v3866
        %v3890 = vunpack.c.l.b16 %v3867
        %v3891 = vunpack.c.l.b16 %v3868
        %v3892 = vpack.c.b16 %v3885, %v3884
        %v3893 = vpack.c.b16 %v3887, %v3886
        %v3894 = vpack.c.b16 %v3889, %v3888
        %v3895 = vpack.c.b16 %v3891, %v3890
        %v3901 = vsel %vm529, %v3857, 0
        %v3904 = vsel %vm529, %v3858, 0
        %v3907 = vsel %vm529, %v3859, 0
        %v3910 = vsel %vm529, %v3860, 0
        %3912 = vmatprep.subr.bf16.mxu0 0
        %3913 = vmatpush1.bf16.msra.mxu0 %v3892
        %3914 = vmatprep.subr.bf16.mxu0 0
        %3915 = vmatpush1.bf16.msra.mxu0 %v3893
        %3916 = vmatprep.subr.bf16.mxu0 0
        %3917 = vmatpush1.bf16.msra.mxu0 %v3894
        %3918 = vmatprep.subr.bf16.mxu0 0
        %3919 = vmatpush1.bf16.msra.mxu0 %v3895
        %3920 = vmatprep.subr.bf16.mxu0 0
        %3921 = vmatpush1.bf16.msra.mxu0 0
        %3922 = vmatprep.subr.bf16.mxu0 0
        %3923 = vmatpush1.bf16.msra.mxu0 0
        %3924 = vmatprep.subr.bf16.mxu0 0
        %3925 = vmatpush1.bf16.msra.mxu0 0
        %3926 = vmatprep.subr.bf16.mxu0 0
        %3927 = vmatpush1.bf16.msra.mxu0 0
        %3928 = vmatprep.subr.bf16.mxu0 0
        %3929 = vmatpush1.bf16.msra.mxu0 0
        %3930 = vmatprep.subr.bf16.mxu0 0
        %3931 = vmatpush1.bf16.msra.mxu0 0
        %3932 = vmatprep.subr.bf16.mxu0 0
        %3933 = vmatpush1.bf16.msra.mxu0 0
        %3934 = vmatprep.subr.bf16.mxu0 0
        %3935 = vmatpush1.bf16.msra.mxu0 0
        %3936 = vmatprep.subr.bf16.mxu0 0
        %3937 = vmatpush1.bf16.msra.mxu0 0
        %3938 = vmatprep.subr.bf16.mxu0 0
        %3939 = vmatpush1.bf16.msra.mxu0 0
        %3940 = vmatprep.subr.bf16.mxu0 0
        %3941 = vmatpush1.bf16.msra.mxu0 0
        %3942 = vmatprep.subr.bf16.mxu0 0
        %3943 = vmatpush1.bf16.msra.mxu0 0
        %3944 = vmatprep.mubr.bf16.mxu0 0
        %3945 = vmatmul.mubr.bf16.gmra.mrb[0].mxu0 %v3901
        %v3946 = vpop.f32.mrb[0].mxu0
        %v3947 = vadd.f32 %v3874, %v3946
        %v3948 = vpop.f32.mrb[0].mxu0
        %v3949 = vpop.f32.mrb[0].mxu0
        %v3950 = vadd.f32 %v3874, %v3949
        %v3951 = vpop.f32.mrb[0].mxu0
        %3952 = vmatprep.mubr.bf16.mxu0 0
        %3953 = vmatmul.mubr.bf16.gmra.mrb[0].mxu0 %v3904
        %v3954 = vpop.f32.mrb[0].mxu0
        %v3955 = vadd.f32 %v3874, %v3954
        %v3956 = vpop.f32.mrb[0].mxu0
        %v3957 = vpop.f32.mrb[0].mxu0
        %v3958 = vadd.f32 %v3874, %v3957
        %v3959 = vpop.f32.mrb[0].mxu0
        %3960 = vmatprep.mubr.bf16.mxu0 0
        %3961 = vmatmul.mubr.bf16.gmra.mrb[0].mxu0 %v3907
        %v3962 = vpop.f32.mrb[0].mxu0
        %v3963 = vadd.f32 %v3874, %v3962
        %v3964 = vpop.f32.mrb[0].mxu0
        %v3965 = vpop.f32.mrb[0].mxu0
        %v3966 = vadd.f32 %v3874, %v3965
        %v3967 = vpop.f32.mrb[0].mxu0
        %3968 = vmatprep.mubr.bf16.mxu0 0
        %3969 = vmatmul.mubr.bf16.gmra.mrb[0].mxu0 %v3910
        %v3970 = vpop.f32.mrb[0].mxu0
        %v3971 = vadd.f32 %v3874, %v3970
        %v3972 = vpop.f32.mrb[0].mxu0
        %v3973 = vpop.f32.mrb[0].mxu0
        %v3974 = vadd.f32 %v3874, %v3973
        %v3975 = vpop.f32.mrb[0].mxu0
        %3976 = vdwg.mxu0
        %3977 = vst [vmem:[%s517] sm:$0xff] %v3947
        %3978 = vst [vmem:[%s517 + $0x8] sm:$0xff] %v3950
        %3979 = vst [vmem:[%s517 + $0x10] sm:$0xff] %v3955
        %3980 = vst [vmem:[%s517 + $0x18] sm:$0xff] %v3958
        %3981 = vst [vmem:[%s517 + $0x20] sm:$0xff] %v3963
        %3982 = vst [vmem:[%s517 + $0x28] sm:$0xff] %v3966
        %3983 = vst [vmem:[%s517 + $0x30] sm:$0xff] %v3971
        %3984 = vst [vmem:[%s517 + $0x38] sm:$0xff] %v3974
        %s3985 = sand.u32 %s363, 1
        %s3986 = scalar_lea.sflag [#allocation5], %s3985
        %s3987 = sand.u32 %s363, 1
        %s3988 = smul.addr %s3987, 64
        %s3989 = scalar_lea.vmem [#allocation6], %s3988
        // Predicated region
        $region85: #{tpu_custom_call.1} parent=79 // pred_check
          %p3990 = pneg %p373
        $region86: #{tpu_custom_call.1} parent=79 // pred_check_branch
          %3992 = sbr.rel (%p3990) target = $region88
        $region87: #{tpu_custom_call.1} parent=79 // pred_region
          %s3994 = ssub.s32 1024, 1024
          %3995 = vsyncadd %s3986, %s3994
          %s3996 = smul.addr %s30, 8
          %s3997 = smul.addr %s3996, 128
          %s3998 = scalar_lea.hbm %s15, %s3997
          %s3999 = sshll.u32 %s3989, 4
          %s4000 = int_to_ptr.vmem [resolvable:$true] %s3999
          %4005 = dma.vmem_to_hbm [thread:$0]  %s4000, 1024, %s3998, %s3986, 128, 128, 8
        $region88: #{tpu_custom_call.1} parent=79 // pred_fallthru
          _
      $region80: #{tpu_custom_call.1} parent=5 // pred_fallthru
        _
      %p4006 = scmp.le.s32.totalorder 2, %s25
      // Predicated region
      $region89: #{tpu_custom_call.1} parent=5 // pred_check
        %p4007 = pneg %p4006
      $region90: #{tpu_custom_call.1} parent=5 // pred_check_branch
        %4009 = sbr.rel (%p4007) target = $region92
      $region91: #{tpu_custom_call.1} parent=5 // pred_region
        %s4010 = ssub.s32 %s25, 2
        // Predicated region
        $region93: #{tpu_custom_call.1} parent=91 // pred_check
          %p4011 = pneg %p379
        $region94: #{tpu_custom_call.1} parent=91 // pred_check_branch
          %4013 = sbr.rel (%p4011) target = $region96
        $region95: #{tpu_custom_call.1} parent=91 // pred_region
          %s4014 = sand.u32 %s364, 1
          %s4015 = scalar_lea.sflag [#allocation5], %s4014
          %s4016 = sand.u32 %s364, 1
          %s4017 = smul.addr %s4016, 64
          %s4018 = scalar_lea.vmem [#allocation6], %s4017
          %4019 = dma.done %s4015, 1024
        $region96: #{tpu_custom_call.1} parent=91 // pred_fallthru
          _
      $region92: #{tpu_custom_call.1} parent=5 // pred_fallthru
        _
    $region6: #{tpu_custom_call.1} parent=1 // loop_footer
      %s29 = sadd.s32 1, %s25
    $region7: #{tpu_custom_call.1} parent=1 // loop_footer_branch
      %24 = sbr.rel target = $region3
    $region8: #{tpu_custom_call.1} parent=1 // loop_exit
      _
    %4020 = vsyncpa [#allocation4], 1
    %s4021 = scalar_lea.sflag [#allocation4], 1
    %4022 = vsyncpa %s4021, 1
    %4023 = vsyncpa [#allocation5], 1
    %s4024 = scalar_lea.sflag [#allocation5], 1
    %4025 = vsyncpa %s4024, 1

</llo_original>
